<compile_context>
chip_gen: v7x
topology: tpu7x:2x2x1
jax: 0.10.0
libtpu: 0.0.40
codegen_flags: <defaults>
</compile_context>

<pallas_src>
import math
import functools

import jax
import jax.numpy as jnp
from jax.experimental import pallas as pl
from jax.experimental.pallas import tpu as pltpu


# ----------------------------- helpers --------------------------------------

def _layer_norm(x, g, b, eps=1e-5):
    m = jnp.mean(x, axis=-1, keepdims=True)
    v = jnp.mean((x - m) ** 2, axis=-1, keepdims=True)
    return (x - m) * jax.lax.rsqrt(v + eps) * g + b


# ----------------------------- fused kernel ----------------------------------

def fused_forward_kernel(x_ref, pe_ref, we_ref, be_ref,
                         wqkv_ref, bqkv_ref, wo_ref, bo_ref,
                         w1_ref, b1_ref, w2_ref, b2_ref,
                         g1_ref, be1_ref, g2_ref, be2_ref,
                         gn_ref, bn_ref,
                         wf1_ref, bf1_ref, bns_ref, bnsh_ref,
                         wf2_ref, bf2_ref,
                         o_ref, *, B, S, nhead, num_layers):
    """B here is the per-grid-step batch tile."""
    D = we_ref.shape[1]
    hd = D // nhead
    M = B * S

    # ---- src embedding (bf16 MXU, f32 acc) + positional encoding (S, D) ----
    x = jnp.dot(x_ref[...], we_ref[...], preferred_element_type=jnp.float32)
    x = x + be_ref[...]
    x = (x.reshape(B, S, D) + pe_ref[...]).reshape(M, D)

    # ---- transformer encoder layers (post-norm), static unroll over L -------
    # TODO(synk): for large num_layers / d_model, switch to lax.fori_loop (or a
    # grid axis over L) with per-layer weight streaming so stacked weights are
    # not all VMEM-resident and live ranges stay bounded.
    for l in range(num_layers):
        qkv = jnp.dot(x.astype(jnp.bfloat16), wqkv_ref[l],
                      preferred_element_type=jnp.float32) + bqkv_ref[l]

        # Build head-batched (nhead*B, S, hd) tensors (single leading batch
        # dim -> Mosaic-safe batched dot_general); one einsum per contraction.
        def heads(off):
            return jnp.concatenate(
                [qkv[:, off + h * hd: off + (h + 1) * hd].reshape(B, S, hd)
                 for h in range(nhead)], axis=0)

        qg = heads(0).astype(jnp.bfloat16)        # scale folded into W_q
        kg = heads(D).astype(jnp.bfloat16)
        vg = heads(2 * D).astype(jnp.bfloat16)

        s = jnp.einsum("gqd,gkd->gqk", qg, kg,
                       preferred_element_type=jnp.float32)
        s = s - jnp.max(s, axis=-1, keepdims=True)
        e = jnp.exp(s)
        p = e * pl.reciprocal(jnp.sum(e, axis=-1, keepdims=True), approx=True)
        ctx = jnp.einsum("gqk,gkd->gqd", p.astype(jnp.bfloat16), vg,
                         preferred_element_type=jnp.float32)

        # merge heads back to (M, D) lanes, then ONE K=D output projection
        ctx2 = jnp.concatenate(
            [ctx[h * B:(h + 1) * B].reshape(M, hd) for h in range(nhead)],
            axis=-1)
        attn = jnp.dot(ctx2.astype(jnp.bfloat16), wo_ref[l],
                       preferred_element_type=jnp.float32) + bo_ref[l]

        y = _layer_norm(x + attn, g1_ref[l], be1_ref[l])                  # norm1

        h1 = jnp.dot(y.astype(jnp.bfloat16), w1_ref[l],
                     preferred_element_type=jnp.float32) + b1_ref[l]
        h1 = jnp.maximum(h1, 0.0)                                         # relu
        h2 = jnp.dot(h1.astype(jnp.bfloat16), w2_ref[l],
                     preferred_element_type=jnp.float32) + b2_ref[l]

        x = _layer_norm(y + h2, g2_ref[l], be2_ref[l])                    # norm2

    # ---- final encoder LayerNorm, last sequence position, MLP head ----------
    x_last = x.reshape(B, S, D)[:, S - 1, :]                 # (B, D)
    xl = _layer_norm(x_last, gn_ref[...], bn_ref[...])

    hid = jnp.dot(xl.astype(jnp.bfloat16), wf1_ref[...],
                  preferred_element_type=jnp.float32) + bf1_ref[...]
    hid = jnp.maximum(hid, 0.0)
    hid = hid * bns_ref[...] + bnsh_ref[...]     # BatchNorm1d (eval), pre-folded

    logits = jnp.dot(hid.astype(jnp.bfloat16), wf2_ref[...],
                     preferred_element_type=jnp.float32) + bf2_ref[...]
    logits = logits - jnp.max(logits, axis=1, keepdims=True)
    e = jnp.exp(logits)
    o_ref[...] = e / jnp.sum(e, axis=1, keepdims=True)       # exact softmax


# ----------------------------- model wrapper --------------------------------

def init_params(key, num_bands, num_classes, d_model, nhead, num_layers,
                dim_feedforward):
    def nrm(k, shape, scale=0.05):
        return scale * jax.random.normal(k, shape, jnp.float32)

    keys = iter(jax.random.split(key, 8 + 8 * num_layers))
    p = {
        "we": nrm(next(keys), (num_bands, d_model)),
        "be": jnp.zeros((1, d_model), jnp.float32),
        "layers": [],
        "gn": jnp.ones((1, d_model), jnp.float32),
        "bn": jnp.zeros((1, d_model), jnp.float32),
        "wf1": nrm(next(keys), (d_model, 256)),
        "bf1": jnp.zeros((1, 256), jnp.float32),
        "bng": jnp.ones((1, 256), jnp.float32),
        "bnb": jnp.zeros((1, 256), jnp.float32),
        "bnm": jnp.zeros((1, 256), jnp.float32),
        "bnv": jnp.ones((1, 256), jnp.float32),
        "wf2": nrm(next(keys), (256, num_classes)),
        "bf2": jnp.zeros((1, num_classes), jnp.float32),
    }
    for _ in range(num_layers):
        p["layers"].append(dict(
            wqkv=nrm(next(keys), (d_model, 3 * d_model)),
            bqkv=jnp.zeros((1, 3 * d_model), jnp.float32),
            wo=nrm(next(keys), (d_model, d_model)),
            bo=jnp.zeros((1, d_model), jnp.float32),
            w1=nrm(next(keys), (d_model, dim_feedforward)),
            b1=jnp.zeros((1, dim_feedforward), jnp.float32),
            w2=nrm(next(keys), (dim_feedforward, d_model)),
            b2=jnp.zeros((1, d_model), jnp.float32),
            g1=jnp.ones((1, d_model), jnp.float32),
            be1=jnp.zeros((1, d_model), jnp.float32),
            g2=jnp.ones((1, d_model), jnp.float32),
            be2=jnp.zeros((1, d_model), jnp.float32),
        ))
    return p


def positional_encoding(seq_len, d_model):
    pos = jnp.arange(seq_len, dtype=jnp.float32)[:, None]
    div = jnp.exp(jnp.arange(0, d_model, 2, dtype=jnp.float32)
                  * (-math.log(10000.0) / d_model))
    pe = jnp.zeros((seq_len, d_model), jnp.float32)
    pe = pe.at[:, 0::2].set(jnp.sin(pos * div))
    pe = pe.at[:, 1::2].set(jnp.cos(pos * div))
    return pe


def transformer_regression_forward(src, params, *, nhead, batch_tile=None):
    # src: (S, B, num_bands) — PyTorch seq-first convention.
    S, B, NB = src.shape
    D = params["we"].shape[1]
    L = len(params["layers"])
    F = params["layers"][0]["w1"].shape[1]
    C = params["wf2"].shape[1]
    hd = D // nhead

    # Batch grid (parallel) — engages the second TensorCore on v7x at larger
    # batch.  Default: one tile = whole batch (grid of 1) for small inputs.
    if batch_tile is None:
        batch_tile = B
    assert B % batch_tile == 0
    Bt = batch_tile
    grid = (B // Bt,)

    # Layout / dtype prep (tiny, one-time per call, outside the kernel):
    x2 = jnp.transpose(src, (1, 0, 2)).reshape(B * S, NB).astype(jnp.bfloat16)
    pe = positional_encoding(S, D)                            # (S, D), NOT tiled

    stack = lambda k: jnp.stack([lp[k] for lp in params["layers"]])
    wqkv, bqkv = stack("wqkv"), stack("bqkv")
    # fold the 1/sqrt(head_dim) attention scale into Q projection weights/bias
    scale = 1.0 / math.sqrt(hd)
    wqkv = wqkv.at[:, :, :D].multiply(scale)
    bqkv = bqkv.at[:, :, :D].multiply(scale)
    wo, bo = stack("wo"), stack("bo")
    w1, b1 = stack("w1"), stack("b1")
    w2, b2 = stack("w2"), stack("b2")
    g1, be1 = stack("g1"), stack("be1")
    g2, be2 = stack("g2"), stack("be2")

    # fold eval-mode BatchNorm1d into a single scale/shift
    bn_scale = params["bng"] * jax.lax.rsqrt(params["bnv"] + 1e-5)
    bn_shift = params["bnb"] - params["bnm"] * bn_scale

    bf16 = lambda a: a.astype(jnp.bfloat16)      # MXU operands in bf16
    args = (x2, pe, bf16(params["we"]), params["be"],
            bf16(wqkv), bqkv, bf16(wo), bo,
            bf16(w1), b1, bf16(w2), b2,
            g1, be1, g2, be2,
            params["gn"], params["bn"],
            bf16(params["wf1"]), params["bf1"], bn_scale, bn_shift,
            bf16(params["wf2"]), params["bf2"])

    def full_spec(a):
        # whole array resident in VMEM, same block for every grid step
        zeros = (0,) * a.ndim
        return pl.BlockSpec(tuple(a.shape), lambda b, _z=zeros: _z)

    in_specs = [pl.BlockSpec((Bt * S, NB), lambda b: (b, 0)),   # input rows tile
                full_spec(pe)] + [full_spec(a) for a in args[2:]]
    out_spec = pl.BlockSpec((Bt, C), lambda b: (b, 0))

    # Cost estimate (advisory) + explicit scoped-VMEM limit.
    G = B * nhead
    flops = 2 * B * S * NB * D
    flops += L * (2 * B * S * D * 3 * D + 4 * G * S * S * hd
                  + 2 * B * S * D * D + 4 * B * S * D * F)
    flops += 2 * B * D * 256 + 2 * B * 256 * C
    transcendentals = L * (G * S * S + G * S) + (2 * L + 1) * B * S + B + B * C
    bytes_accessed = sum(int(a.size) * a.dtype.itemsize for a in args) + B * C * 4
    cost = pl.CostEstimate(flops=int(flops),
                           transcendentals=int(transcendentals),
                           bytes_accessed=int(bytes_accessed))
    vmem_limit = int(min(max(4 * bytes_accessed, 16 * 1024 * 1024),
                         48 * 1024 * 1024))

    kernel = functools.partial(fused_forward_kernel,
                               B=Bt, S=S, nhead=nhead, num_layers=L)

    # TODO(synk): when d_model/dim_feedforward/num_layers are scaled up, stream
    # per-layer weights via an "arbitrary" layer grid axis (or emit_pipeline)
    # instead of keeping all stacked weights VMEM-resident.
    return pl.pallas_call(
        kernel,
        out_shape=jax.ShapeDtypeStruct((B, C), jnp.float32),
        grid=grid,
        in_specs=in_specs,
        out_specs=out_spec,
        compiler_params=pltpu.CompilerParams(
            dimension_semantics=("parallel",),
            vmem_limit_bytes=vmem_limit),
        cost_estimate=cost,
    )(*args)


# ----------------------------- main ------------------------------------------

if __name__ == "__main__":
    num_bands = 4
    num_classes = 8
    d_model = 32
    nhead = 4
    num_layers = 2
    dim_feedforward = 64
    seq_len = 8
    batch = 2

    key = jax.random.PRNGKey(0)
    k_in, k_par = jax.random.split(key)
    src = jax.random.normal(k_in, (seq_len, batch, num_bands), jnp.float32)
    params = init_params(k_par, num_bands, num_classes, d_model, nhead,
                         num_layers, dim_feedforward)

    fwd = jax.jit(functools.partial(transformer_regression_forward,
                                    nhead=nhead))
    out = fwd(src, params)
    out = jax.block_until_ready(out)

    assert out.shape == (batch, num_classes)
    assert bool(jnp.all(jnp.isfinite(out)))
    # softmax rows must sum to ~1
    assert bool(jnp.allclose(jnp.sum(out, axis=1), 1.0, atol=1e-5))
    print("KERNEL_OK")
</pallas_src>

<mosaic_0001>
module attributes {stable_mosaic.version = 11 : i64} {
  func.func @fused_forward_kernel(%arg0: i32, %arg1: memref<16x4xbf16, #tpu.memory_space<vmem>>, %arg2: memref<8x32xf32, #tpu.memory_space<vmem>>, %arg3: memref<4x32xbf16, #tpu.memory_space<vmem>>, %arg4: memref<1x32xf32, #tpu.memory_space<vmem>>, %arg5: memref<2x32x96xbf16, #tpu.memory_space<vmem>>, %arg6: memref<2x1x96xf32, #tpu.memory_space<vmem>>, %arg7: memref<2x32x32xbf16, #tpu.memory_space<vmem>>, %arg8: memref<2x1x32xf32, #tpu.memory_space<vmem>>, %arg9: memref<2x32x64xbf16, #tpu.memory_space<vmem>>, %arg10: memref<2x1x64xf32, #tpu.memory_space<vmem>>, %arg11: memref<2x64x32xbf16, #tpu.memory_space<vmem>>, %arg12: memref<2x1x32xf32, #tpu.memory_space<vmem>>, %arg13: memref<2x1x32xf32, #tpu.memory_space<vmem>>, %arg14: memref<2x1x32xf32, #tpu.memory_space<vmem>>, %arg15: memref<2x1x32xf32, #tpu.memory_space<vmem>>, %arg16: memref<2x1x32xf32, #tpu.memory_space<vmem>>, %arg17: memref<1x32xf32, #tpu.memory_space<vmem>>, %arg18: memref<1x32xf32, #tpu.memory_space<vmem>>, %arg19: memref<32x256xbf16, #tpu.memory_space<vmem>>, %arg20: memref<1x256xf32, #tpu.memory_space<vmem>>, %arg21: memref<1x256xf32, #tpu.memory_space<vmem>>, %arg22: memref<1x256xf32, #tpu.memory_space<vmem>>, %arg23: memref<256x8xbf16, #tpu.memory_space<vmem>>, %arg24: memref<1x8xf32, #tpu.memory_space<vmem>>, %arg25: memref<2x8xf32, #tpu.memory_space<vmem>>) attributes {dimension_semantics = [#tpu.dimension_semantics<parallel>], iteration_bounds = array<i64: 1>, scalar_prefetch = 0 : i64, scratch_operands = 0 : i64, tpu.core_type = #tpu.core_type<tc>, window_params = [{transform_indices = @transform_0, window_bounds = array<i64: 16, 4>}, {pipeline_mode = #tpu.pipeline_mode<synchronous>, transform_indices = @transform_1, window_bounds = array<i64: 8, 32>}, {pipeline_mode = #tpu.pipeline_mode<synchronous>, transform_indices = @transform_2, window_bounds = array<i64: 4, 32>}, {pipeline_mode = #tpu.pipeline_mode<synchronous>, transform_indices = @transform_3, window_bounds = array<i64: 1, 32>}, {pipeline_mode = #tpu.pipeline_mode<synchronous>, transform_indices = @transform_4, window_bounds = array<i64: 2, 32, 96>}, {pipeline_mode = #tpu.pipeline_mode<synchronous>, transform_indices = @transform_5, window_bounds = array<i64: 2, 1, 96>}, {pipeline_mode = #tpu.pipeline_mode<synchronous>, transform_indices = @transform_6, window_bounds = array<i64: 2, 32, 32>}, {pipeline_mode = #tpu.pipeline_mode<synchronous>, transform_indices = @transform_7, window_bounds = array<i64: 2, 1, 32>}, {pipeline_mode = #tpu.pipeline_mode<synchronous>, transform_indices = @transform_8, window_bounds = array<i64: 2, 32, 64>}, {pipeline_mode = #tpu.pipeline_mode<synchronous>, transform_indices = @transform_9, window_bounds = array<i64: 2, 1, 64>}, {pipeline_mode = #tpu.pipeline_mode<synchronous>, transform_indices = @transform_10, window_bounds = array<i64: 2, 64, 32>}, {pipeline_mode = #tpu.pipeline_mode<synchronous>, transform_indices = @transform_11, window_bounds = array<i64: 2, 1, 32>}, {pipeline_mode = #tpu.pipeline_mode<synchronous>, transform_indices = @transform_12, window_bounds = array<i64: 2, 1, 32>}, {pipeline_mode = #tpu.pipeline_mode<synchronous>, transform_indices = @transform_13, window_bounds = array<i64: 2, 1, 32>}, {pipeline_mode = #tpu.pipeline_mode<synchronous>, transform_indices = @transform_14, window_bounds = array<i64: 2, 1, 32>}, {pipeline_mode = #tpu.pipeline_mode<synchronous>, transform_indices = @transform_15, window_bounds = array<i64: 2, 1, 32>}, {pipeline_mode = #tpu.pipeline_mode<synchronous>, transform_indices = @transform_16, window_bounds = array<i64: 1, 32>}, {pipeline_mode = #tpu.pipeline_mode<synchronous>, transform_indices = @transform_17, window_bounds = array<i64: 1, 32>}, {pipeline_mode = #tpu.pipeline_mode<synchronous>, transform_indices = @transform_18, window_bounds = array<i64: 32, 256>}, {pipeline_mode = #tpu.pipeline_mode<synchronous>, transform_indices = @transform_19, window_bounds = array<i64: 1, 256>}, {pipeline_mode = #tpu.pipeline_mode<synchronous>, transform_indices = @transform_20, window_bounds = array<i64: 1, 256>}, {pipeline_mode = #tpu.pipeline_mode<synchronous>, transform_indices = @transform_21, window_bounds = array<i64: 1, 256>}, {pipeline_mode = #tpu.pipeline_mode<synchronous>, transform_indices = @transform_22, window_bounds = array<i64: 256, 8>}, {pipeline_mode = #tpu.pipeline_mode<synchronous>, transform_indices = @transform_23, window_bounds = array<i64: 1, 8>}, {transform_indices = @transform_24, window_bounds = array<i64: 2, 8>}]} {
    %c0 = arith.constant 0 : index
    %c0_0 = arith.constant 0 : index
    %0 = vector.load %arg1[%c0, %c0_0] : memref<16x4xbf16, #tpu.memory_space<vmem>>, vector<16x4xbf16>
    %c0_1 = arith.constant 0 : index
    %c0_2 = arith.constant 0 : index
    %1 = vector.load %arg3[%c0_1, %c0_2] : memref<4x32xbf16, #tpu.memory_space<vmem>>, vector<4x32xbf16>
    %cst = arith.constant dense<0.000000e+00> : vector<16x32xf32>
    %2 = tpu.matmul %0, %1, %cst {dimension_numbers = #tpu.dot_dimension_numbers<[1], [0], [0], [1], [0, 0, 1, 1], [], []>} : vector<16x4xbf16>, vector<4x32xbf16>, vector<16x32xf32> -> vector<16x32xf32>
    %c0_3 = arith.constant 0 : index
    %c0_4 = arith.constant 0 : index
    %3 = vector.load %arg4[%c0_3, %c0_4] : memref<1x32xf32, #tpu.memory_space<vmem>>, vector<1x32xf32>
    %4 = vector.broadcast %3 : vector<1x32xf32> to vector<16x32xf32>
    %5 = arith.addf %2, %4 : vector<16x32xf32>
    %6 = vector.shape_cast %5 : vector<16x32xf32> to vector<2x8x32xf32>
    %c0_5 = arith.constant 0 : index
    %c0_6 = arith.constant 0 : index
    %7 = vector.load %arg2[%c0_5, %c0_6] : memref<8x32xf32, #tpu.memory_space<vmem>>, vector<8x32xf32>
    %8 = vector.shape_cast %7 : vector<8x32xf32> to vector<1x8x32xf32>
    %9 = vector.broadcast %8 : vector<1x8x32xf32> to vector<2x8x32xf32>
    %10 = arith.addf %6, %9 : vector<2x8x32xf32>
    %11 = vector.shape_cast %10 : vector<2x8x32xf32> to vector<16x32xf32>
    %12 = arith.truncf %11 : vector<16x32xf32> to vector<16x32xbf16>
    %c0_7 = arith.constant 0 : index
    %c0_8 = arith.constant 0 : index
    %c0_9 = arith.constant 0 : index
    %13 = vector.load %arg5[%c0_7, %c0_8, %c0_9] : memref<2x32x96xbf16, #tpu.memory_space<vmem>>, vector<1x32x96xbf16>
    %14 = vector.shape_cast %13 : vector<1x32x96xbf16> to vector<32x96xbf16>
    %cst_10 = arith.constant dense<0.000000e+00> : vector<16x96xf32>
    %15 = tpu.matmul %12, %14, %cst_10 {dimension_numbers = #tpu.dot_dimension_numbers<[1], [0], [0], [1], [0, 0, 1, 1], [], []>} : vector<16x32xbf16>, vector<32x96xbf16>, vector<16x96xf32> -> vector<16x96xf32>
    %c0_11 = arith.constant 0 : index
    %c0_12 = arith.constant 0 : index
    %c0_13 = arith.constant 0 : index
    %16 = vector.load %arg6[%c0_11, %c0_12, %c0_13] : memref<2x1x96xf32, #tpu.memory_space<vmem>>, vector<1x1x96xf32>
    %17 = vector.shape_cast %16 : vector<1x1x96xf32> to vector<1x96xf32>
    %18 = vector.broadcast %17 : vector<1x96xf32> to vector<16x96xf32>
    %19 = arith.addf %15, %18 : vector<16x96xf32>
    %20 = vector.extract_strided_slice %19 {offsets = [0, 0], sizes = [16, 8], strides = [1, 1]} : vector<16x96xf32> to vector<16x8xf32>
    %21 = vector.shape_cast %20 : vector<16x8xf32> to vector<2x8x8xf32>
    %22 = vector.extract_strided_slice %19 {offsets = [0, 8], sizes = [16, 8], strides = [1, 1]} : vector<16x96xf32> to vector<16x8xf32>
    %23 = vector.shape_cast %22 : vector<16x8xf32> to vector<2x8x8xf32>
    %24 = vector.extract_strided_slice %19 {offsets = [0, 16], sizes = [16, 8], strides = [1, 1]} : vector<16x96xf32> to vector<16x8xf32>
    %25 = vector.shape_cast %24 : vector<16x8xf32> to vector<2x8x8xf32>
    %26 = vector.extract_strided_slice %19 {offsets = [0, 24], sizes = [16, 8], strides = [1, 1]} : vector<16x96xf32> to vector<16x8xf32>
    %27 = vector.shape_cast %26 : vector<16x8xf32> to vector<2x8x8xf32>
    %28 = tpu.concatenate %21, %23, %25, %27 in 0 : vector<2x8x8xf32>, vector<2x8x8xf32>, vector<2x8x8xf32>, vector<2x8x8xf32> -> vector<8x8x8xf32>
    %29 = arith.truncf %28 : vector<8x8x8xf32> to vector<8x8x8xbf16>
    %30 = vector.extract_strided_slice %19 {offsets = [0, 32], sizes = [16, 8], strides = [1, 1]} : vector<16x96xf32> to vector<16x8xf32>
    %31 = vector.shape_cast %30 : vector<16x8xf32> to vector<2x8x8xf32>
    %32 = vector.extract_strided_slice %19 {offsets = [0, 40], sizes = [16, 8], strides = [1, 1]} : vector<16x96xf32> to vector<16x8xf32>
    %33 = vector.shape_cast %32 : vector<16x8xf32> to vector<2x8x8xf32>
    %34 = vector.extract_strided_slice %19 {offsets = [0, 48], sizes = [16, 8], strides = [1, 1]} : vector<16x96xf32> to vector<16x8xf32>
    %35 = vector.shape_cast %34 : vector<16x8xf32> to vector<2x8x8xf32>
    %36 = vector.extract_strided_slice %19 {offsets = [0, 56], sizes = [16, 8], strides = [1, 1]} : vector<16x96xf32> to vector<16x8xf32>
    %37 = vector.shape_cast %36 : vector<16x8xf32> to vector<2x8x8xf32>
    %38 = tpu.concatenate %31, %33, %35, %37 in 0 : vector<2x8x8xf32>, vector<2x8x8xf32>, vector<2x8x8xf32>, vector<2x8x8xf32> -> vector<8x8x8xf32>
    %39 = arith.truncf %38 : vector<8x8x8xf32> to vector<8x8x8xbf16>
    %40 = vector.extract_strided_slice %19 {offsets = [0, 64], sizes = [16, 8], strides = [1, 1]} : vector<16x96xf32> to vector<16x8xf32>
    %41 = vector.shape_cast %40 : vector<16x8xf32> to vector<2x8x8xf32>
    %42 = vector.extract_strided_slice %19 {offsets = [0, 72], sizes = [16, 8], strides = [1, 1]} : vector<16x96xf32> to vector<16x8xf32>
    %43 = vector.shape_cast %42 : vector<16x8xf32> to vector<2x8x8xf32>
    %44 = vector.extract_strided_slice %19 {offsets = [0, 80], sizes = [16, 8], strides = [1, 1]} : vector<16x96xf32> to vector<16x8xf32>
    %45 = vector.shape_cast %44 : vector<16x8xf32> to vector<2x8x8xf32>
    %46 = vector.extract_strided_slice %19 {offsets = [0, 88], sizes = [16, 8], strides = [1, 1]} : vector<16x96xf32> to vector<16x8xf32>
    %47 = vector.shape_cast %46 : vector<16x8xf32> to vector<2x8x8xf32>
    %48 = tpu.concatenate %41, %43, %45, %47 in 0 : vector<2x8x8xf32>, vector<2x8x8xf32>, vector<2x8x8xf32>, vector<2x8x8xf32> -> vector<8x8x8xf32>
    %49 = arith.truncf %48 : vector<8x8x8xf32> to vector<8x8x8xbf16>
    "tpu.trace_start"() <{level = 10 : i32, message = "gqd,gkd->gqk"}> : () -> ()
    %cst_14 = arith.constant dense<0.000000e+00> : vector<8x8x8xf32>
    %50 = tpu.matmul %29, %39, %cst_14 {dimension_numbers = #tpu.dot_dimension_numbers<[2], [2], [1], [1], [0, 0, 0, 1, 1, 1], [0], [0]>} : vector<8x8x8xbf16>, vector<8x8x8xbf16>, vector<8x8x8xf32> -> vector<8x8x8xf32>
    "tpu.trace_stop"() : () -> ()
    %cst_15 = arith.constant dense<0xFF800000> : vector<8x8xf32>
    %51 = vector.multi_reduction <maximumf>, %50, %cst_15 [2] : vector<8x8x8xf32> to vector<8x8xf32>
    %52 = vector.shape_cast %51 : vector<8x8xf32> to vector<8x8x1xf32>
    %53 = vector.broadcast %52 : vector<8x8x1xf32> to vector<8x8x8xf32>
    %54 = arith.subf %50, %53 : vector<8x8x8xf32>
    %55 = math.exp %54 : vector<8x8x8xf32>
    %cst_16 = arith.constant dense<0.000000e+00> : vector<8x8xf32>
    %56 = vector.multi_reduction <add>, %55, %cst_16 [2] : vector<8x8x8xf32> to vector<8x8xf32>
    %57 = vector.shape_cast %56 : vector<8x8xf32> to vector<8x8x1xf32>
    %58 = tpu.reciprocal %57 {approx = true} : vector<8x8x1xf32> -> vector<8x8x1xf32>
    %59 = vector.broadcast %58 : vector<8x8x1xf32> to vector<8x8x8xf32>
    %60 = arith.mulf %55, %59 : vector<8x8x8xf32>
    %61 = arith.truncf %60 : vector<8x8x8xf32> to vector<8x8x8xbf16>
    "tpu.trace_start"() <{level = 10 : i32, message = "gqk,gkd->gqd"}> : () -> ()
    %cst_17 = arith.constant dense<0.000000e+00> : vector<8x8x8xf32>
    %62 = tpu.matmul %61, %49, %cst_17 {dimension_numbers = #tpu.dot_dimension_numbers<[2], [1], [1], [2], [0, 0, 0, 1, 1, 2], [0], [0]>} : vector<8x8x8xbf16>, vector<8x8x8xbf16>, vector<8x8x8xf32> -> vector<8x8x8xf32>
    "tpu.trace_stop"() : () -> ()
    %63 = vector.extract_strided_slice %62 {offsets = [0, 0, 0], sizes = [2, 8, 8], strides = [1, 1, 1]} : vector<8x8x8xf32> to vector<2x8x8xf32>
    %64 = vector.shape_cast %63 : vector<2x8x8xf32> to vector<16x8xf32>
    %65 = vector.extract_strided_slice %62 {offsets = [2, 0, 0], sizes = [2, 8, 8], strides = [1, 1, 1]} : vector<8x8x8xf32> to vector<2x8x8xf32>
    %66 = vector.shape_cast %65 : vector<2x8x8xf32> to vector<16x8xf32>
    %67 = vector.extract_strided_slice %62 {offsets = [4, 0, 0], sizes = [2, 8, 8], strides = [1, 1, 1]} : vector<8x8x8xf32> to vector<2x8x8xf32>
    %68 = vector.shape_cast %67 : vector<2x8x8xf32> to vector<16x8xf32>
    %69 = vector.extract_strided_slice %62 {offsets = [6, 0, 0], sizes = [2, 8, 8], strides = [1, 1, 1]} : vector<8x8x8xf32> to vector<2x8x8xf32>
    %70 = vector.shape_cast %69 : vector<2x8x8xf32> to vector<16x8xf32>
    %71 = tpu.concatenate %64, %66, %68, %70 in 1 : vector<16x8xf32>, vector<16x8xf32>, vector<16x8xf32>, vector<16x8xf32> -> vector<16x32xf32>
    %72 = arith.truncf %71 : vector<16x32xf32> to vector<16x32xbf16>
    %c0_18 = arith.constant 0 : index
    %c0_19 = arith.constant 0 : index
    %c0_20 = arith.constant 0 : index
    %73 = vector.load %arg7[%c0_18, %c0_19, %c0_20] : memref<2x32x32xbf16, #tpu.memory_space<vmem>>, vector<1x32x32xbf16>
    %74 = vector.shape_cast %73 : vector<1x32x32xbf16> to vector<32x32xbf16>
    %cst_21 = arith.constant dense<0.000000e+00> : vector<16x32xf32>
    %75 = tpu.matmul %72, %74, %cst_21 {dimension_numbers = #tpu.dot_dimension_numbers<[1], [0], [0], [1], [0, 0, 1, 1], [], []>} : vector<16x32xbf16>, vector<32x32xbf16>, vector<16x32xf32> -> vector<16x32xf32>
    %c0_22 = arith.constant 0 : index
    %c0_23 = arith.constant 0 : index
    %c0_24 = arith.constant 0 : index
    %76 = vector.load %arg8[%c0_22, %c0_23, %c0_24] : memref<2x1x32xf32, #tpu.memory_space<vmem>>, vector<1x1x32xf32>
    %77 = vector.shape_cast %76 : vector<1x1x32xf32> to vector<1x32xf32>
    %78 = vector.broadcast %77 : vector<1x32xf32> to vector<16x32xf32>
    %79 = arith.addf %75, %78 : vector<16x32xf32>
    %80 = arith.addf %11, %79 : vector<16x32xf32>
    %c0_25 = arith.constant 0 : index
    %c0_26 = arith.constant 0 : index
    %c0_27 = arith.constant 0 : index
    %81 = vector.load %arg13[%c0_25, %c0_26, %c0_27] : memref<2x1x32xf32, #tpu.memory_space<vmem>>, vector<1x1x32xf32>
    %82 = vector.shape_cast %81 : vector<1x1x32xf32> to vector<1x32xf32>
    %c0_28 = arith.constant 0 : index
    %c0_29 = arith.constant 0 : index
    %c0_30 = arith.constant 0 : index
    %83 = vector.load %arg14[%c0_28, %c0_29, %c0_30] : memref<2x1x32xf32, #tpu.memory_space<vmem>>, vector<1x1x32xf32>
    %84 = vector.shape_cast %83 : vector<1x1x32xf32> to vector<1x32xf32>
    %cst_31 = arith.constant dense<0.000000e+00> : vector<16xf32>
    %85 = vector.multi_reduction <add>, %80, %cst_31 [1] : vector<16x32xf32> to vector<16xf32>
    %86 = vector.shape_cast %85 : vector<16xf32> to vector<16x1xf32>
    %cst_32 = arith.constant 3.200000e+01 : f32
    %87 = vector.broadcast %cst_32 : f32 to vector<16x1xf32>
    %88 = arith.divf %86, %87 : vector<16x1xf32>
    %89 = vector.broadcast %88 : vector<16x1xf32> to vector<16x32xf32>
    %90 = arith.subf %80, %89 : vector<16x32xf32>
    %91 = arith.mulf %90, %90 : vector<16x32xf32>
    %cst_33 = arith.constant dense<0.000000e+00> : vector<16xf32>
    %92 = vector.multi_reduction <add>, %91, %cst_33 [1] : vector<16x32xf32> to vector<16xf32>
    %93 = vector.shape_cast %92 : vector<16xf32> to vector<16x1xf32>
    %cst_34 = arith.constant 3.200000e+01 : f32
    %94 = vector.broadcast %cst_34 : f32 to vector<16x1xf32>
    %95 = arith.divf %93, %94 : vector<16x1xf32>
    %96 = vector.broadcast %88 : vector<16x1xf32> to vector<16x32xf32>
    %97 = arith.subf %80, %96 : vector<16x32xf32>
    %cst_35 = arith.constant 9.99999974E-6 : f32
    %98 = vector.broadcast %cst_35 : f32 to vector<16x1xf32>
    %99 = arith.addf %95, %98 : vector<16x1xf32>
    %100 = math.rsqrt %99 : vector<16x1xf32>
    %101 = vector.broadcast %100 : vector<16x1xf32> to vector<16x32xf32>
    %102 = arith.mulf %97, %101 : vector<16x32xf32>
    %103 = vector.broadcast %82 : vector<1x32xf32> to vector<16x32xf32>
    %104 = arith.mulf %102, %103 : vector<16x32xf32>
    %105 = vector.broadcast %84 : vector<1x32xf32> to vector<16x32xf32>
    %106 = arith.addf %104, %105 : vector<16x32xf32>
    %107 = arith.truncf %106 : vector<16x32xf32> to vector<16x32xbf16>
    %c0_36 = arith.constant 0 : index
    %c0_37 = arith.constant 0 : index
    %c0_38 = arith.constant 0 : index
    %108 = vector.load %arg9[%c0_36, %c0_37, %c0_38] : memref<2x32x64xbf16, #tpu.memory_space<vmem>>, vector<1x32x64xbf16>
    %109 = vector.shape_cast %108 : vector<1x32x64xbf16> to vector<32x64xbf16>
    %cst_39 = arith.constant dense<0.000000e+00> : vector<16x64xf32>
    %110 = tpu.matmul %107, %109, %cst_39 {dimension_numbers = #tpu.dot_dimension_numbers<[1], [0], [0], [1], [0, 0, 1, 1], [], []>} : vector<16x32xbf16>, vector<32x64xbf16>, vector<16x64xf32> -> vector<16x64xf32>
    %c0_40 = arith.constant 0 : index
    %c0_41 = arith.constant 0 : index
    %c0_42 = arith.constant 0 : index
    %111 = vector.load %arg10[%c0_40, %c0_41, %c0_42] : memref<2x1x64xf32, #tpu.memory_space<vmem>>, vector<1x1x64xf32>
    %112 = vector.shape_cast %111 : vector<1x1x64xf32> to vector<1x64xf32>
    %113 = vector.broadcast %112 : vector<1x64xf32> to vector<16x64xf32>
    %114 = arith.addf %110, %113 : vector<16x64xf32>
    %cst_43 = arith.constant 0.000000e+00 : f32
    %115 = vector.broadcast %cst_43 : f32 to vector<16x64xf32>
    %116 = arith.maximumf %114, %115 : vector<16x64xf32>
    %117 = arith.truncf %116 : vector<16x64xf32> to vector<16x64xbf16>
    %c0_44 = arith.constant 0 : index
    %c0_45 = arith.constant 0 : index
    %c0_46 = arith.constant 0 : index
    %118 = vector.load %arg11[%c0_44, %c0_45, %c0_46] : memref<2x64x32xbf16, #tpu.memory_space<vmem>>, vector<1x64x32xbf16>
    %119 = vector.shape_cast %118 : vector<1x64x32xbf16> to vector<64x32xbf16>
    %cst_47 = arith.constant dense<0.000000e+00> : vector<16x32xf32>
    %120 = tpu.matmul %117, %119, %cst_47 {dimension_numbers = #tpu.dot_dimension_numbers<[1], [0], [0], [1], [0, 0, 1, 1], [], []>} : vector<16x64xbf16>, vector<64x32xbf16>, vector<16x32xf32> -> vector<16x32xf32>
    %c0_48 = arith.constant 0 : index
    %c0_49 = arith.constant 0 : index
    %c0_50 = arith.constant 0 : index
    %121 = vector.load %arg12[%c0_48, %c0_49, %c0_50] : memref<2x1x32xf32, #tpu.memory_space<vmem>>, vector<1x1x32xf32>
    %122 = vector.shape_cast %121 : vector<1x1x32xf32> to vector<1x32xf32>
    %123 = vector.broadcast %122 : vector<1x32xf32> to vector<16x32xf32>
    %124 = arith.addf %120, %123 : vector<16x32xf32>
    %125 = arith.addf %106, %124 : vector<16x32xf32>
    %c0_51 = arith.constant 0 : index
    %c0_52 = arith.constant 0 : index
    %c0_53 = arith.constant 0 : index
    %126 = vector.load %arg15[%c0_51, %c0_52, %c0_53] : memref<2x1x32xf32, #tpu.memory_space<vmem>>, vector<1x1x32xf32>
    %127 = vector.shape_cast %126 : vector<1x1x32xf32> to vector<1x32xf32>
    %c0_54 = arith.constant 0 : index
    %c0_55 = arith.constant 0 : index
    %c0_56 = arith.constant 0 : index
    %128 = vector.load %arg16[%c0_54, %c0_55, %c0_56] : memref<2x1x32xf32, #tpu.memory_space<vmem>>, vector<1x1x32xf32>
    %129 = vector.shape_cast %128 : vector<1x1x32xf32> to vector<1x32xf32>
    %cst_57 = arith.constant dense<0.000000e+00> : vector<16xf32>
    %130 = vector.multi_reduction <add>, %125, %cst_57 [1] : vector<16x32xf32> to vector<16xf32>
    %131 = vector.shape_cast %130 : vector<16xf32> to vector<16x1xf32>
    %cst_58 = arith.constant 3.200000e+01 : f32
    %132 = vector.broadcast %cst_58 : f32 to vector<16x1xf32>
    %133 = arith.divf %131, %132 : vector<16x1xf32>
    %134 = vector.broadcast %133 : vector<16x1xf32> to vector<16x32xf32>
    %135 = arith.subf %125, %134 : vector<16x32xf32>
    %136 = arith.mulf %135, %135 : vector<16x32xf32>
    %cst_59 = arith.constant dense<0.000000e+00> : vector<16xf32>
    %137 = vector.multi_reduction <add>, %136, %cst_59 [1] : vector<16x32xf32> to vector<16xf32>
    %138 = vector.shape_cast %137 : vector<16xf32> to vector<16x1xf32>
    %cst_60 = arith.constant 3.200000e+01 : f32
    %139 = vector.broadcast %cst_60 : f32 to vector<16x1xf32>
    %140 = arith.divf %138, %139 : vector<16x1xf32>
    %141 = vector.broadcast %133 : vector<16x1xf32> to vector<16x32xf32>
    %142 = arith.subf %125, %141 : vector<16x32xf32>
    %cst_61 = arith.constant 9.99999974E-6 : f32
    %143 = vector.broadcast %cst_61 : f32 to vector<16x1xf32>
    %144 = arith.addf %140, %143 : vector<16x1xf32>
    %145 = math.rsqrt %144 : vector<16x1xf32>
    %146 = vector.broadcast %145 : vector<16x1xf32> to vector<16x32xf32>
    %147 = arith.mulf %142, %146 : vector<16x32xf32>
    %148 = vector.broadcast %127 : vector<1x32xf32> to vector<16x32xf32>
    %149 = arith.mulf %147, %148 : vector<16x32xf32>
    %150 = vector.broadcast %129 : vector<1x32xf32> to vector<16x32xf32>
    %151 = arith.addf %149, %150 : vector<16x32xf32>
    %152 = arith.truncf %151 : vector<16x32xf32> to vector<16x32xbf16>
    %c1 = arith.constant 1 : index
    %c0_62 = arith.constant 0 : index
    %c0_63 = arith.constant 0 : index
    %153 = vector.load %arg5[%c1, %c0_62, %c0_63] : memref<2x32x96xbf16, #tpu.memory_space<vmem>>, vector<1x32x96xbf16>
    %154 = vector.shape_cast %153 : vector<1x32x96xbf16> to vector<32x96xbf16>
    %cst_64 = arith.constant dense<0.000000e+00> : vector<16x96xf32>
    %155 = tpu.matmul %152, %154, %cst_64 {dimension_numbers = #tpu.dot_dimension_numbers<[1], [0], [0], [1], [0, 0, 1, 1], [], []>} : vector<16x32xbf16>, vector<32x96xbf16>, vector<16x96xf32> -> vector<16x96xf32>
    %c1_65 = arith.constant 1 : index
    %c0_66 = arith.constant 0 : index
    %c0_67 = arith.constant 0 : index
    %156 = vector.load %arg6[%c1_65, %c0_66, %c0_67] : memref<2x1x96xf32, #tpu.memory_space<vmem>>, vector<1x1x96xf32>
    %157 = vector.shape_cast %156 : vector<1x1x96xf32> to vector<1x96xf32>
    %158 = vector.broadcast %157 : vector<1x96xf32> to vector<16x96xf32>
    %159 = arith.addf %155, %158 : vector<16x96xf32>
    %160 = vector.extract_strided_slice %159 {offsets = [0, 0], sizes = [16, 8], strides = [1, 1]} : vector<16x96xf32> to vector<16x8xf32>
    %161 = vector.shape_cast %160 : vector<16x8xf32> to vector<2x8x8xf32>
    %162 = vector.extract_strided_slice %159 {offsets = [0, 8], sizes = [16, 8], strides = [1, 1]} : vector<16x96xf32> to vector<16x8xf32>
    %163 = vector.shape_cast %162 : vector<16x8xf32> to vector<2x8x8xf32>
    %164 = vector.extract_strided_slice %159 {offsets = [0, 16], sizes = [16, 8], strides = [1, 1]} : vector<16x96xf32> to vector<16x8xf32>
    %165 = vector.shape_cast %164 : vector<16x8xf32> to vector<2x8x8xf32>
    %166 = vector.extract_strided_slice %159 {offsets = [0, 24], sizes = [16, 8], strides = [1, 1]} : vector<16x96xf32> to vector<16x8xf32>
    %167 = vector.shape_cast %166 : vector<16x8xf32> to vector<2x8x8xf32>
    %168 = tpu.concatenate %161, %163, %165, %167 in 0 : vector<2x8x8xf32>, vector<2x8x8xf32>, vector<2x8x8xf32>, vector<2x8x8xf32> -> vector<8x8x8xf32>
    %169 = arith.truncf %168 : vector<8x8x8xf32> to vector<8x8x8xbf16>
    %170 = vector.extract_strided_slice %159 {offsets = [0, 32], sizes = [16, 8], strides = [1, 1]} : vector<16x96xf32> to vector<16x8xf32>
    %171 = vector.shape_cast %170 : vector<16x8xf32> to vector<2x8x8xf32>
    %172 = vector.extract_strided_slice %159 {offsets = [0, 40], sizes = [16, 8], strides = [1, 1]} : vector<16x96xf32> to vector<16x8xf32>
    %173 = vector.shape_cast %172 : vector<16x8xf32> to vector<2x8x8xf32>
    %174 = vector.extract_strided_slice %159 {offsets = [0, 48], sizes = [16, 8], strides = [1, 1]} : vector<16x96xf32> to vector<16x8xf32>
    %175 = vector.shape_cast %174 : vector<16x8xf32> to vector<2x8x8xf32>
    %176 = vector.extract_strided_slice %159 {offsets = [0, 56], sizes = [16, 8], strides = [1, 1]} : vector<16x96xf32> to vector<16x8xf32>
    %177 = vector.shape_cast %176 : vector<16x8xf32> to vector<2x8x8xf32>
    %178 = tpu.concatenate %171, %173, %175, %177 in 0 : vector<2x8x8xf32>, vector<2x8x8xf32>, vector<2x8x8xf32>, vector<2x8x8xf32> -> vector<8x8x8xf32>
    %179 = arith.truncf %178 : vector<8x8x8xf32> to vector<8x8x8xbf16>
    %180 = vector.extract_strided_slice %159 {offsets = [0, 64], sizes = [16, 8], strides = [1, 1]} : vector<16x96xf32> to vector<16x8xf32>
    %181 = vector.shape_cast %180 : vector<16x8xf32> to vector<2x8x8xf32>
    %182 = vector.extract_strided_slice %159 {offsets = [0, 72], sizes = [16, 8], strides = [1, 1]} : vector<16x96xf32> to vector<16x8xf32>
    %183 = vector.shape_cast %182 : vector<16x8xf32> to vector<2x8x8xf32>
    %184 = vector.extract_strided_slice %159 {offsets = [0, 80], sizes = [16, 8], strides = [1, 1]} : vector<16x96xf32> to vector<16x8xf32>
    %185 = vector.shape_cast %184 : vector<16x8xf32> to vector<2x8x8xf32>
    %186 = vector.extract_strided_slice %159 {offsets = [0, 88], sizes = [16, 8], strides = [1, 1]} : vector<16x96xf32> to vector<16x8xf32>
    %187 = vector.shape_cast %186 : vector<16x8xf32> to vector<2x8x8xf32>
    %188 = tpu.concatenate %181, %183, %185, %187 in 0 : vector<2x8x8xf32>, vector<2x8x8xf32>, vector<2x8x8xf32>, vector<2x8x8xf32> -> vector<8x8x8xf32>
    %189 = arith.truncf %188 : vector<8x8x8xf32> to vector<8x8x8xbf16>
    "tpu.trace_start"() <{level = 10 : i32, message = "gqd,gkd->gqk"}> : () -> ()
    %cst_68 = arith.constant dense<0.000000e+00> : vector<8x8x8xf32>
    %190 = tpu.matmul %169, %179, %cst_68 {dimension_numbers = #tpu.dot_dimension_numbers<[2], [2], [1], [1], [0, 0, 0, 1, 1, 1], [0], [0]>} : vector<8x8x8xbf16>, vector<8x8x8xbf16>, vector<8x8x8xf32> -> vector<8x8x8xf32>
    "tpu.trace_stop"() : () -> ()
    %cst_69 = arith.constant dense<0xFF800000> : vector<8x8xf32>
    %191 = vector.multi_reduction <maximumf>, %190, %cst_69 [2] : vector<8x8x8xf32> to vector<8x8xf32>
    %192 = vector.shape_cast %191 : vector<8x8xf32> to vector<8x8x1xf32>
    %193 = vector.broadcast %192 : vector<8x8x1xf32> to vector<8x8x8xf32>
    %194 = arith.subf %190, %193 : vector<8x8x8xf32>
    %195 = math.exp %194 : vector<8x8x8xf32>
    %cst_70 = arith.constant dense<0.000000e+00> : vector<8x8xf32>
    %196 = vector.multi_reduction <add>, %195, %cst_70 [2] : vector<8x8x8xf32> to vector<8x8xf32>
    %197 = vector.shape_cast %196 : vector<8x8xf32> to vector<8x8x1xf32>
    %198 = tpu.reciprocal %197 {approx = true} : vector<8x8x1xf32> -> vector<8x8x1xf32>
    %199 = vector.broadcast %198 : vector<8x8x1xf32> to vector<8x8x8xf32>
    %200 = arith.mulf %195, %199 : vector<8x8x8xf32>
    %201 = arith.truncf %200 : vector<8x8x8xf32> to vector<8x8x8xbf16>
    "tpu.trace_start"() <{level = 10 : i32, message = "gqk,gkd->gqd"}> : () -> ()
    %cst_71 = arith.constant dense<0.000000e+00> : vector<8x8x8xf32>
    %202 = tpu.matmul %201, %189, %cst_71 {dimension_numbers = #tpu.dot_dimension_numbers<[2], [1], [1], [2], [0, 0, 0, 1, 1, 2], [0], [0]>} : vector<8x8x8xbf16>, vector<8x8x8xbf16>, vector<8x8x8xf32> -> vector<8x8x8xf32>
    "tpu.trace_stop"() : () -> ()
    %203 = vector.extract_strided_slice %202 {offsets = [0, 0, 0], sizes = [2, 8, 8], strides = [1, 1, 1]} : vector<8x8x8xf32> to vector<2x8x8xf32>
    %204 = vector.shape_cast %203 : vector<2x8x8xf32> to vector<16x8xf32>
    %205 = vector.extract_strided_slice %202 {offsets = [2, 0, 0], sizes = [2, 8, 8], strides = [1, 1, 1]} : vector<8x8x8xf32> to vector<2x8x8xf32>
    %206 = vector.shape_cast %205 : vector<2x8x8xf32> to vector<16x8xf32>
    %207 = vector.extract_strided_slice %202 {offsets = [4, 0, 0], sizes = [2, 8, 8], strides = [1, 1, 1]} : vector<8x8x8xf32> to vector<2x8x8xf32>
    %208 = vector.shape_cast %207 : vector<2x8x8xf32> to vector<16x8xf32>
    %209 = vector.extract_strided_slice %202 {offsets = [6, 0, 0], sizes = [2, 8, 8], strides = [1, 1, 1]} : vector<8x8x8xf32> to vector<2x8x8xf32>
    %210 = vector.shape_cast %209 : vector<2x8x8xf32> to vector<16x8xf32>
    %211 = tpu.concatenate %204, %206, %208, %210 in 1 : vector<16x8xf32>, vector<16x8xf32>, vector<16x8xf32>, vector<16x8xf32> -> vector<16x32xf32>
    %212 = arith.truncf %211 : vector<16x32xf32> to vector<16x32xbf16>
    %c1_72 = arith.constant 1 : index
    %c0_73 = arith.constant 0 : index
    %c0_74 = arith.constant 0 : index
    %213 = vector.load %arg7[%c1_72, %c0_73, %c0_74] : memref<2x32x32xbf16, #tpu.memory_space<vmem>>, vector<1x32x32xbf16>
    %214 = vector.shape_cast %213 : vector<1x32x32xbf16> to vector<32x32xbf16>
    %cst_75 = arith.constant dense<0.000000e+00> : vector<16x32xf32>
    %215 = tpu.matmul %212, %214, %cst_75 {dimension_numbers = #tpu.dot_dimension_numbers<[1], [0], [0], [1], [0, 0, 1, 1], [], []>} : vector<16x32xbf16>, vector<32x32xbf16>, vector<16x32xf32> -> vector<16x32xf32>
    %c1_76 = arith.constant 1 : index
    %c0_77 = arith.constant 0 : index
    %c0_78 = arith.constant 0 : index
    %216 = vector.load %arg8[%c1_76, %c0_77, %c0_78] : memref<2x1x32xf32, #tpu.memory_space<vmem>>, vector<1x1x32xf32>
    %217 = vector.shape_cast %216 : vector<1x1x32xf32> to vector<1x32xf32>
    %218 = vector.broadcast %217 : vector<1x32xf32> to vector<16x32xf32>
    %219 = arith.addf %215, %218 : vector<16x32xf32>
    %220 = arith.addf %151, %219 : vector<16x32xf32>
    %c1_79 = arith.constant 1 : index
    %c0_80 = arith.constant 0 : index
    %c0_81 = arith.constant 0 : index
    %221 = vector.load %arg13[%c1_79, %c0_80, %c0_81] : memref<2x1x32xf32, #tpu.memory_space<vmem>>, vector<1x1x32xf32>
    %222 = vector.shape_cast %221 : vector<1x1x32xf32> to vector<1x32xf32>
    %c1_82 = arith.constant 1 : index
    %c0_83 = arith.constant 0 : index
    %c0_84 = arith.constant 0 : index
    %223 = vector.load %arg14[%c1_82, %c0_83, %c0_84] : memref<2x1x32xf32, #tpu.memory_space<vmem>>, vector<1x1x32xf32>
    %224 = vector.shape_cast %223 : vector<1x1x32xf32> to vector<1x32xf32>
    %cst_85 = arith.constant dense<0.000000e+00> : vector<16xf32>
    %225 = vector.multi_reduction <add>, %220, %cst_85 [1] : vector<16x32xf32> to vector<16xf32>
    %226 = vector.shape_cast %225 : vector<16xf32> to vector<16x1xf32>
    %cst_86 = arith.constant 3.200000e+01 : f32
    %227 = vector.broadcast %cst_86 : f32 to vector<16x1xf32>
    %228 = arith.divf %226, %227 : vector<16x1xf32>
    %229 = vector.broadcast %228 : vector<16x1xf32> to vector<16x32xf32>
    %230 = arith.subf %220, %229 : vector<16x32xf32>
    %231 = arith.mulf %230, %230 : vector<16x32xf32>
    %cst_87 = arith.constant dense<0.000000e+00> : vector<16xf32>
    %232 = vector.multi_reduction <add>, %231, %cst_87 [1] : vector<16x32xf32> to vector<16xf32>
    %233 = vector.shape_cast %232 : vector<16xf32> to vector<16x1xf32>
    %cst_88 = arith.constant 3.200000e+01 : f32
    %234 = vector.broadcast %cst_88 : f32 to vector<16x1xf32>
    %235 = arith.divf %233, %234 : vector<16x1xf32>
    %236 = vector.broadcast %228 : vector<16x1xf32> to vector<16x32xf32>
    %237 = arith.subf %220, %236 : vector<16x32xf32>
    %cst_89 = arith.constant 9.99999974E-6 : f32
    %238 = vector.broadcast %cst_89 : f32 to vector<16x1xf32>
    %239 = arith.addf %235, %238 : vector<16x1xf32>
    %240 = math.rsqrt %239 : vector<16x1xf32>
    %241 = vector.broadcast %240 : vector<16x1xf32> to vector<16x32xf32>
    %242 = arith.mulf %237, %241 : vector<16x32xf32>
    %243 = vector.broadcast %222 : vector<1x32xf32> to vector<16x32xf32>
    %244 = arith.mulf %242, %243 : vector<16x32xf32>
    %245 = vector.broadcast %224 : vector<1x32xf32> to vector<16x32xf32>
    %246 = arith.addf %244, %245 : vector<16x32xf32>
    %247 = arith.truncf %246 : vector<16x32xf32> to vector<16x32xbf16>
    %c1_90 = arith.constant 1 : index
    %c0_91 = arith.constant 0 : index
    %c0_92 = arith.constant 0 : index
    %248 = vector.load %arg9[%c1_90, %c0_91, %c0_92] : memref<2x32x64xbf16, #tpu.memory_space<vmem>>, vector<1x32x64xbf16>
    %249 = vector.shape_cast %248 : vector<1x32x64xbf16> to vector<32x64xbf16>
    %cst_93 = arith.constant dense<0.000000e+00> : vector<16x64xf32>
    %250 = tpu.matmul %247, %249, %cst_93 {dimension_numbers = #tpu.dot_dimension_numbers<[1], [0], [0], [1], [0, 0, 1, 1], [], []>} : vector<16x32xbf16>, vector<32x64xbf16>, vector<16x64xf32> -> vector<16x64xf32>
    %c1_94 = arith.constant 1 : index
    %c0_95 = arith.constant 0 : index
    %c0_96 = arith.constant 0 : index
    %251 = vector.load %arg10[%c1_94, %c0_95, %c0_96] : memref<2x1x64xf32, #tpu.memory_space<vmem>>, vector<1x1x64xf32>
    %252 = vector.shape_cast %251 : vector<1x1x64xf32> to vector<1x64xf32>
    %253 = vector.broadcast %252 : vector<1x64xf32> to vector<16x64xf32>
    %254 = arith.addf %250, %253 : vector<16x64xf32>
    %cst_97 = arith.constant 0.000000e+00 : f32
    %255 = vector.broadcast %cst_97 : f32 to vector<16x64xf32>
    %256 = arith.maximumf %254, %255 : vector<16x64xf32>
    %257 = arith.truncf %256 : vector<16x64xf32> to vector<16x64xbf16>
    %c1_98 = arith.constant 1 : index
    %c0_99 = arith.constant 0 : index
    %c0_100 = arith.constant 0 : index
    %258 = vector.load %arg11[%c1_98, %c0_99, %c0_100] : memref<2x64x32xbf16, #tpu.memory_space<vmem>>, vector<1x64x32xbf16>
    %259 = vector.shape_cast %258 : vector<1x64x32xbf16> to vector<64x32xbf16>
    %cst_101 = arith.constant dense<0.000000e+00> : vector<16x32xf32>
    %260 = tpu.matmul %257, %259, %cst_101 {dimension_numbers = #tpu.dot_dimension_numbers<[1], [0], [0], [1], [0, 0, 1, 1], [], []>} : vector<16x64xbf16>, vector<64x32xbf16>, vector<16x32xf32> -> vector<16x32xf32>
    %c1_102 = arith.constant 1 : index
    %c0_103 = arith.constant 0 : index
    %c0_104 = arith.constant 0 : index
    %261 = vector.load %arg12[%c1_102, %c0_103, %c0_104] : memref<2x1x32xf32, #tpu.memory_space<vmem>>, vector<1x1x32xf32>
    %262 = vector.shape_cast %261 : vector<1x1x32xf32> to vector<1x32xf32>
    %263 = vector.broadcast %262 : vector<1x32xf32> to vector<16x32xf32>
    %264 = arith.addf %260, %263 : vector<16x32xf32>
    %265 = arith.addf %246, %264 : vector<16x32xf32>
    %c1_105 = arith.constant 1 : index
    %c0_106 = arith.constant 0 : index
    %c0_107 = arith.constant 0 : index
    %266 = vector.load %arg15[%c1_105, %c0_106, %c0_107] : memref<2x1x32xf32, #tpu.memory_space<vmem>>, vector<1x1x32xf32>
    %267 = vector.shape_cast %266 : vector<1x1x32xf32> to vector<1x32xf32>
    %c1_108 = arith.constant 1 : index
    %c0_109 = arith.constant 0 : index
    %c0_110 = arith.constant 0 : index
    %268 = vector.load %arg16[%c1_108, %c0_109, %c0_110] : memref<2x1x32xf32, #tpu.memory_space<vmem>>, vector<1x1x32xf32>
    %269 = vector.shape_cast %268 : vector<1x1x32xf32> to vector<1x32xf32>
    %cst_111 = arith.constant dense<0.000000e+00> : vector<16xf32>
    %270 = vector.multi_reduction <add>, %265, %cst_111 [1] : vector<16x32xf32> to vector<16xf32>
    %271 = vector.shape_cast %270 : vector<16xf32> to vector<16x1xf32>
    %cst_112 = arith.constant 3.200000e+01 : f32
    %272 = vector.broadcast %cst_112 : f32 to vector<16x1xf32>
    %273 = arith.divf %271, %272 : vector<16x1xf32>
    %274 = vector.broadcast %273 : vector<16x1xf32> to vector<16x32xf32>
    %275 = arith.subf %265, %274 : vector<16x32xf32>
    %276 = arith.mulf %275, %275 : vector<16x32xf32>
    %cst_113 = arith.constant dense<0.000000e+00> : vector<16xf32>
    %277 = vector.multi_reduction <add>, %276, %cst_113 [1] : vector<16x32xf32> to vector<16xf32>
    %278 = vector.shape_cast %277 : vector<16xf32> to vector<16x1xf32>
    %cst_114 = arith.constant 3.200000e+01 : f32
    %279 = vector.broadcast %cst_114 : f32 to vector<16x1xf32>
    %280 = arith.divf %278, %279 : vector<16x1xf32>
    %281 = vector.broadcast %273 : vector<16x1xf32> to vector<16x32xf32>
    %282 = arith.subf %265, %281 : vector<16x32xf32>
    %cst_115 = arith.constant 9.99999974E-6 : f32
    %283 = vector.broadcast %cst_115 : f32 to vector<16x1xf32>
    %284 = arith.addf %280, %283 : vector<16x1xf32>
    %285 = math.rsqrt %284 : vector<16x1xf32>
    %286 = vector.broadcast %285 : vector<16x1xf32> to vector<16x32xf32>
    %287 = arith.mulf %282, %286 : vector<16x32xf32>
    %288 = vector.broadcast %267 : vector<1x32xf32> to vector<16x32xf32>
    %289 = arith.mulf %287, %288 : vector<16x32xf32>
    %290 = vector.broadcast %269 : vector<1x32xf32> to vector<16x32xf32>
    %291 = arith.addf %289, %290 : vector<16x32xf32>
    %292 = vector.shape_cast %291 : vector<16x32xf32> to vector<2x8x32xf32>
    %293 = vector.extract_strided_slice %292 {offsets = [0, 7, 0], sizes = [2, 1, 32], strides = [1, 1, 1]} : vector<2x8x32xf32> to vector<2x1x32xf32>
    %294 = vector.shape_cast %293 : vector<2x1x32xf32> to vector<2x32xf32>
    %c0_116 = arith.constant 0 : index
    %c0_117 = arith.constant 0 : index
    %295 = vector.load %arg17[%c0_116, %c0_117] : memref<1x32xf32, #tpu.memory_space<vmem>>, vector<1x32xf32>
    %c0_118 = arith.constant 0 : index
    %c0_119 = arith.constant 0 : index
    %296 = vector.load %arg18[%c0_118, %c0_119] : memref<1x32xf32, #tpu.memory_space<vmem>>, vector<1x32xf32>
    %cst_120 = arith.constant dense<0.000000e+00> : vector<2xf32>
    %297 = vector.multi_reduction <add>, %294, %cst_120 [1] : vector<2x32xf32> to vector<2xf32>
    %298 = vector.shape_cast %297 : vector<2xf32> to vector<2x1xf32>
    %cst_121 = arith.constant 3.200000e+01 : f32
    %299 = vector.broadcast %cst_121 : f32 to vector<2x1xf32>
    %300 = arith.divf %298, %299 : vector<2x1xf32>
    %301 = vector.broadcast %300 : vector<2x1xf32> to vector<2x32xf32>
    %302 = arith.subf %294, %301 : vector<2x32xf32>
    %303 = arith.mulf %302, %302 : vector<2x32xf32>
    %cst_122 = arith.constant dense<0.000000e+00> : vector<2xf32>
    %304 = vector.multi_reduction <add>, %303, %cst_122 [1] : vector<2x32xf32> to vector<2xf32>
    %305 = vector.shape_cast %304 : vector<2xf32> to vector<2x1xf32>
    %cst_123 = arith.constant 3.200000e+01 : f32
    %306 = vector.broadcast %cst_123 : f32 to vector<2x1xf32>
    %307 = arith.divf %305, %306 : vector<2x1xf32>
    %308 = vector.broadcast %300 : vector<2x1xf32> to vector<2x32xf32>
    %309 = arith.subf %294, %308 : vector<2x32xf32>
    %cst_124 = arith.constant 9.99999974E-6 : f32
    %310 = vector.broadcast %cst_124 : f32 to vector<2x1xf32>
    %311 = arith.addf %307, %310 : vector<2x1xf32>
    %312 = math.rsqrt %311 : vector<2x1xf32>
    %313 = vector.broadcast %312 : vector<2x1xf32> to vector<2x32xf32>
    %314 = arith.mulf %309, %313 : vector<2x32xf32>
    %315 = vector.broadcast %295 : vector<1x32xf32> to vector<2x32xf32>
    %316 = arith.mulf %314, %315 : vector<2x32xf32>
    %317 = vector.broadcast %296 : vector<1x32xf32> to vector<2x32xf32>
    %318 = arith.addf %316, %317 : vector<2x32xf32>
    %319 = arith.truncf %318 : vector<2x32xf32> to vector<2x32xbf16>
    %c0_125 = arith.constant 0 : index
    %c0_126 = arith.constant 0 : index
    %320 = vector.load %arg19[%c0_125, %c0_126] : memref<32x256xbf16, #tpu.memory_space<vmem>>, vector<32x256xbf16>
    %cst_127 = arith.constant dense<0.000000e+00> : vector<2x256xf32>
    %321 = tpu.matmul %319, %320, %cst_127 {dimension_numbers = #tpu.dot_dimension_numbers<[1], [0], [0], [1], [0, 0, 1, 1], [], []>} : vector<2x32xbf16>, vector<32x256xbf16>, vector<2x256xf32> -> vector<2x256xf32>
    %c0_128 = arith.constant 0 : index
    %c0_129 = arith.constant 0 : index
    %322 = vector.load %arg20[%c0_128, %c0_129] : memref<1x256xf32, #tpu.memory_space<vmem>>, vector<1x256xf32>
    %323 = vector.broadcast %322 : vector<1x256xf32> to vector<2x256xf32>
    %324 = arith.addf %321, %323 : vector<2x256xf32>
    %cst_130 = arith.constant 0.000000e+00 : f32
    %325 = vector.broadcast %cst_130 : f32 to vector<2x256xf32>
    %326 = arith.maximumf %324, %325 : vector<2x256xf32>
    %c0_131 = arith.constant 0 : index
    %c0_132 = arith.constant 0 : index
    %327 = vector.load %arg21[%c0_131, %c0_132] : memref<1x256xf32, #tpu.memory_space<vmem>>, vector<1x256xf32>
    %328 = vector.broadcast %327 : vector<1x256xf32> to vector<2x256xf32>
    %329 = arith.mulf %326, %328 : vector<2x256xf32>
    %c0_133 = arith.constant 0 : index
    %c0_134 = arith.constant 0 : index
    %330 = vector.load %arg22[%c0_133, %c0_134] : memref<1x256xf32, #tpu.memory_space<vmem>>, vector<1x256xf32>
    %331 = vector.broadcast %330 : vector<1x256xf32> to vector<2x256xf32>
    %332 = arith.addf %329, %331 : vector<2x256xf32>
    %333 = arith.truncf %332 : vector<2x256xf32> to vector<2x256xbf16>
    %c0_135 = arith.constant 0 : index
    %c0_136 = arith.constant 0 : index
    %334 = vector.load %arg23[%c0_135, %c0_136] : memref<256x8xbf16, #tpu.memory_space<vmem>>, vector<256x8xbf16>
    %cst_137 = arith.constant dense<0.000000e+00> : vector<2x8xf32>
    %335 = tpu.matmul %333, %334, %cst_137 {dimension_numbers = #tpu.dot_dimension_numbers<[1], [0], [0], [1], [0, 0, 1, 1], [], []>} : vector<2x256xbf16>, vector<256x8xbf16>, vector<2x8xf32> -> vector<2x8xf32>
    %c0_138 = arith.constant 0 : index
    %c0_139 = arith.constant 0 : index
    %336 = vector.load %arg24[%c0_138, %c0_139] : memref<1x8xf32, #tpu.memory_space<vmem>>, vector<1x8xf32>
    %337 = vector.broadcast %336 : vector<1x8xf32> to vector<2x8xf32>
    %338 = arith.addf %335, %337 : vector<2x8xf32>
    %cst_140 = arith.constant dense<0xFF800000> : vector<2xf32>
    %339 = vector.multi_reduction <maximumf>, %338, %cst_140 [1] : vector<2x8xf32> to vector<2xf32>
    %340 = vector.shape_cast %339 : vector<2xf32> to vector<2x1xf32>
    %341 = vector.broadcast %340 : vector<2x1xf32> to vector<2x8xf32>
    %342 = arith.subf %338, %341 : vector<2x8xf32>
    %343 = math.exp %342 : vector<2x8xf32>
    %cst_141 = arith.constant dense<0.000000e+00> : vector<2xf32>
    %344 = vector.multi_reduction <add>, %343, %cst_141 [1] : vector<2x8xf32> to vector<2xf32>
    %345 = vector.shape_cast %344 : vector<2xf32> to vector<2x1xf32>
    %346 = vector.broadcast %345 : vector<2x1xf32> to vector<2x8xf32>
    %347 = arith.divf %343, %346 : vector<2x8xf32>
    %c0_142 = arith.constant 0 : index
    %c0_143 = arith.constant 0 : index
    %348 = vector.load %arg25[%c0_142, %c0_143] : memref<2x8xf32, #tpu.memory_space<vmem>>, vector<2x8xf32>
    tpu.vector_store %arg25[%c0_142, %c0_143], %347 {strides = array<i32>} : memref<2x8xf32, #tpu.memory_space<vmem>>, vector<2x8xf32>,
    return
  }
  func.func @transform_0(%arg0: i32) -> (i32, i32) {
    %c0_i32 = arith.constant 0 : i32
    %c0_i32_0 = arith.constant 0 : i32
    return %arg0, %c0_i32 : i32, i32
  }
  func.func @transform_1(%arg0: i32) -> (i32, i32) {
    %c0_i32 = arith.constant 0 : i32
    %c0_i32_0 = arith.constant 0 : i32
    %c0_i32_1 = arith.constant 0 : i32
    return %c0_i32, %c0_i32_0 : i32, i32
  }
  func.func @transform_2(%arg0: i32) -> (i32, i32) {
    %c0_i32 = arith.constant 0 : i32
    %c0_i32_0 = arith.constant 0 : i32
    %c0_i32_1 = arith.constant 0 : i32
    return %c0_i32, %c0_i32_0 : i32, i32
  }
  func.func @transform_3(%arg0: i32) -> (i32, i32) {
    %c0_i32 = arith.constant 0 : i32
    %c0_i32_0 = arith.constant 0 : i32
    %c0_i32_1 = arith.constant 0 : i32
    return %c0_i32, %c0_i32_0 : i32, i32
  }
  func.func @transform_4(%arg0: i32) -> (i32, i32, i32) {
    %c0_i32 = arith.constant 0 : i32
    %c0_i32_0 = arith.constant 0 : i32
    %c0_i32_1 = arith.constant 0 : i32
    %c0_i32_2 = arith.constant 0 : i32
    return %c0_i32, %c0_i32_0, %c0_i32_1 : i32, i32, i32
  }
  func.func @transform_5(%arg0: i32) -> (i32, i32, i32) {
    %c0_i32 = arith.constant 0 : i32
    %c0_i32_0 = arith.constant 0 : i32
    %c0_i32_1 = arith.constant 0 : i32
    %c0_i32_2 = arith.constant 0 : i32
    return %c0_i32, %c0_i32_0, %c0_i32_1 : i32, i32, i32
  }
  func.func @transform_6(%arg0: i32) -> (i32, i32, i32) {
    %c0_i32 = arith.constant 0 : i32
    %c0_i32_0 = arith.constant 0 : i32
    %c0_i32_1 = arith.constant 0 : i32
    %c0_i32_2 = arith.constant 0 : i32
    return %c0_i32, %c0_i32_0, %c0_i32_1 : i32, i32, i32
  }
  func.func @transform_7(%arg0: i32) -> (i32, i32, i32) {
    %c0_i32 = arith.constant 0 : i32
    %c0_i32_0 = arith.constant 0 : i32
    %c0_i32_1 = arith.constant 0 : i32
    %c0_i32_2 = arith.constant 0 : i32
    return %c0_i32, %c0_i32_0, %c0_i32_1 : i32, i32, i32
  }
  func.func @transform_8(%arg0: i32) -> (i32, i32, i32) {
    %c0_i32 = arith.constant 0 : i32
    %c0_i32_0 = arith.constant 0 : i32
    %c0_i32_1 = arith.constant 0 : i32
    %c0_i32_2 = arith.constant 0 : i32
    return %c0_i32, %c0_i32_0, %c0_i32_1 : i32, i32, i32
  }
  func.func @transform_9(%arg0: i32) -> (i32, i32, i32) {
    %c0_i32 = arith.constant 0 : i32
    %c0_i32_0 = arith.constant 0 : i32
    %c0_i32_1 = arith.constant 0 : i32
    %c0_i32_2 = arith.constant 0 : i32
    return %c0_i32, %c0_i32_0, %c0_i32_1 : i32, i32, i32
  }
  func.func @transform_10(%arg0: i32) -> (i32, i32, i32) {
    %c0_i32 = arith.constant 0 : i32
    %c0_i32_0 = arith.constant 0 : i32
    %c0_i32_1 = arith.constant 0 : i32
    %c0_i32_2 = arith.constant 0 : i32
    return %c0_i32, %c0_i32_0, %c0_i32_1 : i32, i32, i32
  }
  func.func @transform_11(%arg0: i32) -> (i32, i32, i32) {
    %c0_i32 = arith.constant 0 : i32
    %c0_i32_0 = arith.constant 0 : i32
    %c0_i32_1 = arith.constant 0 : i32
    %c0_i32_2 = arith.constant 0 : i32
    return %c0_i32, %c0_i32_0, %c0_i32_1 : i32, i32, i32
  }
  func.func @transform_12(%arg0: i32) -> (i32, i32, i32) {
    %c0_i32 = arith.constant 0 : i32
    %c0_i32_0 = arith.constant 0 : i32
    %c0_i32_1 = arith.constant 0 : i32
    %c0_i32_2 = arith.constant 0 : i32
    return %c0_i32, %c0_i32_0, %c0_i32_1 : i32, i32, i32
  }
  func.func @transform_13(%arg0: i32) -> (i32, i32, i32) {
    %c0_i32 = arith.constant 0 : i32
    %c0_i32_0 = arith.constant 0 : i32
    %c0_i32_1 = arith.constant 0 : i32
    %c0_i32_2 = arith.constant 0 : i32
    return %c0_i32, %c0_i32_0, %c0_i32_1 : i32, i32, i32
  }
  func.func @transform_14(%arg0: i32) -> (i32, i32, i32) {
    %c0_i32 = arith.constant 0 : i32
    %c0_i32_0 = arith.constant 0 : i32
    %c0_i32_1 = arith.constant 0 : i32
    %c0_i32_2 = arith.constant 0 : i32
    return %c0_i32, %c0_i32_0, %c0_i32_1 : i32, i32, i32
  }
  func.func @transform_15(%arg0: i32) -> (i32, i32, i32) {
    %c0_i32 = arith.constant 0 : i32
    %c0_i32_0 = arith.constant 0 : i32
    %c0_i32_1 = arith.constant 0 : i32
    %c0_i32_2 = arith.constant 0 : i32
    return %c0_i32, %c0_i32_0, %c0_i32_1 : i32, i32, i32
  }
  func.func @transform_16(%arg0: i32) -> (i32, i32) {
    %c0_i32 = arith.constant 0 : i32
    %c0_i32_0 = arith.constant 0 : i32
    %c0_i32_1 = arith.constant 0 : i32
    return %c0_i32, %c0_i32_0 : i32, i32
  }
  func.func @transform_17(%arg0: i32) -> (i32, i32) {
    %c0_i32 = arith.constant 0 : i32
    %c0_i32_0 = arith.constant 0 : i32
    %c0_i32_1 = arith.constant 0 : i32
    return %c0_i32, %c0_i32_0 : i32, i32
  }
  func.func @transform_18(%arg0: i32) -> (i32, i32) {
    %c0_i32 = arith.constant 0 : i32
    %c0_i32_0 = arith.constant 0 : i32
    %c0_i32_1 = arith.constant 0 : i32
    return %c0_i32, %c0_i32_0 : i32, i32
  }
  func.func @transform_19(%arg0: i32) -> (i32, i32) {
    %c0_i32 = arith.constant 0 : i32
    %c0_i32_0 = arith.constant 0 : i32
    %c0_i32_1 = arith.constant 0 : i32
    return %c0_i32, %c0_i32_0 : i32, i32
  }
  func.func @transform_20(%arg0: i32) -> (i32, i32) {
    %c0_i32 = arith.constant 0 : i32
    %c0_i32_0 = arith.constant 0 : i32
    %c0_i32_1 = arith.constant 0 : i32
    return %c0_i32, %c0_i32_0 : i32, i32
  }
  func.func @transform_21(%arg0: i32) -> (i32, i32) {
    %c0_i32 = arith.constant 0 : i32
    %c0_i32_0 = arith.constant 0 : i32
    %c0_i32_1 = arith.constant 0 : i32
    return %c0_i32, %c0_i32_0 : i32, i32
  }
  func.func @transform_22(%arg0: i32) -> (i32, i32) {
    %c0_i32 = arith.constant 0 : i32
    %c0_i32_0 = arith.constant 0 : i32
    %c0_i32_1 = arith.constant 0 : i32
    return %c0_i32, %c0_i32_0 : i32, i32
  }
  func.func @transform_23(%arg0: i32) -> (i32, i32) {
    %c0_i32 = arith.constant 0 : i32
    %c0_i32_0 = arith.constant 0 : i32
    %c0_i32_1 = arith.constant 0 : i32
    return %c0_i32, %c0_i32_0 : i32, i32
  }
  func.func @transform_24(%arg0: i32) -> (i32, i32) {
    %c0_i32 = arith.constant 0 : i32
    %c0_i32_0 = arith.constant 0 : i32
    return %arg0, %c0_i32 : i32, i32
  }
}

</mosaic_0001>

<llo_original>
// kernel: transformer_regression_forward.1
$region0: #{transformer_regression_forward.1}
  #allocation0 [shape = 'u32[]', space=smem, size = 0x4, offset = 0x4, fixed_abs, tag = 'smem constant byte address 0x4 - core index']
  #allocation1 [shape = 'u32[144,128]{1,0:T(1,128)}', space=vmem, size = 0x12000, scoped, tag = 'internal scratch']
  %s0 = inlined_call_operand.vmem [shape: bf16[16,4], index: 0, kind: input, shape index: {}]
  %s1 = inlined_call_operand.vmem [shape: f32[8,32], index: 1, kind: input, shape index: {}]
  %s2 = inlined_call_operand.vmem [shape: bf16[4,32], index: 2, kind: input, shape index: {}]
  %s3 = inlined_call_operand.vmem [shape: f32[1,32], index: 3, kind: input, shape index: {}]
  %s4 = inlined_call_operand.vmem [shape: bf16[2,32,96], index: 4, kind: input, shape index: {}]
  %s5 = inlined_call_operand.vmem [shape: f32[2,1,96], index: 5, kind: input, shape index: {}]
  %s6 = inlined_call_operand.vmem [shape: bf16[2,32,32], index: 6, kind: input, shape index: {}]
  %s7 = inlined_call_operand.vmem [shape: f32[2,1,32], index: 7, kind: input, shape index: {}]
  %s8 = inlined_call_operand.vmem [shape: bf16[2,32,64], index: 8, kind: input, shape index: {}]
  %s9 = inlined_call_operand.vmem [shape: f32[2,1,64], index: 9, kind: input, shape index: {}]
  %s10 = inlined_call_operand.vmem [shape: bf16[2,64,32], index: 10, kind: input, shape index: {}]
  %s11 = inlined_call_operand.vmem [shape: f32[2,1,32], index: 11, kind: input, shape index: {}]
  %s12 = inlined_call_operand.vmem [shape: f32[2,1,32], index: 12, kind: input, shape index: {}]
  %s13 = inlined_call_operand.vmem [shape: f32[2,1,32], index: 13, kind: input, shape index: {}]
  %s14 = inlined_call_operand.vmem [shape: f32[2,1,32], index: 14, kind: input, shape index: {}]
  %s15 = inlined_call_operand.vmem [shape: f32[2,1,32], index: 15, kind: input, shape index: {}]
  %s16 = inlined_call_operand.vmem [shape: f32[1,32], index: 16, kind: input, shape index: {}]
  %s17 = inlined_call_operand.vmem [shape: f32[1,32], index: 17, kind: input, shape index: {}]
  %s18 = inlined_call_operand.vmem [shape: bf16[32,256], index: 18, kind: input, shape index: {}]
  %s19 = inlined_call_operand.vmem [shape: f32[1,256], index: 19, kind: input, shape index: {}]
  %s20 = inlined_call_operand.vmem [shape: f32[1,256], index: 20, kind: input, shape index: {}]
  %s21 = inlined_call_operand.vmem [shape: f32[1,256], index: 21, kind: input, shape index: {}]
  %s22 = inlined_call_operand.vmem [shape: bf16[256,8], index: 22, kind: input, shape index: {}]
  %s23 = inlined_call_operand.vmem [shape: f32[1,8], index: 23, kind: input, shape index: {}]
  %s24 = inlined_call_operand.hbm [shape: f32[2,8], index: 24, kind: output, shape index: {}]
  %s25 = sld [smem:[#allocation0]]
  $region106: #{transformer_regression_forward.1} parent=0
    _
  %s27 = ssub.s32 1, %s25
  %s28 = scalar_select 0, %s27, %s25
  $region1: #{transformer_regression_forward.1} parent=0
    #allocation2 [shape = 'u8[1024]{0}', space=vmem, size = 0x400, scoped, tag = 'output window, operand 0, single buffered']
    #allocation3 [shape = 's32[1]{0}', space=sflag, size = 0x4, scoped, tag = 'scoped memory for transformer_regression_forward.1']
    %29 = vsyncpa [#allocation3], 0
    // Predicated region
    $region2: #{transformer_regression_forward.1} parent=1 // pred_check
      _
    $region3: #{transformer_regression_forward.1} parent=1 // pred_check_branch
      %31 = sbr.rel (0) target = $region5
    $region4: #{transformer_regression_forward.1} parent=1 // pred_region
      _
    $region5: #{transformer_regression_forward.1} parent=1 // pred_fallthru
      _
    // Predicated region
    $region6: #{transformer_regression_forward.1} parent=1 // pred_check
      _
    $region7: #{transformer_regression_forward.1} parent=1 // pred_check_branch
      %33 = sbr.rel (0) target = $region9
    $region8: #{transformer_regression_forward.1} parent=1 // pred_region
      _
    $region9: #{transformer_regression_forward.1} parent=1 // pred_fallthru
      _
    // Predicated region
    $region10: #{transformer_regression_forward.1} parent=1 // pred_check
      _
    $region11: #{transformer_regression_forward.1} parent=1 // pred_check_branch
      %35 = sbr.rel (0) target = $region13
    $region12: #{transformer_regression_forward.1} parent=1 // pred_region
      _
    $region13: #{transformer_regression_forward.1} parent=1 // pred_fallthru
      _
    // Predicated region
    $region14: #{transformer_regression_forward.1} parent=1 // pred_check
      _
    $region15: #{transformer_regression_forward.1} parent=1 // pred_check_branch
      %37 = sbr.rel (0) target = $region17
    $region16: #{transformer_regression_forward.1} parent=1 // pred_region
      _
    $region17: #{transformer_regression_forward.1} parent=1 // pred_fallthru
      _
    // Predicated region
    $region18: #{transformer_regression_forward.1} parent=1 // pred_check
      _
    $region19: #{transformer_regression_forward.1} parent=1 // pred_check_branch
      %39 = sbr.rel (0) target = $region21
    $region20: #{transformer_regression_forward.1} parent=1 // pred_region
      _
    $region21: #{transformer_regression_forward.1} parent=1 // pred_fallthru
      _
    // Predicated region
    $region22: #{transformer_regression_forward.1} parent=1 // pred_check
      _
    $region23: #{transformer_regression_forward.1} parent=1 // pred_check_branch
      %41 = sbr.rel (0) target = $region25
    $region24: #{transformer_regression_forward.1} parent=1 // pred_region
      _
    $region25: #{transformer_regression_forward.1} parent=1 // pred_fallthru
      _
    // Predicated region
    $region26: #{transformer_regression_forward.1} parent=1 // pred_check
      _
    $region27: #{transformer_regression_forward.1} parent=1 // pred_check_branch
      %43 = sbr.rel (0) target = $region29
    $region28: #{transformer_regression_forward.1} parent=1 // pred_region
      _
    $region29: #{transformer_regression_forward.1} parent=1 // pred_fallthru
      _
    // Predicated region
    $region30: #{transformer_regression_forward.1} parent=1 // pred_check
      _
    $region31: #{transformer_regression_forward.1} parent=1 // pred_check_branch
      %45 = sbr.rel (0) target = $region33
    $region32: #{transformer_regression_forward.1} parent=1 // pred_region
      _
    $region33: #{transformer_regression_forward.1} parent=1 // pred_fallthru
      _
    // Predicated region
    $region34: #{transformer_regression_forward.1} parent=1 // pred_check
      _
    $region35: #{transformer_regression_forward.1} parent=1 // pred_check_branch
      %47 = sbr.rel (0) target = $region37
    $region36: #{transformer_regression_forward.1} parent=1 // pred_region
      _
    $region37: #{transformer_regression_forward.1} parent=1 // pred_fallthru
      _
    // Predicated region
    $region38: #{transformer_regression_forward.1} parent=1 // pred_check
      _
    $region39: #{transformer_regression_forward.1} parent=1 // pred_check_branch
      %49 = sbr.rel (0) target = $region41
    $region40: #{transformer_regression_forward.1} parent=1 // pred_region
      _
    $region41: #{transformer_regression_forward.1} parent=1 // pred_fallthru
      _
    // Predicated region
    $region42: #{transformer_regression_forward.1} parent=1 // pred_check
      _
    $region43: #{transformer_regression_forward.1} parent=1 // pred_check_branch
      %51 = sbr.rel (0) target = $region45
    $region44: #{transformer_regression_forward.1} parent=1 // pred_region
      _
    $region45: #{transformer_regression_forward.1} parent=1 // pred_fallthru
      _
    // Predicated region
    $region46: #{transformer_regression_forward.1} parent=1 // pred_check
      _
    $region47: #{transformer_regression_forward.1} parent=1 // pred_check_branch
      %53 = sbr.rel (0) target = $region49
    $region48: #{transformer_regression_forward.1} parent=1 // pred_region
      _
    $region49: #{transformer_regression_forward.1} parent=1 // pred_fallthru
      _
    // Predicated region
    $region50: #{transformer_regression_forward.1} parent=1 // pred_check
      _
    $region51: #{transformer_regression_forward.1} parent=1 // pred_check_branch
      %55 = sbr.rel (0) target = $region53
    $region52: #{transformer_regression_forward.1} parent=1 // pred_region
      _
    $region53: #{transformer_regression_forward.1} parent=1 // pred_fallthru
      _
    // Predicated region
    $region54: #{transformer_regression_forward.1} parent=1 // pred_check
      _
    $region55: #{transformer_regression_forward.1} parent=1 // pred_check_branch
      %57 = sbr.rel (0) target = $region57
    $region56: #{transformer_regression_forward.1} parent=1 // pred_region
      _
    $region57: #{transformer_regression_forward.1} parent=1 // pred_fallthru
      _
    // Predicated region
    $region58: #{transformer_regression_forward.1} parent=1 // pred_check
      _
    $region59: #{transformer_regression_forward.1} parent=1 // pred_check_branch
      %59 = sbr.rel (0) target = $region61
    $region60: #{transformer_regression_forward.1} parent=1 // pred_region
      _
    $region61: #{transformer_regression_forward.1} parent=1 // pred_fallthru
      _
    // Predicated region
    $region62: #{transformer_regression_forward.1} parent=1 // pred_check
      _
    $region63: #{transformer_regression_forward.1} parent=1 // pred_check_branch
      %61 = sbr.rel (0) target = $region65
    $region64: #{transformer_regression_forward.1} parent=1 // pred_region
      _
    $region65: #{transformer_regression_forward.1} parent=1 // pred_fallthru
      _
    // Predicated region
    $region66: #{transformer_regression_forward.1} parent=1 // pred_check
      _
    $region67: #{transformer_regression_forward.1} parent=1 // pred_check_branch
      %63 = sbr.rel (0) target = $region69
    $region68: #{transformer_regression_forward.1} parent=1 // pred_region
      _
    $region69: #{transformer_regression_forward.1} parent=1 // pred_fallthru
      _
    // Predicated region
    $region70: #{transformer_regression_forward.1} parent=1 // pred_check
      _
    $region71: #{transformer_regression_forward.1} parent=1 // pred_check_branch
      %65 = sbr.rel (0) target = $region73
    $region72: #{transformer_regression_forward.1} parent=1 // pred_region
      _
    $region73: #{transformer_regression_forward.1} parent=1 // pred_fallthru
      _
    // Predicated region
    $region74: #{transformer_regression_forward.1} parent=1 // pred_check
      _
    $region75: #{transformer_regression_forward.1} parent=1 // pred_check_branch
      %67 = sbr.rel (0) target = $region77
    $region76: #{transformer_regression_forward.1} parent=1 // pred_region
      _
    $region77: #{transformer_regression_forward.1} parent=1 // pred_fallthru
      _
    // Predicated region
    $region78: #{transformer_regression_forward.1} parent=1 // pred_check
      _
    $region79: #{transformer_regression_forward.1} parent=1 // pred_check_branch
      %69 = sbr.rel (0) target = $region81
    $region80: #{transformer_regression_forward.1} parent=1 // pred_region
      _
    $region81: #{transformer_regression_forward.1} parent=1 // pred_fallthru
      _
    // Predicated region
    $region82: #{transformer_regression_forward.1} parent=1 // pred_check
      _
    $region83: #{transformer_regression_forward.1} parent=1 // pred_check_branch
      %71 = sbr.rel (0) target = $region85
    $region84: #{transformer_regression_forward.1} parent=1 // pred_region
      _
    $region85: #{transformer_regression_forward.1} parent=1 // pred_fallthru
      _
    // Predicated region
    $region86: #{transformer_regression_forward.1} parent=1 // pred_check
      _
    $region87: #{transformer_regression_forward.1} parent=1 // pred_check_branch
      %73 = sbr.rel (0) target = $region89
    $region88: #{transformer_regression_forward.1} parent=1 // pred_region
      _
    $region89: #{transformer_regression_forward.1} parent=1 // pred_fallthru
      _
    // Predicated region
    $region90: #{transformer_regression_forward.1} parent=1 // pred_check
      _
    $region91: #{transformer_regression_forward.1} parent=1 // pred_check_branch
      %75 = sbr.rel (0) target = $region93
    $region92: #{transformer_regression_forward.1} parent=1 // pred_region
      _
    $region93: #{transformer_regression_forward.1} parent=1 // pred_fallthru
      _
    // Predicated region
    $region94: #{transformer_regression_forward.1} parent=1 // pred_check
      _
    $region95: #{transformer_regression_forward.1} parent=1 // pred_check_branch
      %77 = sbr.rel (0) target = $region97
    $region96: #{transformer_regression_forward.1} parent=1 // pred_region
      _
    $region97: #{transformer_regression_forward.1} parent=1 // pred_fallthru
      _
    %v79 = vld [vmem:[%s0] sm:$0xf]
    %v80 = vld [vmem:[%s0 + $0x4] sm:$0xf]
    %v81 = vld [vmem:[%s2] sm:$0x3]
    %v82 = vld [vmem:[%s3] sm:$0x1]
    %v84 = vlaneseq
    %v85 = vshrl.u32 %v84, 7
    %v86 = vsub.s32 0, %v85
    %v87 = vrot.slane %v82, %v86
    %v91 = vunpack.c.l.b16 %v79
    %v92 = vunpack.c.l.b16 %v80
    %v93 = vpack.c.b16 %v92, %v91
    %vm94 = vcmask 31744
    %v96 = vsel %vm94, %v93, 0
    %vm98 = vcmask 1041408
    %v100 = vsel %vm98, %v81, 0
    %102 = vmatprep.subr.bf16.mxu0 0
    %103 = vmatpush1.bf16.msra.mxu0 %v100
    %104 = vmatprep.subr.bf16.mxu0 0
    %105 = vmatpush1.bf16.msra.mxu0 0
    %106 = vmatprep.subr.bf16.mxu0 0
    %107 = vmatpush1.bf16.msra.mxu0 0
    %108 = vmatprep.subr.bf16.mxu0 0
    %109 = vmatpush1.bf16.msra.mxu0 0
    %110 = vmatprep.subr.bf16.mxu0 0
    %111 = vmatpush1.bf16.msra.mxu0 0
    %112 = vmatprep.subr.bf16.mxu0 0
    %113 = vmatpush1.bf16.msra.mxu0 0
    %114 = vmatprep.subr.bf16.mxu0 0
    %115 = vmatpush1.bf16.msra.mxu0 0
    %116 = vmatprep.subr.bf16.mxu0 0
    %117 = vmatpush1.bf16.msra.mxu0 0
    %118 = vmatprep.subr.bf16.mxu0 0
    %119 = vmatpush1.bf16.msra.mxu0 0
    %120 = vmatprep.subr.bf16.mxu0 0
    %121 = vmatpush1.bf16.msra.mxu0 0
    %122 = vmatprep.subr.bf16.mxu0 0
    %123 = vmatpush1.bf16.msra.mxu0 0
    %124 = vmatprep.subr.bf16.mxu0 0
    %125 = vmatpush1.bf16.msra.mxu0 0
    %126 = vmatprep.subr.bf16.mxu0 0
    %127 = vmatpush1.bf16.msra.mxu0 0
    %128 = vmatprep.subr.bf16.mxu0 0
    %129 = vmatpush1.bf16.msra.mxu0 0
    %130 = vmatprep.subr.bf16.mxu0 0
    %131 = vmatpush1.bf16.msra.mxu0 0
    %132 = vmatprep.subr.bf16.mxu0 0
    %133 = vmatpush1.bf16.msra.mxu0 0
    %134 = vmatprep.mubr.bf16.mxu0 0
    %135 = vmatmul.mubr.bf16.gmra.mrb[0].mxu0 %v96
    %v136 = vpop.f32.mrb[0].mxu0
    %v137 = vadd.f32 %v87, %v136
    %v138 = vpop.f32.mrb[0].mxu0
    %v139 = vpop.f32.mrb[0].mxu0
    %v140 = vadd.f32 %v87, %v139
    %v141 = vpop.f32.mrb[0].mxu0
    %142 = vdwg.mxu0
    %v143 = vld [vmem:[%s1] sm:$0xff]
    %v144 = vadd.f32 %v137, %v143
    %v145 = vadd.f32 %v140, %v143
    %v146 = vpack.c.bf16 %v145, %v144
    %v147 = vld [vmem:[%s4] sm:$0xf]
    %v148 = vld [vmem:[%s4 + $0x4] sm:$0xf]
    %v149 = vld [vmem:[%s4 + $0x8] sm:$0xf]
    %v150 = vld [vmem:[%s4 + $0xc] sm:$0xf]
    %v151 = vld [vmem:[%s5] sm:$0x1]
    %v153 = vlaneseq
    %v154 = vshrl.u32 %v153, 7
    %v155 = vsub.s32 0, %v154
    %v156 = vrot.slane %v151, %v155
    %v162 = vunpack.c.l.b16 %v147
    %v163 = vunpack.c.l.b16 %v148
    %v164 = vunpack.c.l.b16 %v149
    %v165 = vunpack.c.l.b16 %v150
    %v166 = vpack.c.b16 %v163, %v162
    %v167 = vpack.c.b16 %v165, %v164
    %vm170 = vcmask 261120
    %v172 = vsel %vm170, %v146, 0
    %174 = vmatprep.subr.bf16.mxu0 0
    %175 = vmatpush1.bf16.msra.mxu0 %v166
    %176 = vmatprep.subr.bf16.mxu0 0
    %177 = vmatpush1.bf16.msra.mxu0 %v167
    %178 = vmatprep.subr.bf16.mxu0 0
    %179 = vmatpush1.bf16.msra.mxu0 0
    %180 = vmatprep.subr.bf16.mxu0 0
    %181 = vmatpush1.bf16.msra.mxu0 0
    %182 = vmatprep.subr.bf16.mxu0 0
    %183 = vmatpush1.bf16.msra.mxu0 0
    %184 = vmatprep.subr.bf16.mxu0 0
    %185 = vmatpush1.bf16.msra.mxu0 0
    %186 = vmatprep.subr.bf16.mxu0 0
    %187 = vmatpush1.bf16.msra.mxu0 0
    %188 = vmatprep.subr.bf16.mxu0 0
    %189 = vmatpush1.bf16.msra.mxu0 0
    %190 = vmatprep.subr.bf16.mxu0 0
    %191 = vmatpush1.bf16.msra.mxu0 0
    %192 = vmatprep.subr.bf16.mxu0 0
    %193 = vmatpush1.bf16.msra.mxu0 0
    %194 = vmatprep.subr.bf16.mxu0 0
    %195 = vmatpush1.bf16.msra.mxu0 0
    %196 = vmatprep.subr.bf16.mxu0 0
    %197 = vmatpush1.bf16.msra.mxu0 0
    %198 = vmatprep.subr.bf16.mxu0 0
    %199 = vmatpush1.bf16.msra.mxu0 0
    %200 = vmatprep.subr.bf16.mxu0 0
    %201 = vmatpush1.bf16.msra.mxu0 0
    %202 = vmatprep.subr.bf16.mxu0 0
    %203 = vmatpush1.bf16.msra.mxu0 0
    %204 = vmatprep.subr.bf16.mxu0 0
    %205 = vmatpush1.bf16.msra.mxu0 0
    %206 = vmatprep.mubr.bf16.mxu0 0
    %207 = vmatmul.mubr.bf16.gmra.mrb[0].mxu0 %v172
    %v208 = vpop.f32.mrb[0].mxu0
    %v209 = vadd.f32 %v156, %v208
    %v210 = vpop.f32.mrb[0].mxu0
    %v211 = vpop.f32.mrb[0].mxu0
    %v212 = vadd.f32 %v156, %v211
    %v213 = vpop.f32.mrb[0].mxu0
    %214 = vdwg.mxu0
    %217 = vrot.lane.b32.xlu0 %v209, 120
    %v218 = vpop.permute.xlu0 %217
    %219 = vrot.lane.b32.xlu0 %v212, 120
    %v220 = vpop.permute.xlu0 %219
    %223 = vrot.lane.b32.xlu0 %v209, 112
    %v224 = vpop.permute.xlu0 %223
    %225 = vrot.lane.b32.xlu0 %v212, 112
    %v226 = vpop.permute.xlu0 %225
    %229 = vrot.lane.b32.xlu0 %v209, 104
    %v230 = vpop.permute.xlu0 %229
    %231 = vrot.lane.b32.xlu0 %v212, 104
    %v232 = vpop.permute.xlu0 %231
    %v235 = vpack.c.bf16 %v209, %v209
    %v236 = vpack.c.bf16 %v212, %v212
    %v237 = vpack.c.bf16 %v218, %v218
    %v238 = vpack.c.bf16 %v220, %v220
    %v239 = vpack.c.bf16 %v224, %v224
    %v240 = vpack.c.bf16 %v226, %v226
    %v241 = vpack.c.bf16 %v230, %v230
    %v242 = vpack.c.bf16 %v232, %v232
    %244 = vrot.lane.b32.xlu0 %v235, 96
    %v245 = vpop.permute.xlu0 %244
    %vm246 = vcmask 64512
    %v248 = vsel %vm246, %v235, 0
    %v251 = vsel %vm246, %v245, 0
    %253 = vmatprep.subr.bf16.mxu0 0
    %254 = vmatpush1.bf16.xpose.msra.mxu0 %v251
    %255 = vmatprep.subr.bf16.mxu0 0
    %256 = vmatpush1.bf16.xpose.msra.mxu0 0
    %257 = vmatprep.subr.bf16.mxu0 0
    %258 = vmatpush1.bf16.xpose.msra.mxu0 0
    %259 = vmatprep.subr.bf16.mxu0 0
    %260 = vmatpush1.bf16.xpose.msra.mxu0 0
    %261 = vmatprep.subr.bf16.mxu0 0
    %262 = vmatpush1.bf16.xpose.msra.mxu0 0
    %263 = vmatprep.subr.bf16.mxu0 0
    %264 = vmatpush1.bf16.xpose.msra.mxu0 0
    %265 = vmatprep.subr.bf16.mxu0 0
    %266 = vmatpush1.bf16.xpose.msra.mxu0 0
    %267 = vmatprep.subr.bf16.mxu0 0
    %268 = vmatpush1.bf16.xpose.msra.mxu0 0
    %269 = vmatprep.subr.bf16.mxu0 0
    %270 = vmatpush1.bf16.xpose.msra.mxu0 0
    %271 = vmatprep.subr.bf16.mxu0 0
    %272 = vmatpush1.bf16.xpose.msra.mxu0 0
    %273 = vmatprep.subr.bf16.mxu0 0
    %274 = vmatpush1.bf16.xpose.msra.mxu0 0
    %275 = vmatprep.subr.bf16.mxu0 0
    %276 = vmatpush1.bf16.xpose.msra.mxu0 0
    %277 = vmatprep.subr.bf16.mxu0 0
    %278 = vmatpush1.bf16.xpose.msra.mxu0 0
    %279 = vmatprep.subr.bf16.mxu0 0
    %280 = vmatpush1.bf16.xpose.msra.mxu0 0
    %281 = vmatprep.subr.bf16.mxu0 0
    %282 = vmatpush1.bf16.xpose.msra.mxu0 0
    %283 = vmatprep.subr.bf16.mxu0 0
    %284 = vmatpush1.bf16.xpose.msra.mxu0 0
    %285 = vmatprep.mubr.bf16.mxu0 0
    %286 = vmatmul.mubr.bf16.gmra.mrb[0].mxu0 %v248
    %v287 = vpop.f32.mrb[0].mxu0
    %v288 = vadd.f32 0.0, %v287
    %v289 = vpop.f32.mrb[0].mxu0
    %v290 = vpop.f32.mrb[0].mxu0
    %v291 = vpop.f32.mrb[0].mxu0
    %292 = vdwg.mxu0
    %294 = vrot.lane.b32.xlu0 %v236, 96
    %v295 = vpop.permute.xlu0 %294
    %v297 = vsel %vm246, %v236, 0
    %v300 = vsel %vm246, %v295, 0
    %302 = vmatprep.subr.bf16.mxu0 0
    %303 = vmatpush1.bf16.xpose.msra.mxu0 %v300
    %304 = vmatprep.subr.bf16.mxu0 0
    %305 = vmatpush1.bf16.xpose.msra.mxu0 0
    %306 = vmatprep.subr.bf16.mxu0 0
    %307 = vmatpush1.bf16.xpose.msra.mxu0 0
    %308 = vmatprep.subr.bf16.mxu0 0
    %309 = vmatpush1.bf16.xpose.msra.mxu0 0
    %310 = vmatprep.subr.bf16.mxu0 0
    %311 = vmatpush1.bf16.xpose.msra.mxu0 0
    %312 = vmatprep.subr.bf16.mxu0 0
    %313 = vmatpush1.bf16.xpose.msra.mxu0 0
    %314 = vmatprep.subr.bf16.mxu0 0
    %315 = vmatpush1.bf16.xpose.msra.mxu0 0
    %316 = vmatprep.subr.bf16.mxu0 0
    %317 = vmatpush1.bf16.xpose.msra.mxu0 0
    %318 = vmatprep.subr.bf16.mxu0 0
    %319 = vmatpush1.bf16.xpose.msra.mxu0 0
    %320 = vmatprep.subr.bf16.mxu0 0
    %321 = vmatpush1.bf16.xpose.msra.mxu0 0
    %322 = vmatprep.subr.bf16.mxu0 0
    %323 = vmatpush1.bf16.xpose.msra.mxu0 0
    %324 = vmatprep.subr.bf16.mxu0 0
    %325 = vmatpush1.bf16.xpose.msra.mxu0 0
    %326 = vmatprep.subr.bf16.mxu0 0
    %327 = vmatpush1.bf16.xpose.msra.mxu0 0
    %328 = vmatprep.subr.bf16.mxu0 0
    %329 = vmatpush1.bf16.xpose.msra.mxu0 0
    %330 = vmatprep.subr.bf16.mxu0 0
    %331 = vmatpush1.bf16.xpose.msra.mxu0 0
    %332 = vmatprep.subr.bf16.mxu0 0
    %333 = vmatpush1.bf16.xpose.msra.mxu0 0
    %334 = vmatprep.mubr.bf16.mxu0 0
    %335 = vmatmul.mubr.bf16.gmra.mrb[0].mxu0 %v297
    %v336 = vpop.f32.mrb[0].mxu0
    %v337 = vadd.f32 0.0, %v336
    %v338 = vpop.f32.mrb[0].mxu0
    %v339 = vpop.f32.mrb[0].mxu0
    %v340 = vpop.f32.mrb[0].mxu0
    %341 = vdwg.mxu0
    %343 = vrot.lane.b32.xlu0 %v237, 96
    %v344 = vpop.permute.xlu0 %343
    %v346 = vsel %vm246, %v237, 0
    %v349 = vsel %vm246, %v344, 0
    %351 = vmatprep.subr.bf16.mxu0 0
    %352 = vmatpush1.bf16.xpose.msra.mxu0 %v349
    %353 = vmatprep.subr.bf16.mxu0 0
    %354 = vmatpush1.bf16.xpose.msra.mxu0 0
    %355 = vmatprep.subr.bf16.mxu0 0
    %356 = vmatpush1.bf16.xpose.msra.mxu0 0
    %357 = vmatprep.subr.bf16.mxu0 0
    %358 = vmatpush1.bf16.xpose.msra.mxu0 0
    %359 = vmatprep.subr.bf16.mxu0 0
    %360 = vmatpush1.bf16.xpose.msra.mxu0 0
    %361 = vmatprep.subr.bf16.mxu0 0
    %362 = vmatpush1.bf16.xpose.msra.mxu0 0
    %363 = vmatprep.subr.bf16.mxu0 0
    %364 = vmatpush1.bf16.xpose.msra.mxu0 0
    %365 = vmatprep.subr.bf16.mxu0 0
    %366 = vmatpush1.bf16.xpose.msra.mxu0 0
    %367 = vmatprep.subr.bf16.mxu0 0
    %368 = vmatpush1.bf16.xpose.msra.mxu0 0
    %369 = vmatprep.subr.bf16.mxu0 0
    %370 = vmatpush1.bf16.xpose.msra.mxu0 0
    %371 = vmatprep.subr.bf16.mxu0 0
    %372 = vmatpush1.bf16.xpose.msra.mxu0 0
    %373 = vmatprep.subr.bf16.mxu0 0
    %374 = vmatpush1.bf16.xpose.msra.mxu0 0
    %375 = vmatprep.subr.bf16.mxu0 0
    %376 = vmatpush1.bf16.xpose.msra.mxu0 0
    %377 = vmatprep.subr.bf16.mxu0 0
    %378 = vmatpush1.bf16.xpose.msra.mxu0 0
    %379 = vmatprep.subr.bf16.mxu0 0
    %380 = vmatpush1.bf16.xpose.msra.mxu0 0
    %381 = vmatprep.subr.bf16.mxu0 0
    %382 = vmatpush1.bf16.xpose.msra.mxu0 0
    %383 = vmatprep.mubr.bf16.mxu0 0
    %384 = vmatmul.mubr.bf16.gmra.mrb[0].mxu0 %v346
    %v385 = vpop.f32.mrb[0].mxu0
    %v386 = vadd.f32 0.0, %v385
    %v387 = vpop.f32.mrb[0].mxu0
    %v388 = vpop.f32.mrb[0].mxu0
    %v389 = vpop.f32.mrb[0].mxu0
    %390 = vdwg.mxu0
    %392 = vrot.lane.b32.xlu0 %v238, 96
    %v393 = vpop.permute.xlu0 %392
    %v395 = vsel %vm246, %v238, 0
    %v398 = vsel %vm246, %v393, 0
    %400 = vmatprep.subr.bf16.mxu0 0
    %401 = vmatpush1.bf16.xpose.msra.mxu0 %v398
    %402 = vmatprep.subr.bf16.mxu0 0
    %403 = vmatpush1.bf16.xpose.msra.mxu0 0
    %404 = vmatprep.subr.bf16.mxu0 0
    %405 = vmatpush1.bf16.xpose.msra.mxu0 0
    %406 = vmatprep.subr.bf16.mxu0 0
    %407 = vmatpush1.bf16.xpose.msra.mxu0 0
    %408 = vmatprep.subr.bf16.mxu0 0
    %409 = vmatpush1.bf16.xpose.msra.mxu0 0
    %410 = vmatprep.subr.bf16.mxu0 0
    %411 = vmatpush1.bf16.xpose.msra.mxu0 0
    %412 = vmatprep.subr.bf16.mxu0 0
    %413 = vmatpush1.bf16.xpose.msra.mxu0 0
    %414 = vmatprep.subr.bf16.mxu0 0
    %415 = vmatpush1.bf16.xpose.msra.mxu0 0
    %416 = vmatprep.subr.bf16.mxu0 0
    %417 = vmatpush1.bf16.xpose.msra.mxu0 0
    %418 = vmatprep.subr.bf16.mxu0 0
    %419 = vmatpush1.bf16.xpose.msra.mxu0 0
    %420 = vmatprep.subr.bf16.mxu0 0
    %421 = vmatpush1.bf16.xpose.msra.mxu0 0
    %422 = vmatprep.subr.bf16.mxu0 0
    %423 = vmatpush1.bf16.xpose.msra.mxu0 0
    %424 = vmatprep.subr.bf16.mxu0 0
    %425 = vmatpush1.bf16.xpose.msra.mxu0 0
    %426 = vmatprep.subr.bf16.mxu0 0
    %427 = vmatpush1.bf16.xpose.msra.mxu0 0
    %428 = vmatprep.subr.bf16.mxu0 0
    %429 = vmatpush1.bf16.xpose.msra.mxu0 0
    %430 = vmatprep.subr.bf16.mxu0 0
    %431 = vmatpush1.bf16.xpose.msra.mxu0 0
    %432 = vmatprep.mubr.bf16.mxu0 0
    %433 = vmatmul.mubr.bf16.gmra.mrb[0].mxu0 %v395
    %v434 = vpop.f32.mrb[0].mxu0
    %v435 = vadd.f32 0.0, %v434
    %v436 = vpop.f32.mrb[0].mxu0
    %v437 = vpop.f32.mrb[0].mxu0
    %v438 = vpop.f32.mrb[0].mxu0
    %439 = vdwg.mxu0
    %441 = vrot.lane.b32.xlu0 %v239, 96
    %v442 = vpop.permute.xlu0 %441
    %v444 = vsel %vm246, %v239, 0
    %v447 = vsel %vm246, %v442, 0
    %449 = vmatprep.subr.bf16.mxu0 0
    %450 = vmatpush1.bf16.xpose.msra.mxu0 %v447
    %451 = vmatprep.subr.bf16.mxu0 0
    %452 = vmatpush1.bf16.xpose.msra.mxu0 0
    %453 = vmatprep.subr.bf16.mxu0 0
    %454 = vmatpush1.bf16.xpose.msra.mxu0 0
    %455 = vmatprep.subr.bf16.mxu0 0
    %456 = vmatpush1.bf16.xpose.msra.mxu0 0
    %457 = vmatprep.subr.bf16.mxu0 0
    %458 = vmatpush1.bf16.xpose.msra.mxu0 0
    %459 = vmatprep.subr.bf16.mxu0 0
    %460 = vmatpush1.bf16.xpose.msra.mxu0 0
    %461 = vmatprep.subr.bf16.mxu0 0
    %462 = vmatpush1.bf16.xpose.msra.mxu0 0
    %463 = vmatprep.subr.bf16.mxu0 0
    %464 = vmatpush1.bf16.xpose.msra.mxu0 0
    %465 = vmatprep.subr.bf16.mxu0 0
    %466 = vmatpush1.bf16.xpose.msra.mxu0 0
    %467 = vmatprep.subr.bf16.mxu0 0
    %468 = vmatpush1.bf16.xpose.msra.mxu0 0
    %469 = vmatprep.subr.bf16.mxu0 0
    %470 = vmatpush1.bf16.xpose.msra.mxu0 0
    %471 = vmatprep.subr.bf16.mxu0 0
    %472 = vmatpush1.bf16.xpose.msra.mxu0 0
    %473 = vmatprep.subr.bf16.mxu0 0
    %474 = vmatpush1.bf16.xpose.msra.mxu0 0
    %475 = vmatprep.subr.bf16.mxu0 0
    %476 = vmatpush1.bf16.xpose.msra.mxu0 0
    %477 = vmatprep.subr.bf16.mxu0 0
    %478 = vmatpush1.bf16.xpose.msra.mxu0 0
    %479 = vmatprep.subr.bf16.mxu0 0
    %480 = vmatpush1.bf16.xpose.msra.mxu0 0
    %481 = vmatprep.mubr.bf16.mxu0 0
    %482 = vmatmul.mubr.bf16.gmra.mrb[0].mxu0 %v444
    %v483 = vpop.f32.mrb[0].mxu0
    %v484 = vadd.f32 0.0, %v483
    %v485 = vpop.f32.mrb[0].mxu0
    %v486 = vpop.f32.mrb[0].mxu0
    %v487 = vpop.f32.mrb[0].mxu0
    %488 = vdwg.mxu0
    %490 = vrot.lane.b32.xlu0 %v240, 96
    %v491 = vpop.permute.xlu0 %490
    %v493 = vsel %vm246, %v240, 0
    %v496 = vsel %vm246, %v491, 0
    %498 = vmatprep.subr.bf16.mxu0 0
    %499 = vmatpush1.bf16.xpose.msra.mxu0 %v496
    %500 = vmatprep.subr.bf16.mxu0 0
    %501 = vmatpush1.bf16.xpose.msra.mxu0 0
    %502 = vmatprep.subr.bf16.mxu0 0
    %503 = vmatpush1.bf16.xpose.msra.mxu0 0
    %504 = vmatprep.subr.bf16.mxu0 0
    %505 = vmatpush1.bf16.xpose.msra.mxu0 0
    %506 = vmatprep.subr.bf16.mxu0 0
    %507 = vmatpush1.bf16.xpose.msra.mxu0 0
    %508 = vmatprep.subr.bf16.mxu0 0
    %509 = vmatpush1.bf16.xpose.msra.mxu0 0
    %510 = vmatprep.subr.bf16.mxu0 0
    %511 = vmatpush1.bf16.xpose.msra.mxu0 0
    %512 = vmatprep.subr.bf16.mxu0 0
    %513 = vmatpush1.bf16.xpose.msra.mxu0 0
    %514 = vmatprep.subr.bf16.mxu0 0
    %515 = vmatpush1.bf16.xpose.msra.mxu0 0
    %516 = vmatprep.subr.bf16.mxu0 0
    %517 = vmatpush1.bf16.xpose.msra.mxu0 0
    %518 = vmatprep.subr.bf16.mxu0 0
    %519 = vmatpush1.bf16.xpose.msra.mxu0 0
    %520 = vmatprep.subr.bf16.mxu0 0
    %521 = vmatpush1.bf16.xpose.msra.mxu0 0
    %522 = vmatprep.subr.bf16.mxu0 0
    %523 = vmatpush1.bf16.xpose.msra.mxu0 0
    %524 = vmatprep.subr.bf16.mxu0 0
    %525 = vmatpush1.bf16.xpose.msra.mxu0 0
    %526 = vmatprep.subr.bf16.mxu0 0
    %527 = vmatpush1.bf16.xpose.msra.mxu0 0
    %528 = vmatprep.subr.bf16.mxu0 0
    %529 = vmatpush1.bf16.xpose.msra.mxu0 0
    %530 = vmatprep.mubr.bf16.mxu0 0
    %531 = vmatmul.mubr.bf16.gmra.mrb[0].mxu0 %v493
    %v532 = vpop.f32.mrb[0].mxu0
    %v533 = vadd.f32 0.0, %v532
    %v534 = vpop.f32.mrb[0].mxu0
    %v535 = vpop.f32.mrb[0].mxu0
    %v536 = vpop.f32.mrb[0].mxu0
    %537 = vdwg.mxu0
    %539 = vrot.lane.b32.xlu0 %v241, 96
    %v540 = vpop.permute.xlu0 %539
    %v542 = vsel %vm246, %v241, 0
    %v545 = vsel %vm246, %v540, 0
    %547 = vmatprep.subr.bf16.mxu0 0
    %548 = vmatpush1.bf16.xpose.msra.mxu0 %v545
    %549 = vmatprep.subr.bf16.mxu0 0
    %550 = vmatpush1.bf16.xpose.msra.mxu0 0
    %551 = vmatprep.subr.bf16.mxu0 0
    %552 = vmatpush1.bf16.xpose.msra.mxu0 0
    %553 = vmatprep.subr.bf16.mxu0 0
    %554 = vmatpush1.bf16.xpose.msra.mxu0 0
    %555 = vmatprep.subr.bf16.mxu0 0
    %556 = vmatpush1.bf16.xpose.msra.mxu0 0
    %557 = vmatprep.subr.bf16.mxu0 0
    %558 = vmatpush1.bf16.xpose.msra.mxu0 0
    %559 = vmatprep.subr.bf16.mxu0 0
    %560 = vmatpush1.bf16.xpose.msra.mxu0 0
    %561 = vmatprep.subr.bf16.mxu0 0
    %562 = vmatpush1.bf16.xpose.msra.mxu0 0
    %563 = vmatprep.subr.bf16.mxu0 0
    %564 = vmatpush1.bf16.xpose.msra.mxu0 0
    %565 = vmatprep.subr.bf16.mxu0 0
    %566 = vmatpush1.bf16.xpose.msra.mxu0 0
    %567 = vmatprep.subr.bf16.mxu0 0
    %568 = vmatpush1.bf16.xpose.msra.mxu0 0
    %569 = vmatprep.subr.bf16.mxu0 0
    %570 = vmatpush1.bf16.xpose.msra.mxu0 0
    %571 = vmatprep.subr.bf16.mxu0 0
    %572 = vmatpush1.bf16.xpose.msra.mxu0 0
    %573 = vmatprep.subr.bf16.mxu0 0
    %574 = vmatpush1.bf16.xpose.msra.mxu0 0
    %575 = vmatprep.subr.bf16.mxu0 0
    %576 = vmatpush1.bf16.xpose.msra.mxu0 0
    %577 = vmatprep.subr.bf16.mxu0 0
    %578 = vmatpush1.bf16.xpose.msra.mxu0 0
    %579 = vmatprep.mubr.bf16.mxu0 0
    %580 = vmatmul.mubr.bf16.gmra.mrb[0].mxu0 %v542
    %v581 = vpop.f32.mrb[0].mxu0
    %v582 = vadd.f32 0.0, %v581
    %v583 = vpop.f32.mrb[0].mxu0
    %v584 = vpop.f32.mrb[0].mxu0
    %v585 = vpop.f32.mrb[0].mxu0
    %586 = vdwg.mxu0
    %588 = vrot.lane.b32.xlu0 %v242, 96
    %v589 = vpop.permute.xlu0 %588
    %v591 = vsel %vm246, %v242, 0
    %v594 = vsel %vm246, %v589, 0
    %596 = vmatprep.subr.bf16.mxu0 0
    %597 = vmatpush1.bf16.xpose.msra.mxu0 %v594
    %598 = vmatprep.subr.bf16.mxu0 0
    %599 = vmatpush1.bf16.xpose.msra.mxu0 0
    %600 = vmatprep.subr.bf16.mxu0 0
    %601 = vmatpush1.bf16.xpose.msra.mxu0 0
    %602 = vmatprep.subr.bf16.mxu0 0
    %603 = vmatpush1.bf16.xpose.msra.mxu0 0
    %604 = vmatprep.subr.bf16.mxu0 0
    %605 = vmatpush1.bf16.xpose.msra.mxu0 0
    %606 = vmatprep.subr.bf16.mxu0 0
    %607 = vmatpush1.bf16.xpose.msra.mxu0 0
    %608 = vmatprep.subr.bf16.mxu0 0
    %609 = vmatpush1.bf16.xpose.msra.mxu0 0
    %610 = vmatprep.subr.bf16.mxu0 0
    %611 = vmatpush1.bf16.xpose.msra.mxu0 0
    %612 = vmatprep.subr.bf16.mxu0 0
    %613 = vmatpush1.bf16.xpose.msra.mxu0 0
    %614 = vmatprep.subr.bf16.mxu0 0
    %615 = vmatpush1.bf16.xpose.msra.mxu0 0
    %616 = vmatprep.subr.bf16.mxu0 0
    %617 = vmatpush1.bf16.xpose.msra.mxu0 0
    %618 = vmatprep.subr.bf16.mxu0 0
    %619 = vmatpush1.bf16.xpose.msra.mxu0 0
    %620 = vmatprep.subr.bf16.mxu0 0
    %621 = vmatpush1.bf16.xpose.msra.mxu0 0
    %622 = vmatprep.subr.bf16.mxu0 0
    %623 = vmatpush1.bf16.xpose.msra.mxu0 0
    %624 = vmatprep.subr.bf16.mxu0 0
    %625 = vmatpush1.bf16.xpose.msra.mxu0 0
    %626 = vmatprep.subr.bf16.mxu0 0
    %627 = vmatpush1.bf16.xpose.msra.mxu0 0
    %628 = vmatprep.mubr.bf16.mxu0 0
    %629 = vmatmul.mubr.bf16.gmra.mrb[0].mxu0 %v591
    %v630 = vpop.f32.mrb[0].mxu0
    %v631 = vadd.f32 0.0, %v630
    %v632 = vpop.f32.mrb[0].mxu0
    %v633 = vpop.f32.mrb[0].mxu0
    %v634 = vpop.f32.mrb[0].mxu0
    %635 = vdwg.mxu0
    %v636 = vsel %vm246, %v288, -inf
    %637 = vmax.xlane.f32.xlu0 %v636
    %v638 = vpop.xlane.xlu0 %637
    %v639 = vsel %vm246, %v337, -inf
    %640 = vmax.xlane.f32.xlu0 %v639
    %v641 = vpop.xlane.xlu0 %640
    %v642 = vsel %vm246, %v386, -inf
    %643 = vmax.xlane.f32.xlu0 %v642
    %v644 = vpop.xlane.xlu0 %643
    %v645 = vsel %vm246, %v435, -inf
    %646 = vmax.xlane.f32.xlu0 %v645
    %v647 = vpop.xlane.xlu0 %646
    %v648 = vsel %vm246, %v484, -inf
    %649 = vmax.xlane.f32.xlu0 %v648
    %v650 = vpop.xlane.xlu0 %649
    %v651 = vsel %vm246, %v533, -inf
    %652 = vmax.xlane.f32.xlu0 %v651
    %v653 = vpop.xlane.xlu0 %652
    %v654 = vsel %vm246, %v582, -inf
    %655 = vmax.xlane.f32.xlu0 %v654
    %v656 = vpop.xlane.xlu0 %655
    %v657 = vsel %vm246, %v631, -inf
    %658 = vmax.xlane.f32.xlu0 %v657
    %v659 = vpop.xlane.xlu0 %658
    %v660 = vsub.f32 %v288, %v638
    %v661 = vsub.f32 %v337, %v641
    %v662 = vsub.f32 %v386, %v644
    %v663 = vsub.f32 %v435, %v647
    %v664 = vsub.f32 %v484, %v650
    %v665 = vsub.f32 %v533, %v653
    %v666 = vsub.f32 %v582, %v656
    %v667 = vsub.f32 %v631, %v659
    %v668 = vmul.f32 %v660, 1.442695
    %v669 = vpow.pop %v668
    %v670 = vmul.f32 %v661, 1.442695
    %v671 = vpow.pop %v670
    %v672 = vmul.f32 %v662, 1.442695
    %v673 = vpow.pop %v672
    %v674 = vmul.f32 %v663, 1.442695
    %v675 = vpow.pop %v674
    %v676 = vmul.f32 %v664, 1.442695
    %v677 = vpow.pop %v676
    %v678 = vmul.f32 %v665, 1.442695
    %v679 = vpow.pop %v678
    %v680 = vmul.f32 %v666, 1.442695
    %v681 = vpow.pop %v680
    %v682 = vmul.f32 %v667, 1.442695
    %v683 = vpow.pop %v682
    %v684 = vsel %vm246, %v669, 0.0
    %685 = vadd.xlane.f32.xlu0 %v684
    %v686 = vpop.xlane.xlu0 %685
    %v687 = vsel %vm246, %v671, 0.0
    %688 = vadd.xlane.f32.xlu0 %v687
    %v689 = vpop.xlane.xlu0 %688
    %v690 = vsel %vm246, %v673, 0.0
    %691 = vadd.xlane.f32.xlu0 %v690
    %v692 = vpop.xlane.xlu0 %691
    %v693 = vsel %vm246, %v675, 0.0
    %694 = vadd.xlane.f32.xlu0 %v693
    %v695 = vpop.xlane.xlu0 %694
    %v696 = vsel %vm246, %v677, 0.0
    %697 = vadd.xlane.f32.xlu0 %v696
    %v698 = vpop.xlane.xlu0 %697
    %v699 = vsel %vm246, %v679, 0.0
    %700 = vadd.xlane.f32.xlu0 %v699
    %v701 = vpop.xlane.xlu0 %700
    %v702 = vsel %vm246, %v681, 0.0
    %703 = vadd.xlane.f32.xlu0 %v702
    %v704 = vpop.xlane.xlu0 %703
    %v705 = vsel %vm246, %v683, 0.0
    %706 = vadd.xlane.f32.xlu0 %v705
    %v707 = vpop.xlane.xlu0 %706
    %v708 = vrcp.pop %v686
    %v709 = vrcp.pop %v689
    %v710 = vrcp.pop %v692
    %v711 = vrcp.pop %v695
    %v712 = vrcp.pop %v698
    %v713 = vrcp.pop %v701
    %v714 = vrcp.pop %v704
    %v715 = vrcp.pop %v707
    %v716 = vmul.f32 %v669, %v708
    %v717 = vmul.f32 %v671, %v709
    %v718 = vmul.f32 %v673, %v710
    %v719 = vmul.f32 %v675, %v711
    %v720 = vmul.f32 %v677, %v712
    %v721 = vmul.f32 %v679, %v713
    %v722 = vmul.f32 %v681, %v714
    %v723 = vmul.f32 %v683, %v715
    %v724 = vpack.c.bf16 %v716, %v716
    %v725 = vpack.c.bf16 %v717, %v717
    %v726 = vpack.c.bf16 %v718, %v718
    %v727 = vpack.c.bf16 %v719, %v719
    %v728 = vpack.c.bf16 %v720, %v720
    %v729 = vpack.c.bf16 %v721, %v721
    %v730 = vpack.c.bf16 %v722, %v722
    %v731 = vpack.c.bf16 %v723, %v723
    %732 = vrot.lane.b32.xlu0 %v235, 64
    %v733 = vpop.permute.xlu0 %732
    %v735 = vsel %vm246, %v724, 0
    %vm737 = vcmask 1043456
    %v739 = vsel %vm737, %v733, 0
    %741 = vmatprep.subr.bf16.mxu0 0
    %742 = vmatpush1.bf16.msra.mxu0 %v739
    %743 = vmatprep.subr.bf16.mxu0 0
    %744 = vmatpush1.bf16.msra.mxu0 0
    %745 = vmatprep.subr.bf16.mxu0 0
    %746 = vmatpush1.bf16.msra.mxu0 0
    %747 = vmatprep.subr.bf16.mxu0 0
    %748 = vmatpush1.bf16.msra.mxu0 0
    %749 = vmatprep.subr.bf16.mxu0 0
    %750 = vmatpush1.bf16.msra.mxu0 0
    %751 = vmatprep.subr.bf16.mxu0 0
    %752 = vmatpush1.bf16.msra.mxu0 0
    %753 = vmatprep.subr.bf16.mxu0 0
    %754 = vmatpush1.bf16.msra.mxu0 0
    %755 = vmatprep.subr.bf16.mxu0 0
    %756 = vmatpush1.bf16.msra.mxu0 0
    %757 = vmatprep.subr.bf16.mxu0 0
    %758 = vmatpush1.bf16.msra.mxu0 0
    %759 = vmatprep.subr.bf16.mxu0 0
    %760 = vmatpush1.bf16.msra.mxu0 0
    %761 = vmatprep.subr.bf16.mxu0 0
    %762 = vmatpush1.bf16.msra.mxu0 0
    %763 = vmatprep.subr.bf16.mxu0 0
    %764 = vmatpush1.bf16.msra.mxu0 0
    %765 = vmatprep.subr.bf16.mxu0 0
    %766 = vmatpush1.bf16.msra.mxu0 0
    %767 = vmatprep.subr.bf16.mxu0 0
    %768 = vmatpush1.bf16.msra.mxu0 0
    %769 = vmatprep.subr.bf16.mxu0 0
    %770 = vmatpush1.bf16.msra.mxu0 0
    %771 = vmatprep.subr.bf16.mxu0 0
    %772 = vmatpush1.bf16.msra.mxu0 0
    %773 = vmatprep.mubr.bf16.mxu0 0
    %774 = vmatmul.mubr.bf16.gmra.mrb[0].mxu0 %v735
    %v775 = vpop.f32.mrb[0].mxu0
    %v776 = vadd.f32 0.0, %v775
    %v777 = vpop.f32.mrb[0].mxu0
    %v778 = vpop.f32.mrb[0].mxu0
    %v779 = vpop.f32.mrb[0].mxu0
    %780 = vdwg.mxu0
    %781 = vrot.lane.b32.xlu0 %v236, 64
    %v782 = vpop.permute.xlu0 %781
    %v784 = vsel %vm246, %v725, 0
    %v787 = vsel %vm737, %v782, 0
    %789 = vmatprep.subr.bf16.mxu0 0
    %790 = vmatpush1.bf16.msra.mxu0 %v787
    %791 = vmatprep.subr.bf16.mxu0 0
    %792 = vmatpush1.bf16.msra.mxu0 0
    %793 = vmatprep.subr.bf16.mxu0 0
    %794 = vmatpush1.bf16.msra.mxu0 0
    %795 = vmatprep.subr.bf16.mxu0 0
    %796 = vmatpush1.bf16.msra.mxu0 0
    %797 = vmatprep.subr.bf16.mxu0 0
    %798 = vmatpush1.bf16.msra.mxu0 0
    %799 = vmatprep.subr.bf16.mxu0 0
    %800 = vmatpush1.bf16.msra.mxu0 0
    %801 = vmatprep.subr.bf16.mxu0 0
    %802 = vmatpush1.bf16.msra.mxu0 0
    %803 = vmatprep.subr.bf16.mxu0 0
    %804 = vmatpush1.bf16.msra.mxu0 0
    %805 = vmatprep.subr.bf16.mxu0 0
    %806 = vmatpush1.bf16.msra.mxu0 0
    %807 = vmatprep.subr.bf16.mxu0 0
    %808 = vmatpush1.bf16.msra.mxu0 0
    %809 = vmatprep.subr.bf16.mxu0 0
    %810 = vmatpush1.bf16.msra.mxu0 0
    %811 = vmatprep.subr.bf16.mxu0 0
    %812 = vmatpush1.bf16.msra.mxu0 0
    %813 = vmatprep.subr.bf16.mxu0 0
    %814 = vmatpush1.bf16.msra.mxu0 0
    %815 = vmatprep.subr.bf16.mxu0 0
    %816 = vmatpush1.bf16.msra.mxu0 0
    %817 = vmatprep.subr.bf16.mxu0 0
    %818 = vmatpush1.bf16.msra.mxu0 0
    %819 = vmatprep.subr.bf16.mxu0 0
    %820 = vmatpush1.bf16.msra.mxu0 0
    %821 = vmatprep.mubr.bf16.mxu0 0
    %822 = vmatmul.mubr.bf16.gmra.mrb[0].mxu0 %v784
    %v823 = vpop.f32.mrb[0].mxu0
    %v824 = vadd.f32 0.0, %v823
    %v825 = vpop.f32.mrb[0].mxu0
    %v826 = vpop.f32.mrb[0].mxu0
    %v827 = vpop.f32.mrb[0].mxu0
    %828 = vdwg.mxu0
    %829 = vrot.lane.b32.xlu0 %v237, 64
    %v830 = vpop.permute.xlu0 %829
    %v832 = vsel %vm246, %v726, 0
    %v835 = vsel %vm737, %v830, 0
    %837 = vmatprep.subr.bf16.mxu0 0
    %838 = vmatpush1.bf16.msra.mxu0 %v835
    %839 = vmatprep.subr.bf16.mxu0 0
    %840 = vmatpush1.bf16.msra.mxu0 0
    %841 = vmatprep.subr.bf16.mxu0 0
    %842 = vmatpush1.bf16.msra.mxu0 0
    %843 = vmatprep.subr.bf16.mxu0 0
    %844 = vmatpush1.bf16.msra.mxu0 0
    %845 = vmatprep.subr.bf16.mxu0 0
    %846 = vmatpush1.bf16.msra.mxu0 0
    %847 = vmatprep.subr.bf16.mxu0 0
    %848 = vmatpush1.bf16.msra.mxu0 0
    %849 = vmatprep.subr.bf16.mxu0 0
    %850 = vmatpush1.bf16.msra.mxu0 0
    %851 = vmatprep.subr.bf16.mxu0 0
    %852 = vmatpush1.bf16.msra.mxu0 0
    %853 = vmatprep.subr.bf16.mxu0 0
    %854 = vmatpush1.bf16.msra.mxu0 0
    %855 = vmatprep.subr.bf16.mxu0 0
    %856 = vmatpush1.bf16.msra.mxu0 0
    %857 = vmatprep.subr.bf16.mxu0 0
    %858 = vmatpush1.bf16.msra.mxu0 0
    %859 = vmatprep.subr.bf16.mxu0 0
    %860 = vmatpush1.bf16.msra.mxu0 0
    %861 = vmatprep.subr.bf16.mxu0 0
    %862 = vmatpush1.bf16.msra.mxu0 0
    %863 = vmatprep.subr.bf16.mxu0 0
    %864 = vmatpush1.bf16.msra.mxu0 0
    %865 = vmatprep.subr.bf16.mxu0 0
    %866 = vmatpush1.bf16.msra.mxu0 0
    %867 = vmatprep.subr.bf16.mxu0 0
    %868 = vmatpush1.bf16.msra.mxu0 0
    %869 = vmatprep.mubr.bf16.mxu0 0
    %870 = vmatmul.mubr.bf16.gmra.mrb[0].mxu0 %v832
    %v871 = vpop.f32.mrb[0].mxu0
    %v872 = vadd.f32 0.0, %v871
    %v873 = vpop.f32.mrb[0].mxu0
    %v874 = vpop.f32.mrb[0].mxu0
    %v875 = vpop.f32.mrb[0].mxu0
    %876 = vdwg.mxu0
    %877 = vrot.lane.b32.xlu0 %v238, 64
    %v878 = vpop.permute.xlu0 %877
    %v880 = vsel %vm246, %v727, 0
    %v883 = vsel %vm737, %v878, 0
    %885 = vmatprep.subr.bf16.mxu0 0
    %886 = vmatpush1.bf16.msra.mxu0 %v883
    %887 = vmatprep.subr.bf16.mxu0 0
    %888 = vmatpush1.bf16.msra.mxu0 0
    %889 = vmatprep.subr.bf16.mxu0 0
    %890 = vmatpush1.bf16.msra.mxu0 0
    %891 = vmatprep.subr.bf16.mxu0 0
    %892 = vmatpush1.bf16.msra.mxu0 0
    %893 = vmatprep.subr.bf16.mxu0 0
    %894 = vmatpush1.bf16.msra.mxu0 0
    %895 = vmatprep.subr.bf16.mxu0 0
    %896 = vmatpush1.bf16.msra.mxu0 0
    %897 = vmatprep.subr.bf16.mxu0 0
    %898 = vmatpush1.bf16.msra.mxu0 0
    %899 = vmatprep.subr.bf16.mxu0 0
    %900 = vmatpush1.bf16.msra.mxu0 0
    %901 = vmatprep.subr.bf16.mxu0 0
    %902 = vmatpush1.bf16.msra.mxu0 0
    %903 = vmatprep.subr.bf16.mxu0 0
    %904 = vmatpush1.bf16.msra.mxu0 0
    %905 = vmatprep.subr.bf16.mxu0 0
    %906 = vmatpush1.bf16.msra.mxu0 0
    %907 = vmatprep.subr.bf16.mxu0 0
    %908 = vmatpush1.bf16.msra.mxu0 0
    %909 = vmatprep.subr.bf16.mxu0 0
    %910 = vmatpush1.bf16.msra.mxu0 0
    %911 = vmatprep.subr.bf16.mxu0 0
    %912 = vmatpush1.bf16.msra.mxu0 0
    %913 = vmatprep.subr.bf16.mxu0 0
    %914 = vmatpush1.bf16.msra.mxu0 0
    %915 = vmatprep.subr.bf16.mxu0 0
    %916 = vmatpush1.bf16.msra.mxu0 0
    %917 = vmatprep.mubr.bf16.mxu0 0
    %918 = vmatmul.mubr.bf16.gmra.mrb[0].mxu0 %v880
    %v919 = vpop.f32.mrb[0].mxu0
    %v920 = vadd.f32 0.0, %v919
    %v921 = vpop.f32.mrb[0].mxu0
    %v922 = vpop.f32.mrb[0].mxu0
    %v923 = vpop.f32.mrb[0].mxu0
    %924 = vdwg.mxu0
    %925 = vrot.lane.b32.xlu0 %v239, 64
    %v926 = vpop.permute.xlu0 %925
    %v928 = vsel %vm246, %v728, 0
    %v931 = vsel %vm737, %v926, 0
    %933 = vmatprep.subr.bf16.mxu0 0
    %934 = vmatpush1.bf16.msra.mxu0 %v931
    %935 = vmatprep.subr.bf16.mxu0 0
    %936 = vmatpush1.bf16.msra.mxu0 0
    %937 = vmatprep.subr.bf16.mxu0 0
    %938 = vmatpush1.bf16.msra.mxu0 0
    %939 = vmatprep.subr.bf16.mxu0 0
    %940 = vmatpush1.bf16.msra.mxu0 0
    %941 = vmatprep.subr.bf16.mxu0 0
    %942 = vmatpush1.bf16.msra.mxu0 0
    %943 = vmatprep.subr.bf16.mxu0 0
    %944 = vmatpush1.bf16.msra.mxu0 0
    %945 = vmatprep.subr.bf16.mxu0 0
    %946 = vmatpush1.bf16.msra.mxu0 0
    %947 = vmatprep.subr.bf16.mxu0 0
    %948 = vmatpush1.bf16.msra.mxu0 0
    %949 = vmatprep.subr.bf16.mxu0 0
    %950 = vmatpush1.bf16.msra.mxu0 0
    %951 = vmatprep.subr.bf16.mxu0 0
    %952 = vmatpush1.bf16.msra.mxu0 0
    %953 = vmatprep.subr.bf16.mxu0 0
    %954 = vmatpush1.bf16.msra.mxu0 0
    %955 = vmatprep.subr.bf16.mxu0 0
    %956 = vmatpush1.bf16.msra.mxu0 0
    %957 = vmatprep.subr.bf16.mxu0 0
    %958 = vmatpush1.bf16.msra.mxu0 0
    %959 = vmatprep.subr.bf16.mxu0 0
    %960 = vmatpush1.bf16.msra.mxu0 0
    %961 = vmatprep.subr.bf16.mxu0 0
    %962 = vmatpush1.bf16.msra.mxu0 0
    %963 = vmatprep.subr.bf16.mxu0 0
    %964 = vmatpush1.bf16.msra.mxu0 0
    %965 = vmatprep.mubr.bf16.mxu0 0
    %966 = vmatmul.mubr.bf16.gmra.mrb[0].mxu0 %v928
    %v967 = vpop.f32.mrb[0].mxu0
    %v968 = vadd.f32 0.0, %v967
    %v969 = vpop.f32.mrb[0].mxu0
    %v970 = vpop.f32.mrb[0].mxu0
    %v971 = vpop.f32.mrb[0].mxu0
    %972 = vdwg.mxu0
    %973 = vrot.lane.b32.xlu0 %v240, 64
    %v974 = vpop.permute.xlu0 %973
    %v976 = vsel %vm246, %v729, 0
    %v979 = vsel %vm737, %v974, 0
    %981 = vmatprep.subr.bf16.mxu0 0
    %982 = vmatpush1.bf16.msra.mxu0 %v979
    %983 = vmatprep.subr.bf16.mxu0 0
    %984 = vmatpush1.bf16.msra.mxu0 0
    %985 = vmatprep.subr.bf16.mxu0 0
    %986 = vmatpush1.bf16.msra.mxu0 0
    %987 = vmatprep.subr.bf16.mxu0 0
    %988 = vmatpush1.bf16.msra.mxu0 0
    %989 = vmatprep.subr.bf16.mxu0 0
    %990 = vmatpush1.bf16.msra.mxu0 0
    %991 = vmatprep.subr.bf16.mxu0 0
    %992 = vmatpush1.bf16.msra.mxu0 0
    %993 = vmatprep.subr.bf16.mxu0 0
    %994 = vmatpush1.bf16.msra.mxu0 0
    %995 = vmatprep.subr.bf16.mxu0 0
    %996 = vmatpush1.bf16.msra.mxu0 0
    %997 = vmatprep.subr.bf16.mxu0 0
    %998 = vmatpush1.bf16.msra.mxu0 0
    %999 = vmatprep.subr.bf16.mxu0 0
    %1000 = vmatpush1.bf16.msra.mxu0 0
    %1001 = vmatprep.subr.bf16.mxu0 0
    %1002 = vmatpush1.bf16.msra.mxu0 0
    %1003 = vmatprep.subr.bf16.mxu0 0
    %1004 = vmatpush1.bf16.msra.mxu0 0
    %1005 = vmatprep.subr.bf16.mxu0 0
    %1006 = vmatpush1.bf16.msra.mxu0 0
    %1007 = vmatprep.subr.bf16.mxu0 0
    %1008 = vmatpush1.bf16.msra.mxu0 0
    %1009 = vmatprep.subr.bf16.mxu0 0
    %1010 = vmatpush1.bf16.msra.mxu0 0
    %1011 = vmatprep.subr.bf16.mxu0 0
    %1012 = vmatpush1.bf16.msra.mxu0 0
    %1013 = vmatprep.mubr.bf16.mxu0 0
    %1014 = vmatmul.mubr.bf16.gmra.mrb[0].mxu0 %v976
    %v1015 = vpop.f32.mrb[0].mxu0
    %v1016 = vadd.f32 0.0, %v1015
    %v1017 = vpop.f32.mrb[0].mxu0
    %v1018 = vpop.f32.mrb[0].mxu0
    %v1019 = vpop.f32.mrb[0].mxu0
    %1020 = vdwg.mxu0
    %1021 = vrot.lane.b32.xlu0 %v241, 64
    %v1022 = vpop.permute.xlu0 %1021
    %v1024 = vsel %vm246, %v730, 0
    %v1027 = vsel %vm737, %v1022, 0
    %1029 = vmatprep.subr.bf16.mxu0 0
    %1030 = vmatpush1.bf16.msra.mxu0 %v1027
    %1031 = vmatprep.subr.bf16.mxu0 0
    %1032 = vmatpush1.bf16.msra.mxu0 0
    %1033 = vmatprep.subr.bf16.mxu0 0
    %1034 = vmatpush1.bf16.msra.mxu0 0
    %1035 = vmatprep.subr.bf16.mxu0 0
    %1036 = vmatpush1.bf16.msra.mxu0 0
    %1037 = vmatprep.subr.bf16.mxu0 0
    %1038 = vmatpush1.bf16.msra.mxu0 0
    %1039 = vmatprep.subr.bf16.mxu0 0
    %1040 = vmatpush1.bf16.msra.mxu0 0
    %1041 = vmatprep.subr.bf16.mxu0 0
    %1042 = vmatpush1.bf16.msra.mxu0 0
    %1043 = vmatprep.subr.bf16.mxu0 0
    %1044 = vmatpush1.bf16.msra.mxu0 0
    %1045 = vmatprep.subr.bf16.mxu0 0
    %1046 = vmatpush1.bf16.msra.mxu0 0
    %1047 = vmatprep.subr.bf16.mxu0 0
    %1048 = vmatpush1.bf16.msra.mxu0 0
    %1049 = vmatprep.subr.bf16.mxu0 0
    %1050 = vmatpush1.bf16.msra.mxu0 0
    %1051 = vmatprep.subr.bf16.mxu0 0
    %1052 = vmatpush1.bf16.msra.mxu0 0
    %1053 = vmatprep.subr.bf16.mxu0 0
    %1054 = vmatpush1.bf16.msra.mxu0 0
    %1055 = vmatprep.subr.bf16.mxu0 0
    %1056 = vmatpush1.bf16.msra.mxu0 0
    %1057 = vmatprep.subr.bf16.mxu0 0
    %1058 = vmatpush1.bf16.msra.mxu0 0
    %1059 = vmatprep.subr.bf16.mxu0 0
    %1060 = vmatpush1.bf16.msra.mxu0 0
    %1061 = vmatprep.mubr.bf16.mxu0 0
    %1062 = vmatmul.mubr.bf16.gmra.mrb[0].mxu0 %v1024
    %v1063 = vpop.f32.mrb[0].mxu0
    %v1064 = vadd.f32 0.0, %v1063
    %v1065 = vpop.f32.mrb[0].mxu0
    %v1066 = vpop.f32.mrb[0].mxu0
    %v1067 = vpop.f32.mrb[0].mxu0
    %1068 = vdwg.mxu0
    %1069 = vrot.lane.b32.xlu0 %v242, 64
    %v1070 = vpop.permute.xlu0 %1069
    %v1072 = vsel %vm246, %v731, 0
    %v1075 = vsel %vm737, %v1070, 0
    %1077 = vmatprep.subr.bf16.mxu0 0
    %1078 = vmatpush1.bf16.msra.mxu0 %v1075
    %1079 = vmatprep.subr.bf16.mxu0 0
    %1080 = vmatpush1.bf16.msra.mxu0 0
    %1081 = vmatprep.subr.bf16.mxu0 0
    %1082 = vmatpush1.bf16.msra.mxu0 0
    %1083 = vmatprep.subr.bf16.mxu0 0
    %1084 = vmatpush1.bf16.msra.mxu0 0
    %1085 = vmatprep.subr.bf16.mxu0 0
    %1086 = vmatpush1.bf16.msra.mxu0 0
    %1087 = vmatprep.subr.bf16.mxu0 0
    %1088 = vmatpush1.bf16.msra.mxu0 0
    %1089 = vmatprep.subr.bf16.mxu0 0
    %1090 = vmatpush1.bf16.msra.mxu0 0
    %1091 = vmatprep.subr.bf16.mxu0 0
    %1092 = vmatpush1.bf16.msra.mxu0 0
    %1093 = vmatprep.subr.bf16.mxu0 0
    %1094 = vmatpush1.bf16.msra.mxu0 0
    %1095 = vmatprep.subr.bf16.mxu0 0
    %1096 = vmatpush1.bf16.msra.mxu0 0
    %1097 = vmatprep.subr.bf16.mxu0 0
    %1098 = vmatpush1.bf16.msra.mxu0 0
    %1099 = vmatprep.subr.bf16.mxu0 0
    %1100 = vmatpush1.bf16.msra.mxu0 0
    %1101 = vmatprep.subr.bf16.mxu0 0
    %1102 = vmatpush1.bf16.msra.mxu0 0
    %1103 = vmatprep.subr.bf16.mxu0 0
    %1104 = vmatpush1.bf16.msra.mxu0 0
    %1105 = vmatprep.subr.bf16.mxu0 0
    %1106 = vmatpush1.bf16.msra.mxu0 0
    %1107 = vmatprep.subr.bf16.mxu0 0
    %1108 = vmatpush1.bf16.msra.mxu0 0
    %1109 = vmatprep.mubr.bf16.mxu0 0
    %1110 = vmatmul.mubr.bf16.gmra.mrb[0].mxu0 %v1072
    %v1111 = vpop.f32.mrb[0].mxu0
    %v1112 = vadd.f32 0.0, %v1111
    %v1113 = vpop.f32.mrb[0].mxu0
    %v1114 = vpop.f32.mrb[0].mxu0
    %v1115 = vpop.f32.mrb[0].mxu0
    %1116 = vdwg.mxu0
    %1119 = vrot.lane.b32.xlu0 %v872, 8
    %v1120 = vpop.permute.xlu0 %1119
    %1121 = vrot.lane.b32.xlu0 %v920, 8
    %v1122 = vpop.permute.xlu0 %1121
    %1127 = vrot.lane.b32.xlu0 %v968, 16
    %v1128 = vpop.permute.xlu0 %1127
    %1129 = vrot.lane.b32.xlu0 %v1016, 16
    %v1130 = vpop.permute.xlu0 %1129
    %1135 = vrot.lane.b32.xlu0 %v1064, 24
    %v1136 = vpop.permute.xlu0 %1135
    %1137 = vrot.lane.b32.xlu0 %v1112, 24
    %v1138 = vpop.permute.xlu0 %1137
    %v1141 = vsel %vm246, %v776, %v1120
    %v1142 = vsel %vm246, %v824, %v1122
    %vm1143 = vcmask 130048
    %v1144 = vsel %vm1143, %v1141, %v1128
    %v1145 = vsel %vm1143, %v1142, %v1130
    %vm1146 = vcmask 195584
    %v1147 = vsel %vm1146, %v1144, %v1136
    %v1148 = vsel %vm1146, %v1145, %v1138
    %v1149 = vpack.c.bf16 %v1148, %v1147
    %v1150 = vld [vmem:[%s6] sm:$0xf]
    %v1151 = vld [vmem:[%s6 + $0x4] sm:$0xf]
    %v1152 = vld [vmem:[%s6 + $0x8] sm:$0xf]
    %v1153 = vld [vmem:[%s6 + $0xc] sm:$0xf]
    %v1154 = vld [vmem:[%s7] sm:$0x1]
    %v1156 = vlaneseq
    %v1157 = vshrl.u32 %v1156, 7
    %v1158 = vsub.s32 0, %v1157
    %v1159 = vrot.slane %v1154, %v1158
    %v1165 = vunpack.c.l.b16 %v1150
    %v1166 = vunpack.c.l.b16 %v1151
    %v1167 = vunpack.c.l.b16 %v1152
    %v1168 = vunpack.c.l.b16 %v1153
    %v1169 = vpack.c.b16 %v1166, %v1165
    %v1170 = vpack.c.b16 %v1168, %v1167
    %v1174 = vsel %vm170, %v1149, 0
    %1176 = vmatprep.subr.bf16.mxu0 0
    %1177 = vmatpush1.bf16.msra.mxu0 %v1169
    %1178 = vmatprep.subr.bf16.mxu0 0
    %1179 = vmatpush1.bf16.msra.mxu0 %v1170
    %1180 = vmatprep.subr.bf16.mxu0 0
    %1181 = vmatpush1.bf16.msra.mxu0 0
    %1182 = vmatprep.subr.bf16.mxu0 0
    %1183 = vmatpush1.bf16.msra.mxu0 0
    %1184 = vmatprep.subr.bf16.mxu0 0
    %1185 = vmatpush1.bf16.msra.mxu0 0
    %1186 = vmatprep.subr.bf16.mxu0 0
    %1187 = vmatpush1.bf16.msra.mxu0 0
    %1188 = vmatprep.subr.bf16.mxu0 0
    %1189 = vmatpush1.bf16.msra.mxu0 0
    %1190 = vmatprep.subr.bf16.mxu0 0
    %1191 = vmatpush1.bf16.msra.mxu0 0
    %1192 = vmatprep.subr.bf16.mxu0 0
    %1193 = vmatpush1.bf16.msra.mxu0 0
    %1194 = vmatprep.subr.bf16.mxu0 0
    %1195 = vmatpush1.bf16.msra.mxu0 0
    %1196 = vmatprep.subr.bf16.mxu0 0
    %1197 = vmatpush1.bf16.msra.mxu0 0
    %1198 = vmatprep.subr.bf16.mxu0 0
    %1199 = vmatpush1.bf16.msra.mxu0 0
    %1200 = vmatprep.subr.bf16.mxu0 0
    %1201 = vmatpush1.bf16.msra.mxu0 0
    %1202 = vmatprep.subr.bf16.mxu0 0
    %1203 = vmatpush1.bf16.msra.mxu0 0
    %1204 = vmatprep.subr.bf16.mxu0 0
    %1205 = vmatpush1.bf16.msra.mxu0 0
    %1206 = vmatprep.subr.bf16.mxu0 0
    %1207 = vmatpush1.bf16.msra.mxu0 0
    %1208 = vmatprep.mubr.bf16.mxu0 0
    %1209 = vmatmul.mubr.bf16.gmra.mrb[0].mxu0 %v1174
    %v1210 = vpop.f32.mrb[0].mxu0
    %v1211 = vadd.f32 %v1159, %v1210
    %v1212 = vpop.f32.mrb[0].mxu0
    %v1213 = vpop.f32.mrb[0].mxu0
    %v1214 = vadd.f32 %v1159, %v1213
    %v1215 = vpop.f32.mrb[0].mxu0
    %1216 = vdwg.mxu0
    %v1217 = vadd.f32 %v144, %v1211
    %v1218 = vadd.f32 %v145, %v1214
    %v1219 = vld [vmem:[%s12] sm:$0x1]
    %v1220 = vld [vmem:[%s13] sm:$0x1]
    %v1221 = vsel %vm170, %v1217, 0.0
    %1222 = vadd.xlane.f32.xlu0 %v1221
    %v1223 = vpop.xlane.xlu0 %1222
    %v1224 = vsel %vm170, %v1218, 0.0
    %1225 = vadd.xlane.f32.xlu0 %v1224
    %v1226 = vpop.xlane.xlu0 %1225
    %v1227 = vrcp.pop 32.0
    %v1228 = vmul.f32 %v1223, %v1227
    %v1229 = vmul.f32 %v1226, %v1227
    %v1230 = vsub.f32 %v1217, %v1228
    %v1231 = vsub.f32 %v1218, %v1229
    %v1232 = vmul.f32 %v1230, %v1230
    %v1233 = vmul.f32 %v1231, %v1231
    %v1234 = vsel %vm170, %v1232, 0.0
    %1235 = vadd.xlane.f32.xlu0 %v1234
    %v1236 = vpop.xlane.xlu0 %1235
    %v1237 = vsel %vm170, %v1233, 0.0
    %1238 = vadd.xlane.f32.xlu0 %v1237
    %v1239 = vpop.xlane.xlu0 %1238
    %v1240 = vmul.f32 %v1236, %v1227
    %v1241 = vmul.f32 %v1239, %v1227
    %v1242 = vadd.f32 %v1240, 1e-05
    %v1243 = vadd.f32 %v1241, 1e-05
    %v1244 = vrsqrt.pop %v1242
    %v1245 = vrsqrt.pop %v1243
    %v1246 = vmul.f32 %v1230, %v1244
    %v1247 = vmul.f32 %v1231, %v1245
    %v1249 = vlaneseq
    %v1250 = vshrl.u32 %v1249, 7
    %v1251 = vsub.s32 0, %v1250
    %v1252 = vrot.slane %v1219, %v1251
    %v1254 = vmul.f32 %v1246, %v1252
    %v1255 = vmul.f32 %v1247, %v1252
    %v1257 = vlaneseq
    %v1258 = vshrl.u32 %v1257, 7
    %v1259 = vsub.s32 0, %v1258
    %v1260 = vrot.slane %v1220, %v1259
    %v1262 = vadd.f32 %v1254, %v1260
    %v1263 = vadd.f32 %v1255, %v1260
    %v1264 = vpack.c.bf16 %v1263, %v1262
    %v1265 = vld [vmem:[%s8] sm:$0xf]
    %v1266 = vld [vmem:[%s8 + $0x4] sm:$0xf]
    %v1267 = vld [vmem:[%s8 + $0x8] sm:$0xf]
    %v1268 = vld [vmem:[%s8 + $0xc] sm:$0xf]
    %v1269 = vld [vmem:[%s9] sm:$0x1]
    %v1271 = vlaneseq
    %v1272 = vshrl.u32 %v1271, 7
    %v1273 = vsub.s32 0, %v1272
    %v1274 = vrot.slane %v1269, %v1273
    %v1280 = vunpack.c.l.b16 %v1265
    %v1281 = vunpack.c.l.b16 %v1266
    %v1282 = vunpack.c.l.b16 %v1267
    %v1283 = vunpack.c.l.b16 %v1268
    %v1284 = vpack.c.b16 %v1281, %v1280
    %v1285 = vpack.c.b16 %v1283, %v1282
    %v1289 = vsel %vm170, %v1264, 0
    %1291 = vmatprep.subr.bf16.mxu0 0
    %1292 = vmatpush1.bf16.msra.mxu0 %v1284
    %1293 = vmatprep.subr.bf16.mxu0 0
    %1294 = vmatpush1.bf16.msra.mxu0 %v1285
    %1295 = vmatprep.subr.bf16.mxu0 0
    %1296 = vmatpush1.bf16.msra.mxu0 0
    %1297 = vmatprep.subr.bf16.mxu0 0
    %1298 = vmatpush1.bf16.msra.mxu0 0
    %1299 = vmatprep.subr.bf16.mxu0 0
    %1300 = vmatpush1.bf16.msra.mxu0 0
    %1301 = vmatprep.subr.bf16.mxu0 0
    %1302 = vmatpush1.bf16.msra.mxu0 0
    %1303 = vmatprep.subr.bf16.mxu0 0
    %1304 = vmatpush1.bf16.msra.mxu0 0
    %1305 = vmatprep.subr.bf16.mxu0 0
    %1306 = vmatpush1.bf16.msra.mxu0 0
    %1307 = vmatprep.subr.bf16.mxu0 0
    %1308 = vmatpush1.bf16.msra.mxu0 0
    %1309 = vmatprep.subr.bf16.mxu0 0
    %1310 = vmatpush1.bf16.msra.mxu0 0
    %1311 = vmatprep.subr.bf16.mxu0 0
    %1312 = vmatpush1.bf16.msra.mxu0 0
    %1313 = vmatprep.subr.bf16.mxu0 0
    %1314 = vmatpush1.bf16.msra.mxu0 0
    %1315 = vmatprep.subr.bf16.mxu0 0
    %1316 = vmatpush1.bf16.msra.mxu0 0
    %1317 = vmatprep.subr.bf16.mxu0 0
    %1318 = vmatpush1.bf16.msra.mxu0 0
    %1319 = vmatprep.subr.bf16.mxu0 0
    %1320 = vmatpush1.bf16.msra.mxu0 0
    %1321 = vmatprep.subr.bf16.mxu0 0
    %1322 = vmatpush1.bf16.msra.mxu0 0
    %1323 = vmatprep.mubr.bf16.mxu0 0
    %1324 = vmatmul.mubr.bf16.gmra.mrb[0].mxu0 %v1289
    %v1325 = vpop.f32.mrb[0].mxu0
    %v1326 = vadd.f32 %v1274, %v1325
    %v1327 = vpop.f32.mrb[0].mxu0
    %v1328 = vpop.f32.mrb[0].mxu0
    %v1329 = vadd.f32 %v1274, %v1328
    %v1330 = vpop.f32.mrb[0].mxu0
    %1331 = vdwg.mxu0
    %v1332 = vmax.f32 %v1326, 0.0
    %v1333 = vmax.f32 %v1329, 0.0
    %v1334 = vpack.c.bf16 %v1333, %v1332
    %v1335 = vld [vmem:[%s10] sm:$0xf]
    %v1336 = vld [vmem:[%s10 + $0x4] sm:$0xf]
    %v1337 = vld [vmem:[%s10 + $0x8] sm:$0xf]
    %v1338 = vld [vmem:[%s10 + $0xc] sm:$0xf]
    %v1339 = vld [vmem:[%s10 + $0x10] sm:$0xf]
    %v1340 = vld [vmem:[%s10 + $0x14] sm:$0xf]
    %v1341 = vld [vmem:[%s10 + $0x18] sm:$0xf]
    %v1342 = vld [vmem:[%s10 + $0x1c] sm:$0xf]
    %v1343 = vld [vmem:[%s11] sm:$0x1]
    %v1345 = vlaneseq
    %v1346 = vshrl.u32 %v1345, 7
    %v1347 = vsub.s32 0, %v1346
    %v1348 = vrot.slane %v1343, %v1347
    %v1358 = vunpack.c.l.b16 %v1335
    %v1359 = vunpack.c.l.b16 %v1336
    %v1360 = vunpack.c.l.b16 %v1337
    %v1361 = vunpack.c.l.b16 %v1338
    %v1362 = vunpack.c.l.b16 %v1339
    %v1363 = vunpack.c.l.b16 %v1340
    %v1364 = vunpack.c.l.b16 %v1341
    %v1365 = vunpack.c.l.b16 %v1342
    %v1366 = vpack.c.b16 %v1359, %v1358
    %v1367 = vpack.c.b16 %v1361, %v1360
    %v1368 = vpack.c.b16 %v1363, %v1362
    %v1369 = vpack.c.b16 %v1365, %v1364
    %vm1374 = vcmask 523264
    %v1376 = vsel %vm1374, %v1334, 0
    %1378 = vmatprep.subr.bf16.mxu0 0
    %1379 = vmatpush1.bf16.msra.mxu0 %v1366
    %1380 = vmatprep.subr.bf16.mxu0 0
    %1381 = vmatpush1.bf16.msra.mxu0 %v1367
    %1382 = vmatprep.subr.bf16.mxu0 0
    %1383 = vmatpush1.bf16.msra.mxu0 %v1368
    %1384 = vmatprep.subr.bf16.mxu0 0
    %1385 = vmatpush1.bf16.msra.mxu0 %v1369
    %1386 = vmatprep.subr.bf16.mxu0 0
    %1387 = vmatpush1.bf16.msra.mxu0 0
    %1388 = vmatprep.subr.bf16.mxu0 0
    %1389 = vmatpush1.bf16.msra.mxu0 0
    %1390 = vmatprep.subr.bf16.mxu0 0
    %1391 = vmatpush1.bf16.msra.mxu0 0
    %1392 = vmatprep.subr.bf16.mxu0 0
    %1393 = vmatpush1.bf16.msra.mxu0 0
    %1394 = vmatprep.subr.bf16.mxu0 0
    %1395 = vmatpush1.bf16.msra.mxu0 0
    %1396 = vmatprep.subr.bf16.mxu0 0
    %1397 = vmatpush1.bf16.msra.mxu0 0
    %1398 = vmatprep.subr.bf16.mxu0 0
    %1399 = vmatpush1.bf16.msra.mxu0 0
    %1400 = vmatprep.subr.bf16.mxu0 0
    %1401 = vmatpush1.bf16.msra.mxu0 0
    %1402 = vmatprep.subr.bf16.mxu0 0
    %1403 = vmatpush1.bf16.msra.mxu0 0
    %1404 = vmatprep.subr.bf16.mxu0 0
    %1405 = vmatpush1.bf16.msra.mxu0 0
    %1406 = vmatprep.subr.bf16.mxu0 0
    %1407 = vmatpush1.bf16.msra.mxu0 0
    %1408 = vmatprep.subr.bf16.mxu0 0
    %1409 = vmatpush1.bf16.msra.mxu0 0
    %1410 = vmatprep.mubr.bf16.mxu0 0
    %1411 = vmatmul.mubr.bf16.gmra.mrb[0].mxu0 %v1376
    %v1412 = vpop.f32.mrb[0].mxu0
    %v1413 = vadd.f32 %v1348, %v1412
    %v1414 = vpop.f32.mrb[0].mxu0
    %v1415 = vpop.f32.mrb[0].mxu0
    %v1416 = vadd.f32 %v1348, %v1415
    %v1417 = vpop.f32.mrb[0].mxu0
    %1418 = vdwg.mxu0
    %v1419 = vadd.f32 %v1262, %v1413
    %v1420 = vadd.f32 %v1263, %v1416
    %v1421 = vld [vmem:[%s14] sm:$0x1]
    %v1422 = vld [vmem:[%s15] sm:$0x1]
    %v1423 = vsel %vm170, %v1419, 0.0
    %1424 = vadd.xlane.f32.xlu0 %v1423
    %v1425 = vpop.xlane.xlu0 %1424
    %v1426 = vsel %vm170, %v1420, 0.0
    %1427 = vadd.xlane.f32.xlu0 %v1426
    %v1428 = vpop.xlane.xlu0 %1427
    %v1429 = vmul.f32 %v1425, %v1227
    %v1430 = vmul.f32 %v1428, %v1227
    %v1431 = vsub.f32 %v1419, %v1429
    %v1432 = vsub.f32 %v1420, %v1430
    %v1433 = vmul.f32 %v1431, %v1431
    %v1434 = vmul.f32 %v1432, %v1432
    %v1435 = vsel %vm170, %v1433, 0.0
    %1436 = vadd.xlane.f32.xlu0 %v1435
    %v1437 = vpop.xlane.xlu0 %1436
    %v1438 = vsel %vm170, %v1434, 0.0
    %1439 = vadd.xlane.f32.xlu0 %v1438
    %v1440 = vpop.xlane.xlu0 %1439
    %v1441 = vmul.f32 %v1437, %v1227
    %v1442 = vmul.f32 %v1440, %v1227
    %v1443 = vadd.f32 %v1441, 1e-05
    %v1444 = vadd.f32 %v1442, 1e-05
    %v1445 = vrsqrt.pop %v1443
    %v1446 = vrsqrt.pop %v1444
    %v1447 = vmul.f32 %v1431, %v1445
    %v1448 = vmul.f32 %v1432, %v1446
    %v1450 = vlaneseq
    %v1451 = vshrl.u32 %v1450, 7
    %v1452 = vsub.s32 0, %v1451
    %v1453 = vrot.slane %v1421, %v1452
    %v1455 = vmul.f32 %v1447, %v1453
    %v1456 = vmul.f32 %v1448, %v1453
    %v1458 = vlaneseq
    %v1459 = vshrl.u32 %v1458, 7
    %v1460 = vsub.s32 0, %v1459
    %v1461 = vrot.slane %v1422, %v1460
    %v1463 = vadd.f32 %v1455, %v1461
    %v1464 = vadd.f32 %v1456, %v1461
    %v1465 = vpack.c.bf16 %v1464, %v1463
    %s1466 = scalar_lea.vmem %s4, 16
    %v1467 = vld [vmem:[%s1466] sm:$0xf]
    %v1468 = vld [vmem:[%s1466 + $0x4] sm:$0xf]
    %v1469 = vld [vmem:[%s1466 + $0x8] sm:$0xf]
    %v1470 = vld [vmem:[%s1466 + $0xc] sm:$0xf]
    %s1471 = scalar_lea.vmem %s5, 1
    %v1472 = vld [vmem:[%s1471] sm:$0x1]
    %v1474 = vlaneseq
    %v1475 = vshrl.u32 %v1474, 7
    %v1476 = vsub.s32 0, %v1475
    %v1477 = vrot.slane %v1472, %v1476
    %v1483 = vunpack.c.l.b16 %v1467
    %v1484 = vunpack.c.l.b16 %v1468
    %v1485 = vunpack.c.l.b16 %v1469
    %v1486 = vunpack.c.l.b16 %v1470
    %v1487 = vpack.c.b16 %v1484, %v1483
    %v1488 = vpack.c.b16 %v1486, %v1485
    %v1492 = vsel %vm170, %v1465, 0
    %1494 = vmatprep.subr.bf16.mxu0 0
    %1495 = vmatpush1.bf16.msra.mxu0 %v1487
    %1496 = vmatprep.subr.bf16.mxu0 0
    %1497 = vmatpush1.bf16.msra.mxu0 %v1488
    %1498 = vmatprep.subr.bf16.mxu0 0
    %1499 = vmatpush1.bf16.msra.mxu0 0
    %1500 = vmatprep.subr.bf16.mxu0 0
    %1501 = vmatpush1.bf16.msra.mxu0 0
    %1502 = vmatprep.subr.bf16.mxu0 0
    %1503 = vmatpush1.bf16.msra.mxu0 0
    %1504 = vmatprep.subr.bf16.mxu0 0
    %1505 = vmatpush1.bf16.msra.mxu0 0
    %1506 = vmatprep.subr.bf16.mxu0 0
    %1507 = vmatpush1.bf16.msra.mxu0 0
    %1508 = vmatprep.subr.bf16.mxu0 0
    %1509 = vmatpush1.bf16.msra.mxu0 0
    %1510 = vmatprep.subr.bf16.mxu0 0
    %1511 = vmatpush1.bf16.msra.mxu0 0
    %1512 = vmatprep.subr.bf16.mxu0 0
    %1513 = vmatpush1.bf16.msra.mxu0 0
    %1514 = vmatprep.subr.bf16.mxu0 0
    %1515 = vmatpush1.bf16.msra.mxu0 0
    %1516 = vmatprep.subr.bf16.mxu0 0
    %1517 = vmatpush1.bf16.msra.mxu0 0
    %1518 = vmatprep.subr.bf16.mxu0 0
    %1519 = vmatpush1.bf16.msra.mxu0 0
    %1520 = vmatprep.subr.bf16.mxu0 0
    %1521 = vmatpush1.bf16.msra.mxu0 0
    %1522 = vmatprep.subr.bf16.mxu0 0
    %1523 = vmatpush1.bf16.msra.mxu0 0
    %1524 = vmatprep.subr.bf16.mxu0 0
    %1525 = vmatpush1.bf16.msra.mxu0 0
    %1526 = vmatprep.mubr.bf16.mxu0 0
    %1527 = vmatmul.mubr.bf16.gmra.mrb[0].mxu0 %v1492
    %v1528 = vpop.f32.mrb[0].mxu0
    %v1529 = vadd.f32 %v1477, %v1528
    %v1530 = vpop.f32.mrb[0].mxu0
    %v1531 = vpop.f32.mrb[0].mxu0
    %v1532 = vadd.f32 %v1477, %v1531
    %v1533 = vpop.f32.mrb[0].mxu0
    %1534 = vdwg.mxu0
    %1537 = vrot.lane.b32.xlu0 %v1529, 120
    %v1538 = vpop.permute.xlu0 %1537
    %1539 = vrot.lane.b32.xlu0 %v1532, 120
    %v1540 = vpop.permute.xlu0 %1539
    %1543 = vrot.lane.b32.xlu0 %v1529, 112
    %v1544 = vpop.permute.xlu0 %1543
    %1545 = vrot.lane.b32.xlu0 %v1532, 112
    %v1546 = vpop.permute.xlu0 %1545
    %1549 = vrot.lane.b32.xlu0 %v1529, 104
    %v1550 = vpop.permute.xlu0 %1549
    %1551 = vrot.lane.b32.xlu0 %v1532, 104
    %v1552 = vpop.permute.xlu0 %1551
    %v1555 = vpack.c.bf16 %v1529, %v1529
    %v1556 = vpack.c.bf16 %v1532, %v1532
    %v1557 = vpack.c.bf16 %v1538, %v1538
    %v1558 = vpack.c.bf16 %v1540, %v1540
    %v1559 = vpack.c.bf16 %v1544, %v1544
    %v1560 = vpack.c.bf16 %v1546, %v1546
    %v1561 = vpack.c.bf16 %v1550, %v1550
    %v1562 = vpack.c.bf16 %v1552, %v1552
    %1564 = vrot.lane.b32.xlu0 %v1555, 96
    %v1565 = vpop.permute.xlu0 %1564
    %v1567 = vsel %vm246, %v1555, 0
    %v1570 = vsel %vm246, %v1565, 0
    %1572 = vmatprep.subr.bf16.mxu0 0
    %1573 = vmatpush1.bf16.xpose.msra.mxu0 %v1570
    %1574 = vmatprep.subr.bf16.mxu0 0
    %1575 = vmatpush1.bf16.xpose.msra.mxu0 0
    %1576 = vmatprep.subr.bf16.mxu0 0
    %1577 = vmatpush1.bf16.xpose.msra.mxu0 0
    %1578 = vmatprep.subr.bf16.mxu0 0
    %1579 = vmatpush1.bf16.xpose.msra.mxu0 0
    %1580 = vmatprep.subr.bf16.mxu0 0
    %1581 = vmatpush1.bf16.xpose.msra.mxu0 0
    %1582 = vmatprep.subr.bf16.mxu0 0
    %1583 = vmatpush1.bf16.xpose.msra.mxu0 0
    %1584 = vmatprep.subr.bf16.mxu0 0
    %1585 = vmatpush1.bf16.xpose.msra.mxu0 0
    %1586 = vmatprep.subr.bf16.mxu0 0
    %1587 = vmatpush1.bf16.xpose.msra.mxu0 0
    %1588 = vmatprep.subr.bf16.mxu0 0
    %1589 = vmatpush1.bf16.xpose.msra.mxu0 0
    %1590 = vmatprep.subr.bf16.mxu0 0
    %1591 = vmatpush1.bf16.xpose.msra.mxu0 0
    %1592 = vmatprep.subr.bf16.mxu0 0
    %1593 = vmatpush1.bf16.xpose.msra.mxu0 0
    %1594 = vmatprep.subr.bf16.mxu0 0
    %1595 = vmatpush1.bf16.xpose.msra.mxu0 0
    %1596 = vmatprep.subr.bf16.mxu0 0
    %1597 = vmatpush1.bf16.xpose.msra.mxu0 0
    %1598 = vmatprep.subr.bf16.mxu0 0
    %1599 = vmatpush1.bf16.xpose.msra.mxu0 0
    %1600 = vmatprep.subr.bf16.mxu0 0
    %1601 = vmatpush1.bf16.xpose.msra.mxu0 0
    %1602 = vmatprep.subr.bf16.mxu0 0
    %1603 = vmatpush1.bf16.xpose.msra.mxu0 0
    %1604 = vmatprep.mubr.bf16.mxu0 0
    %1605 = vmatmul.mubr.bf16.gmra.mrb[0].mxu0 %v1567
    %v1606 = vpop.f32.mrb[0].mxu0
    %v1607 = vadd.f32 0.0, %v1606
    %v1608 = vpop.f32.mrb[0].mxu0
    %v1609 = vpop.f32.mrb[0].mxu0
    %v1610 = vpop.f32.mrb[0].mxu0
    %1611 = vdwg.mxu0
    %1613 = vrot.lane.b32.xlu0 %v1556, 96
    %v1614 = vpop.permute.xlu0 %1613
    %v1616 = vsel %vm246, %v1556, 0
    %v1619 = vsel %vm246, %v1614, 0
    %1621 = vmatprep.subr.bf16.mxu0 0
    %1622 = vmatpush1.bf16.xpose.msra.mxu0 %v1619
    %1623 = vmatprep.subr.bf16.mxu0 0
    %1624 = vmatpush1.bf16.xpose.msra.mxu0 0
    %1625 = vmatprep.subr.bf16.mxu0 0
    %1626 = vmatpush1.bf16.xpose.msra.mxu0 0
    %1627 = vmatprep.subr.bf16.mxu0 0
    %1628 = vmatpush1.bf16.xpose.msra.mxu0 0
    %1629 = vmatprep.subr.bf16.mxu0 0
    %1630 = vmatpush1.bf16.xpose.msra.mxu0 0
    %1631 = vmatprep.subr.bf16.mxu0 0
    %1632 = vmatpush1.bf16.xpose.msra.mxu0 0
    %1633 = vmatprep.subr.bf16.mxu0 0
    %1634 = vmatpush1.bf16.xpose.msra.mxu0 0
    %1635 = vmatprep.subr.bf16.mxu0 0
    %1636 = vmatpush1.bf16.xpose.msra.mxu0 0
    %1637 = vmatprep.subr.bf16.mxu0 0
    %1638 = vmatpush1.bf16.xpose.msra.mxu0 0
    %1639 = vmatprep.subr.bf16.mxu0 0
    %1640 = vmatpush1.bf16.xpose.msra.mxu0 0
    %1641 = vmatprep.subr.bf16.mxu0 0
    %1642 = vmatpush1.bf16.xpose.msra.mxu0 0
    %1643 = vmatprep.subr.bf16.mxu0 0
    %1644 = vmatpush1.bf16.xpose.msra.mxu0 0
    %1645 = vmatprep.subr.bf16.mxu0 0
    %1646 = vmatpush1.bf16.xpose.msra.mxu0 0
    %1647 = vmatprep.subr.bf16.mxu0 0
    %1648 = vmatpush1.bf16.xpose.msra.mxu0 0
    %1649 = vmatprep.subr.bf16.mxu0 0
    %1650 = vmatpush1.bf16.xpose.msra.mxu0 0
    %1651 = vmatprep.subr.bf16.mxu0 0
    %1652 = vmatpush1.bf16.xpose.msra.mxu0 0
    %1653 = vmatprep.mubr.bf16.mxu0 0
    %1654 = vmatmul.mubr.bf16.gmra.mrb[0].mxu0 %v1616
    %v1655 = vpop.f32.mrb[0].mxu0
    %v1656 = vadd.f32 0.0, %v1655
    %v1657 = vpop.f32.mrb[0].mxu0
    %v1658 = vpop.f32.mrb[0].mxu0
    %v1659 = vpop.f32.mrb[0].mxu0
    %1660 = vdwg.mxu0
    %1662 = vrot.lane.b32.xlu0 %v1557, 96
    %v1663 = vpop.permute.xlu0 %1662
    %v1665 = vsel %vm246, %v1557, 0
    %v1668 = vsel %vm246, %v1663, 0
    %1670 = vmatprep.subr.bf16.mxu0 0
    %1671 = vmatpush1.bf16.xpose.msra.mxu0 %v1668
    %1672 = vmatprep.subr.bf16.mxu0 0
    %1673 = vmatpush1.bf16.xpose.msra.mxu0 0
    %1674 = vmatprep.subr.bf16.mxu0 0
    %1675 = vmatpush1.bf16.xpose.msra.mxu0 0
    %1676 = vmatprep.subr.bf16.mxu0 0
    %1677 = vmatpush1.bf16.xpose.msra.mxu0 0
    %1678 = vmatprep.subr.bf16.mxu0 0
    %1679 = vmatpush1.bf16.xpose.msra.mxu0 0
    %1680 = vmatprep.subr.bf16.mxu0 0
    %1681 = vmatpush1.bf16.xpose.msra.mxu0 0
    %1682 = vmatprep.subr.bf16.mxu0 0
    %1683 = vmatpush1.bf16.xpose.msra.mxu0 0
    %1684 = vmatprep.subr.bf16.mxu0 0
    %1685 = vmatpush1.bf16.xpose.msra.mxu0 0
    %1686 = vmatprep.subr.bf16.mxu0 0
    %1687 = vmatpush1.bf16.xpose.msra.mxu0 0
    %1688 = vmatprep.subr.bf16.mxu0 0
    %1689 = vmatpush1.bf16.xpose.msra.mxu0 0
    %1690 = vmatprep.subr.bf16.mxu0 0
    %1691 = vmatpush1.bf16.xpose.msra.mxu0 0
    %1692 = vmatprep.subr.bf16.mxu0 0
    %1693 = vmatpush1.bf16.xpose.msra.mxu0 0
    %1694 = vmatprep.subr.bf16.mxu0 0
    %1695 = vmatpush1.bf16.xpose.msra.mxu0 0
    %1696 = vmatprep.subr.bf16.mxu0 0
    %1697 = vmatpush1.bf16.xpose.msra.mxu0 0
    %1698 = vmatprep.subr.bf16.mxu0 0
    %1699 = vmatpush1.bf16.xpose.msra.mxu0 0
    %1700 = vmatprep.subr.bf16.mxu0 0
    %1701 = vmatpush1.bf16.xpose.msra.mxu0 0
    %1702 = vmatprep.mubr.bf16.mxu0 0
    %1703 = vmatmul.mubr.bf16.gmra.mrb[0].mxu0 %v1665
    %v1704 = vpop.f32.mrb[0].mxu0
    %v1705 = vadd.f32 0.0, %v1704
    %v1706 = vpop.f32.mrb[0].mxu0
    %v1707 = vpop.f32.mrb[0].mxu0
    %v1708 = vpop.f32.mrb[0].mxu0
    %1709 = vdwg.mxu0
    %1711 = vrot.lane.b32.xlu0 %v1558, 96
    %v1712 = vpop.permute.xlu0 %1711
    %v1714 = vsel %vm246, %v1558, 0
    %v1717 = vsel %vm246, %v1712, 0
    %1719 = vmatprep.subr.bf16.mxu0 0
    %1720 = vmatpush1.bf16.xpose.msra.mxu0 %v1717
    %1721 = vmatprep.subr.bf16.mxu0 0
    %1722 = vmatpush1.bf16.xpose.msra.mxu0 0
    %1723 = vmatprep.subr.bf16.mxu0 0
    %1724 = vmatpush1.bf16.xpose.msra.mxu0 0
    %1725 = vmatprep.subr.bf16.mxu0 0
    %1726 = vmatpush1.bf16.xpose.msra.mxu0 0
    %1727 = vmatprep.subr.bf16.mxu0 0
    %1728 = vmatpush1.bf16.xpose.msra.mxu0 0
    %1729 = vmatprep.subr.bf16.mxu0 0
    %1730 = vmatpush1.bf16.xpose.msra.mxu0 0
    %1731 = vmatprep.subr.bf16.mxu0 0
    %1732 = vmatpush1.bf16.xpose.msra.mxu0 0
    %1733 = vmatprep.subr.bf16.mxu0 0
    %1734 = vmatpush1.bf16.xpose.msra.mxu0 0
    %1735 = vmatprep.subr.bf16.mxu0 0
    %1736 = vmatpush1.bf16.xpose.msra.mxu0 0
    %1737 = vmatprep.subr.bf16.mxu0 0
    %1738 = vmatpush1.bf16.xpose.msra.mxu0 0
    %1739 = vmatprep.subr.bf16.mxu0 0
    %1740 = vmatpush1.bf16.xpose.msra.mxu0 0
    %1741 = vmatprep.subr.bf16.mxu0 0
    %1742 = vmatpush1.bf16.xpose.msra.mxu0 0
    %1743 = vmatprep.subr.bf16.mxu0 0
    %1744 = vmatpush1.bf16.xpose.msra.mxu0 0
    %1745 = vmatprep.subr.bf16.mxu0 0
    %1746 = vmatpush1.bf16.xpose.msra.mxu0 0
    %1747 = vmatprep.subr.bf16.mxu0 0
    %1748 = vmatpush1.bf16.xpose.msra.mxu0 0
    %1749 = vmatprep.subr.bf16.mxu0 0
    %1750 = vmatpush1.bf16.xpose.msra.mxu0 0
    %1751 = vmatprep.mubr.bf16.mxu0 0
    %1752 = vmatmul.mubr.bf16.gmra.mrb[0].mxu0 %v1714
    %v1753 = vpop.f32.mrb[0].mxu0
    %v1754 = vadd.f32 0.0, %v1753
    %v1755 = vpop.f32.mrb[0].mxu0
    %v1756 = vpop.f32.mrb[0].mxu0
    %v1757 = vpop.f32.mrb[0].mxu0
    %1758 = vdwg.mxu0
    %1760 = vrot.lane.b32.xlu0 %v1559, 96
    %v1761 = vpop.permute.xlu0 %1760
    %v1763 = vsel %vm246, %v1559, 0
    %v1766 = vsel %vm246, %v1761, 0
    %1768 = vmatprep.subr.bf16.mxu0 0
    %1769 = vmatpush1.bf16.xpose.msra.mxu0 %v1766
    %1770 = vmatprep.subr.bf16.mxu0 0
    %1771 = vmatpush1.bf16.xpose.msra.mxu0 0
    %1772 = vmatprep.subr.bf16.mxu0 0
    %1773 = vmatpush1.bf16.xpose.msra.mxu0 0
    %1774 = vmatprep.subr.bf16.mxu0 0
    %1775 = vmatpush1.bf16.xpose.msra.mxu0 0
    %1776 = vmatprep.subr.bf16.mxu0 0
    %1777 = vmatpush1.bf16.xpose.msra.mxu0 0
    %1778 = vmatprep.subr.bf16.mxu0 0
    %1779 = vmatpush1.bf16.xpose.msra.mxu0 0
    %1780 = vmatprep.subr.bf16.mxu0 0
    %1781 = vmatpush1.bf16.xpose.msra.mxu0 0
    %1782 = vmatprep.subr.bf16.mxu0 0
    %1783 = vmatpush1.bf16.xpose.msra.mxu0 0
    %1784 = vmatprep.subr.bf16.mxu0 0
    %1785 = vmatpush1.bf16.xpose.msra.mxu0 0
    %1786 = vmatprep.subr.bf16.mxu0 0
    %1787 = vmatpush1.bf16.xpose.msra.mxu0 0
    %1788 = vmatprep.subr.bf16.mxu0 0
    %1789 = vmatpush1.bf16.xpose.msra.mxu0 0
    %1790 = vmatprep.subr.bf16.mxu0 0
    %1791 = vmatpush1.bf16.xpose.msra.mxu0 0
    %1792 = vmatprep.subr.bf16.mxu0 0
    %1793 = vmatpush1.bf16.xpose.msra.mxu0 0
    %1794 = vmatprep.subr.bf16.mxu0 0
    %1795 = vmatpush1.bf16.xpose.msra.mxu0 0
    %1796 = vmatprep.subr.bf16.mxu0 0
    %1797 = vmatpush1.bf16.xpose.msra.mxu0 0
    %1798 = vmatprep.subr.bf16.mxu0 0
    %1799 = vmatpush1.bf16.xpose.msra.mxu0 0
    %1800 = vmatprep.mubr.bf16.mxu0 0
    %1801 = vmatmul.mubr.bf16.gmra.mrb[0].mxu0 %v1763
    %v1802 = vpop.f32.mrb[0].mxu0
    %v1803 = vadd.f32 0.0, %v1802
    %v1804 = vpop.f32.mrb[0].mxu0
    %v1805 = vpop.f32.mrb[0].mxu0
    %v1806 = vpop.f32.mrb[0].mxu0
    %1807 = vdwg.mxu0
    %1809 = vrot.lane.b32.xlu0 %v1560, 96
    %v1810 = vpop.permute.xlu0 %1809
    %v1812 = vsel %vm246, %v1560, 0
    %v1815 = vsel %vm246, %v1810, 0
    %1817 = vmatprep.subr.bf16.mxu0 0
    %1818 = vmatpush1.bf16.xpose.msra.mxu0 %v1815
    %1819 = vmatprep.subr.bf16.mxu0 0
    %1820 = vmatpush1.bf16.xpose.msra.mxu0 0
    %1821 = vmatprep.subr.bf16.mxu0 0
    %1822 = vmatpush1.bf16.xpose.msra.mxu0 0
    %1823 = vmatprep.subr.bf16.mxu0 0
    %1824 = vmatpush1.bf16.xpose.msra.mxu0 0
    %1825 = vmatprep.subr.bf16.mxu0 0
    %1826 = vmatpush1.bf16.xpose.msra.mxu0 0
    %1827 = vmatprep.subr.bf16.mxu0 0
    %1828 = vmatpush1.bf16.xpose.msra.mxu0 0
    %1829 = vmatprep.subr.bf16.mxu0 0
    %1830 = vmatpush1.bf16.xpose.msra.mxu0 0
    %1831 = vmatprep.subr.bf16.mxu0 0
    %1832 = vmatpush1.bf16.xpose.msra.mxu0 0
    %1833 = vmatprep.subr.bf16.mxu0 0
    %1834 = vmatpush1.bf16.xpose.msra.mxu0 0
    %1835 = vmatprep.subr.bf16.mxu0 0
    %1836 = vmatpush1.bf16.xpose.msra.mxu0 0
    %1837 = vmatprep.subr.bf16.mxu0 0
    %1838 = vmatpush1.bf16.xpose.msra.mxu0 0
    %1839 = vmatprep.subr.bf16.mxu0 0
    %1840 = vmatpush1.bf16.xpose.msra.mxu0 0
    %1841 = vmatprep.subr.bf16.mxu0 0
    %1842 = vmatpush1.bf16.xpose.msra.mxu0 0
    %1843 = vmatprep.subr.bf16.mxu0 0
    %1844 = vmatpush1.bf16.xpose.msra.mxu0 0
    %1845 = vmatprep.subr.bf16.mxu0 0
    %1846 = vmatpush1.bf16.xpose.msra.mxu0 0
    %1847 = vmatprep.subr.bf16.mxu0 0
    %1848 = vmatpush1.bf16.xpose.msra.mxu0 0
    %1849 = vmatprep.mubr.bf16.mxu0 0
    %1850 = vmatmul.mubr.bf16.gmra.mrb[0].mxu0 %v1812
    %v1851 = vpop.f32.mrb[0].mxu0
    %v1852 = vadd.f32 0.0, %v1851
    %v1853 = vpop.f32.mrb[0].mxu0
    %v1854 = vpop.f32.mrb[0].mxu0
    %v1855 = vpop.f32.mrb[0].mxu0
    %1856 = vdwg.mxu0
    %1858 = vrot.lane.b32.xlu0 %v1561, 96
    %v1859 = vpop.permute.xlu0 %1858
    %v1861 = vsel %vm246, %v1561, 0
    %v1864 = vsel %vm246, %v1859, 0
    %1866 = vmatprep.subr.bf16.mxu0 0
    %1867 = vmatpush1.bf16.xpose.msra.mxu0 %v1864
    %1868 = vmatprep.subr.bf16.mxu0 0
    %1869 = vmatpush1.bf16.xpose.msra.mxu0 0
    %1870 = vmatprep.subr.bf16.mxu0 0
    %1871 = vmatpush1.bf16.xpose.msra.mxu0 0
    %1872 = vmatprep.subr.bf16.mxu0 0
    %1873 = vmatpush1.bf16.xpose.msra.mxu0 0
    %1874 = vmatprep.subr.bf16.mxu0 0
    %1875 = vmatpush1.bf16.xpose.msra.mxu0 0
    %1876 = vmatprep.subr.bf16.mxu0 0
    %1877 = vmatpush1.bf16.xpose.msra.mxu0 0
    %1878 = vmatprep.subr.bf16.mxu0 0
    %1879 = vmatpush1.bf16.xpose.msra.mxu0 0
    %1880 = vmatprep.subr.bf16.mxu0 0
    %1881 = vmatpush1.bf16.xpose.msra.mxu0 0
    %1882 = vmatprep.subr.bf16.mxu0 0
    %1883 = vmatpush1.bf16.xpose.msra.mxu0 0
    %1884 = vmatprep.subr.bf16.mxu0 0
    %1885 = vmatpush1.bf16.xpose.msra.mxu0 0
    %1886 = vmatprep.subr.bf16.mxu0 0
    %1887 = vmatpush1.bf16.xpose.msra.mxu0 0
    %1888 = vmatprep.subr.bf16.mxu0 0
    %1889 = vmatpush1.bf16.xpose.msra.mxu0 0
    %1890 = vmatprep.subr.bf16.mxu0 0
    %1891 = vmatpush1.bf16.xpose.msra.mxu0 0
    %1892 = vmatprep.subr.bf16.mxu0 0
    %1893 = vmatpush1.bf16.xpose.msra.mxu0 0
    %1894 = vmatprep.subr.bf16.mxu0 0
    %1895 = vmatpush1.bf16.xpose.msra.mxu0 0
    %1896 = vmatprep.subr.bf16.mxu0 0
    %1897 = vmatpush1.bf16.xpose.msra.mxu0 0
    %1898 = vmatprep.mubr.bf16.mxu0 0
    %1899 = vmatmul.mubr.bf16.gmra.mrb[0].mxu0 %v1861
    %v1900 = vpop.f32.mrb[0].mxu0
    %v1901 = vadd.f32 0.0, %v1900
    %v1902 = vpop.f32.mrb[0].mxu0
    %v1903 = vpop.f32.mrb[0].mxu0
    %v1904 = vpop.f32.mrb[0].mxu0
    %1905 = vdwg.mxu0
    %1907 = vrot.lane.b32.xlu0 %v1562, 96
    %v1908 = vpop.permute.xlu0 %1907
    %v1910 = vsel %vm246, %v1562, 0
    %v1913 = vsel %vm246, %v1908, 0
    %1915 = vmatprep.subr.bf16.mxu0 0
    %1916 = vmatpush1.bf16.xpose.msra.mxu0 %v1913
    %1917 = vmatprep.subr.bf16.mxu0 0
    %1918 = vmatpush1.bf16.xpose.msra.mxu0 0
    %1919 = vmatprep.subr.bf16.mxu0 0
    %1920 = vmatpush1.bf16.xpose.msra.mxu0 0
    %1921 = vmatprep.subr.bf16.mxu0 0
    %1922 = vmatpush1.bf16.xpose.msra.mxu0 0
    %1923 = vmatprep.subr.bf16.mxu0 0
    %1924 = vmatpush1.bf16.xpose.msra.mxu0 0
    %1925 = vmatprep.subr.bf16.mxu0 0
    %1926 = vmatpush1.bf16.xpose.msra.mxu0 0
    %1927 = vmatprep.subr.bf16.mxu0 0
    %1928 = vmatpush1.bf16.xpose.msra.mxu0 0
    %1929 = vmatprep.subr.bf16.mxu0 0
    %1930 = vmatpush1.bf16.xpose.msra.mxu0 0
    %1931 = vmatprep.subr.bf16.mxu0 0
    %1932 = vmatpush1.bf16.xpose.msra.mxu0 0
    %1933 = vmatprep.subr.bf16.mxu0 0
    %1934 = vmatpush1.bf16.xpose.msra.mxu0 0
    %1935 = vmatprep.subr.bf16.mxu0 0
    %1936 = vmatpush1.bf16.xpose.msra.mxu0 0
    %1937 = vmatprep.subr.bf16.mxu0 0
    %1938 = vmatpush1.bf16.xpose.msra.mxu0 0
    %1939 = vmatprep.subr.bf16.mxu0 0
    %1940 = vmatpush1.bf16.xpose.msra.mxu0 0
    %1941 = vmatprep.subr.bf16.mxu0 0
    %1942 = vmatpush1.bf16.xpose.msra.mxu0 0
    %1943 = vmatprep.subr.bf16.mxu0 0
    %1944 = vmatpush1.bf16.xpose.msra.mxu0 0
    %1945 = vmatprep.subr.bf16.mxu0 0
    %1946 = vmatpush1.bf16.xpose.msra.mxu0 0
    %1947 = vmatprep.mubr.bf16.mxu0 0
    %1948 = vmatmul.mubr.bf16.gmra.mrb[0].mxu0 %v1910
    %v1949 = vpop.f32.mrb[0].mxu0
    %v1950 = vadd.f32 0.0, %v1949
    %v1951 = vpop.f32.mrb[0].mxu0
    %v1952 = vpop.f32.mrb[0].mxu0
    %v1953 = vpop.f32.mrb[0].mxu0
    %1954 = vdwg.mxu0
    %v1955 = vsel %vm246, %v1607, -inf
    %1956 = vmax.xlane.f32.xlu0 %v1955
    %v1957 = vpop.xlane.xlu0 %1956
    %v1958 = vsel %vm246, %v1656, -inf
    %1959 = vmax.xlane.f32.xlu0 %v1958
    %v1960 = vpop.xlane.xlu0 %1959
    %v1961 = vsel %vm246, %v1705, -inf
    %1962 = vmax.xlane.f32.xlu0 %v1961
    %v1963 = vpop.xlane.xlu0 %1962
    %v1964 = vsel %vm246, %v1754, -inf
    %1965 = vmax.xlane.f32.xlu0 %v1964
    %v1966 = vpop.xlane.xlu0 %1965
    %v1967 = vsel %vm246, %v1803, -inf
    %1968 = vmax.xlane.f32.xlu0 %v1967
    %v1969 = vpop.xlane.xlu0 %1968
    %v1970 = vsel %vm246, %v1852, -inf
    %1971 = vmax.xlane.f32.xlu0 %v1970
    %v1972 = vpop.xlane.xlu0 %1971
    %v1973 = vsel %vm246, %v1901, -inf
    %1974 = vmax.xlane.f32.xlu0 %v1973
    %v1975 = vpop.xlane.xlu0 %1974
    %v1976 = vsel %vm246, %v1950, -inf
    %1977 = vmax.xlane.f32.xlu0 %v1976
    %v1978 = vpop.xlane.xlu0 %1977
    %v1979 = vsub.f32 %v1607, %v1957
    %v1980 = vsub.f32 %v1656, %v1960
    %v1981 = vsub.f32 %v1705, %v1963
    %v1982 = vsub.f32 %v1754, %v1966
    %v1983 = vsub.f32 %v1803, %v1969
    %v1984 = vsub.f32 %v1852, %v1972
    %v1985 = vsub.f32 %v1901, %v1975
    %v1986 = vsub.f32 %v1950, %v1978
    %v1987 = vmul.f32 %v1979, 1.442695
    %v1988 = vpow.pop %v1987
    %v1989 = vmul.f32 %v1980, 1.442695
    %v1990 = vpow.pop %v1989
    %v1991 = vmul.f32 %v1981, 1.442695
    %v1992 = vpow.pop %v1991
    %v1993 = vmul.f32 %v1982, 1.442695
    %v1994 = vpow.pop %v1993
    %v1995 = vmul.f32 %v1983, 1.442695
    %v1996 = vpow.pop %v1995
    %v1997 = vmul.f32 %v1984, 1.442695
    %v1998 = vpow.pop %v1997
    %v1999 = vmul.f32 %v1985, 1.442695
    %v2000 = vpow.pop %v1999
    %v2001 = vmul.f32 %v1986, 1.442695
    %v2002 = vpow.pop %v2001
    %v2003 = vsel %vm246, %v1988, 0.0
    %2004 = vadd.xlane.f32.xlu0 %v2003
    %v2005 = vpop.xlane.xlu0 %2004
    %v2006 = vsel %vm246, %v1990, 0.0
    %2007 = vadd.xlane.f32.xlu0 %v2006
    %v2008 = vpop.xlane.xlu0 %2007
    %v2009 = vsel %vm246, %v1992, 0.0
    %2010 = vadd.xlane.f32.xlu0 %v2009
    %v2011 = vpop.xlane.xlu0 %2010
    %v2012 = vsel %vm246, %v1994, 0.0
    %2013 = vadd.xlane.f32.xlu0 %v2012
    %v2014 = vpop.xlane.xlu0 %2013
    %v2015 = vsel %vm246, %v1996, 0.0
    %2016 = vadd.xlane.f32.xlu0 %v2015
    %v2017 = vpop.xlane.xlu0 %2016
    %v2018 = vsel %vm246, %v1998, 0.0
    %2019 = vadd.xlane.f32.xlu0 %v2018
    %v2020 = vpop.xlane.xlu0 %2019
    %v2021 = vsel %vm246, %v2000, 0.0
    %2022 = vadd.xlane.f32.xlu0 %v2021
    %v2023 = vpop.xlane.xlu0 %2022
    %v2024 = vsel %vm246, %v2002, 0.0
    %2025 = vadd.xlane.f32.xlu0 %v2024
    %v2026 = vpop.xlane.xlu0 %2025
    %v2027 = vrcp.pop %v2005
    %v2028 = vrcp.pop %v2008
    %v2029 = vrcp.pop %v2011
    %v2030 = vrcp.pop %v2014
    %v2031 = vrcp.pop %v2017
    %v2032 = vrcp.pop %v2020
    %v2033 = vrcp.pop %v2023
    %v2034 = vrcp.pop %v2026
    %v2035 = vmul.f32 %v1988, %v2027
    %v2036 = vmul.f32 %v1990, %v2028
    %v2037 = vmul.f32 %v1992, %v2029
    %v2038 = vmul.f32 %v1994, %v2030
    %v2039 = vmul.f32 %v1996, %v2031
    %v2040 = vmul.f32 %v1998, %v2032
    %v2041 = vmul.f32 %v2000, %v2033
    %v2042 = vmul.f32 %v2002, %v2034
    %v2043 = vpack.c.bf16 %v2035, %v2035
    %v2044 = vpack.c.bf16 %v2036, %v2036
    %v2045 = vpack.c.bf16 %v2037, %v2037
    %v2046 = vpack.c.bf16 %v2038, %v2038
    %v2047 = vpack.c.bf16 %v2039, %v2039
    %v2048 = vpack.c.bf16 %v2040, %v2040
    %v2049 = vpack.c.bf16 %v2041, %v2041
    %v2050 = vpack.c.bf16 %v2042, %v2042
    %2051 = vrot.lane.b32.xlu0 %v1555, 64
    %v2052 = vpop.permute.xlu0 %2051
    %v2054 = vsel %vm246, %v2043, 0
    %v2057 = vsel %vm737, %v2052, 0
    %2059 = vmatprep.subr.bf16.mxu0 0
    %2060 = vmatpush1.bf16.msra.mxu0 %v2057
    %2061 = vmatprep.subr.bf16.mxu0 0
    %2062 = vmatpush1.bf16.msra.mxu0 0
    %2063 = vmatprep.subr.bf16.mxu0 0
    %2064 = vmatpush1.bf16.msra.mxu0 0
    %2065 = vmatprep.subr.bf16.mxu0 0
    %2066 = vmatpush1.bf16.msra.mxu0 0
    %2067 = vmatprep.subr.bf16.mxu0 0
    %2068 = vmatpush1.bf16.msra.mxu0 0
    %2069 = vmatprep.subr.bf16.mxu0 0
    %2070 = vmatpush1.bf16.msra.mxu0 0
    %2071 = vmatprep.subr.bf16.mxu0 0
    %2072 = vmatpush1.bf16.msra.mxu0 0
    %2073 = vmatprep.subr.bf16.mxu0 0
    %2074 = vmatpush1.bf16.msra.mxu0 0
    %2075 = vmatprep.subr.bf16.mxu0 0
    %2076 = vmatpush1.bf16.msra.mxu0 0
    %2077 = vmatprep.subr.bf16.mxu0 0
    %2078 = vmatpush1.bf16.msra.mxu0 0
    %2079 = vmatprep.subr.bf16.mxu0 0
    %2080 = vmatpush1.bf16.msra.mxu0 0
    %2081 = vmatprep.subr.bf16.mxu0 0
    %2082 = vmatpush1.bf16.msra.mxu0 0
    %2083 = vmatprep.subr.bf16.mxu0 0
    %2084 = vmatpush1.bf16.msra.mxu0 0
    %2085 = vmatprep.subr.bf16.mxu0 0
    %2086 = vmatpush1.bf16.msra.mxu0 0
    %2087 = vmatprep.subr.bf16.mxu0 0
    %2088 = vmatpush1.bf16.msra.mxu0 0
    %2089 = vmatprep.subr.bf16.mxu0 0
    %2090 = vmatpush1.bf16.msra.mxu0 0
    %2091 = vmatprep.mubr.bf16.mxu0 0
    %2092 = vmatmul.mubr.bf16.gmra.mrb[0].mxu0 %v2054
    %v2093 = vpop.f32.mrb[0].mxu0
    %v2094 = vadd.f32 0.0, %v2093
    %v2095 = vpop.f32.mrb[0].mxu0
    %v2096 = vpop.f32.mrb[0].mxu0
    %v2097 = vpop.f32.mrb[0].mxu0
    %2098 = vdwg.mxu0
    %2099 = vrot.lane.b32.xlu0 %v1556, 64
    %v2100 = vpop.permute.xlu0 %2099
    %v2102 = vsel %vm246, %v2044, 0
    %v2105 = vsel %vm737, %v2100, 0
    %2107 = vmatprep.subr.bf16.mxu0 0
    %2108 = vmatpush1.bf16.msra.mxu0 %v2105
    %2109 = vmatprep.subr.bf16.mxu0 0
    %2110 = vmatpush1.bf16.msra.mxu0 0
    %2111 = vmatprep.subr.bf16.mxu0 0
    %2112 = vmatpush1.bf16.msra.mxu0 0
    %2113 = vmatprep.subr.bf16.mxu0 0
    %2114 = vmatpush1.bf16.msra.mxu0 0
    %2115 = vmatprep.subr.bf16.mxu0 0
    %2116 = vmatpush1.bf16.msra.mxu0 0
    %2117 = vmatprep.subr.bf16.mxu0 0
    %2118 = vmatpush1.bf16.msra.mxu0 0
    %2119 = vmatprep.subr.bf16.mxu0 0
    %2120 = vmatpush1.bf16.msra.mxu0 0
    %2121 = vmatprep.subr.bf16.mxu0 0
    %2122 = vmatpush1.bf16.msra.mxu0 0
    %2123 = vmatprep.subr.bf16.mxu0 0
    %2124 = vmatpush1.bf16.msra.mxu0 0
    %2125 = vmatprep.subr.bf16.mxu0 0
    %2126 = vmatpush1.bf16.msra.mxu0 0
    %2127 = vmatprep.subr.bf16.mxu0 0
    %2128 = vmatpush1.bf16.msra.mxu0 0
    %2129 = vmatprep.subr.bf16.mxu0 0
    %2130 = vmatpush1.bf16.msra.mxu0 0
    %2131 = vmatprep.subr.bf16.mxu0 0
    %2132 = vmatpush1.bf16.msra.mxu0 0
    %2133 = vmatprep.subr.bf16.mxu0 0
    %2134 = vmatpush1.bf16.msra.mxu0 0
    %2135 = vmatprep.subr.bf16.mxu0 0
    %2136 = vmatpush1.bf16.msra.mxu0 0
    %2137 = vmatprep.subr.bf16.mxu0 0
    %2138 = vmatpush1.bf16.msra.mxu0 0
    %2139 = vmatprep.mubr.bf16.mxu0 0
    %2140 = vmatmul.mubr.bf16.gmra.mrb[0].mxu0 %v2102
    %v2141 = vpop.f32.mrb[0].mxu0
    %v2142 = vadd.f32 0.0, %v2141
    %v2143 = vpop.f32.mrb[0].mxu0
    %v2144 = vpop.f32.mrb[0].mxu0
    %v2145 = vpop.f32.mrb[0].mxu0
    %2146 = vdwg.mxu0
    %2147 = vrot.lane.b32.xlu0 %v1557, 64
    %v2148 = vpop.permute.xlu0 %2147
    %v2150 = vsel %vm246, %v2045, 0
    %v2153 = vsel %vm737, %v2148, 0
    %2155 = vmatprep.subr.bf16.mxu0 0
    %2156 = vmatpush1.bf16.msra.mxu0 %v2153
    %2157 = vmatprep.subr.bf16.mxu0 0
    %2158 = vmatpush1.bf16.msra.mxu0 0
    %2159 = vmatprep.subr.bf16.mxu0 0
    %2160 = vmatpush1.bf16.msra.mxu0 0
    %2161 = vmatprep.subr.bf16.mxu0 0
    %2162 = vmatpush1.bf16.msra.mxu0 0
    %2163 = vmatprep.subr.bf16.mxu0 0
    %2164 = vmatpush1.bf16.msra.mxu0 0
    %2165 = vmatprep.subr.bf16.mxu0 0
    %2166 = vmatpush1.bf16.msra.mxu0 0
    %2167 = vmatprep.subr.bf16.mxu0 0
    %2168 = vmatpush1.bf16.msra.mxu0 0
    %2169 = vmatprep.subr.bf16.mxu0 0
    %2170 = vmatpush1.bf16.msra.mxu0 0
    %2171 = vmatprep.subr.bf16.mxu0 0
    %2172 = vmatpush1.bf16.msra.mxu0 0
    %2173 = vmatprep.subr.bf16.mxu0 0
    %2174 = vmatpush1.bf16.msra.mxu0 0
    %2175 = vmatprep.subr.bf16.mxu0 0
    %2176 = vmatpush1.bf16.msra.mxu0 0
    %2177 = vmatprep.subr.bf16.mxu0 0
    %2178 = vmatpush1.bf16.msra.mxu0 0
    %2179 = vmatprep.subr.bf16.mxu0 0
    %2180 = vmatpush1.bf16.msra.mxu0 0
    %2181 = vmatprep.subr.bf16.mxu0 0
    %2182 = vmatpush1.bf16.msra.mxu0 0
    %2183 = vmatprep.subr.bf16.mxu0 0
    %2184 = vmatpush1.bf16.msra.mxu0 0
    %2185 = vmatprep.subr.bf16.mxu0 0
    %2186 = vmatpush1.bf16.msra.mxu0 0
    %2187 = vmatprep.mubr.bf16.mxu0 0
    %2188 = vmatmul.mubr.bf16.gmra.mrb[0].mxu0 %v2150
    %v2189 = vpop.f32.mrb[0].mxu0
    %v2190 = vadd.f32 0.0, %v2189
    %v2191 = vpop.f32.mrb[0].mxu0
    %v2192 = vpop.f32.mrb[0].mxu0
    %v2193 = vpop.f32.mrb[0].mxu0
    %2194 = vdwg.mxu0
    %2195 = vrot.lane.b32.xlu0 %v1558, 64
    %v2196 = vpop.permute.xlu0 %2195
    %v2198 = vsel %vm246, %v2046, 0
    %v2201 = vsel %vm737, %v2196, 0
    %2203 = vmatprep.subr.bf16.mxu0 0
    %2204 = vmatpush1.bf16.msra.mxu0 %v2201
    %2205 = vmatprep.subr.bf16.mxu0 0
    %2206 = vmatpush1.bf16.msra.mxu0 0
    %2207 = vmatprep.subr.bf16.mxu0 0
    %2208 = vmatpush1.bf16.msra.mxu0 0
    %2209 = vmatprep.subr.bf16.mxu0 0
    %2210 = vmatpush1.bf16.msra.mxu0 0
    %2211 = vmatprep.subr.bf16.mxu0 0
    %2212 = vmatpush1.bf16.msra.mxu0 0
    %2213 = vmatprep.subr.bf16.mxu0 0
    %2214 = vmatpush1.bf16.msra.mxu0 0
    %2215 = vmatprep.subr.bf16.mxu0 0
    %2216 = vmatpush1.bf16.msra.mxu0 0
    %2217 = vmatprep.subr.bf16.mxu0 0
    %2218 = vmatpush1.bf16.msra.mxu0 0
    %2219 = vmatprep.subr.bf16.mxu0 0
    %2220 = vmatpush1.bf16.msra.mxu0 0
    %2221 = vmatprep.subr.bf16.mxu0 0
    %2222 = vmatpush1.bf16.msra.mxu0 0
    %2223 = vmatprep.subr.bf16.mxu0 0
    %2224 = vmatpush1.bf16.msra.mxu0 0
    %2225 = vmatprep.subr.bf16.mxu0 0
    %2226 = vmatpush1.bf16.msra.mxu0 0
    %2227 = vmatprep.subr.bf16.mxu0 0
    %2228 = vmatpush1.bf16.msra.mxu0 0
    %2229 = vmatprep.subr.bf16.mxu0 0
    %2230 = vmatpush1.bf16.msra.mxu0 0
    %2231 = vmatprep.subr.bf16.mxu0 0
    %2232 = vmatpush1.bf16.msra.mxu0 0
    %2233 = vmatprep.subr.bf16.mxu0 0
    %2234 = vmatpush1.bf16.msra.mxu0 0
    %2235 = vmatprep.mubr.bf16.mxu0 0
    %2236 = vmatmul.mubr.bf16.gmra.mrb[0].mxu0 %v2198
    %v2237 = vpop.f32.mrb[0].mxu0
    %v2238 = vadd.f32 0.0, %v2237
    %v2239 = vpop.f32.mrb[0].mxu0
    %v2240 = vpop.f32.mrb[0].mxu0
    %v2241 = vpop.f32.mrb[0].mxu0
    %2242 = vdwg.mxu0
    %2243 = vrot.lane.b32.xlu0 %v1559, 64
    %v2244 = vpop.permute.xlu0 %2243
    %v2246 = vsel %vm246, %v2047, 0
    %v2249 = vsel %vm737, %v2244, 0
    %2251 = vmatprep.subr.bf16.mxu0 0
    %2252 = vmatpush1.bf16.msra.mxu0 %v2249
    %2253 = vmatprep.subr.bf16.mxu0 0
    %2254 = vmatpush1.bf16.msra.mxu0 0
    %2255 = vmatprep.subr.bf16.mxu0 0
    %2256 = vmatpush1.bf16.msra.mxu0 0
    %2257 = vmatprep.subr.bf16.mxu0 0
    %2258 = vmatpush1.bf16.msra.mxu0 0
    %2259 = vmatprep.subr.bf16.mxu0 0
    %2260 = vmatpush1.bf16.msra.mxu0 0
    %2261 = vmatprep.subr.bf16.mxu0 0
    %2262 = vmatpush1.bf16.msra.mxu0 0
    %2263 = vmatprep.subr.bf16.mxu0 0
    %2264 = vmatpush1.bf16.msra.mxu0 0
    %2265 = vmatprep.subr.bf16.mxu0 0
    %2266 = vmatpush1.bf16.msra.mxu0 0
    %2267 = vmatprep.subr.bf16.mxu0 0
    %2268 = vmatpush1.bf16.msra.mxu0 0
    %2269 = vmatprep.subr.bf16.mxu0 0
    %2270 = vmatpush1.bf16.msra.mxu0 0
    %2271 = vmatprep.subr.bf16.mxu0 0
    %2272 = vmatpush1.bf16.msra.mxu0 0
    %2273 = vmatprep.subr.bf16.mxu0 0
    %2274 = vmatpush1.bf16.msra.mxu0 0
    %2275 = vmatprep.subr.bf16.mxu0 0
    %2276 = vmatpush1.bf16.msra.mxu0 0
    %2277 = vmatprep.subr.bf16.mxu0 0
    %2278 = vmatpush1.bf16.msra.mxu0 0
    %2279 = vmatprep.subr.bf16.mxu0 0
    %2280 = vmatpush1.bf16.msra.mxu0 0
    %2281 = vmatprep.subr.bf16.mxu0 0
    %2282 = vmatpush1.bf16.msra.mxu0 0
    %2283 = vmatprep.mubr.bf16.mxu0 0
    %2284 = vmatmul.mubr.bf16.gmra.mrb[0].mxu0 %v2246
    %v2285 = vpop.f32.mrb[0].mxu0
    %v2286 = vadd.f32 0.0, %v2285
    %v2287 = vpop.f32.mrb[0].mxu0
    %v2288 = vpop.f32.mrb[0].mxu0
    %v2289 = vpop.f32.mrb[0].mxu0
    %2290 = vdwg.mxu0
    %2291 = vrot.lane.b32.xlu0 %v1560, 64
    %v2292 = vpop.permute.xlu0 %2291
    %v2294 = vsel %vm246, %v2048, 0
    %v2297 = vsel %vm737, %v2292, 0
    %2299 = vmatprep.subr.bf16.mxu0 0
    %2300 = vmatpush1.bf16.msra.mxu0 %v2297
    %2301 = vmatprep.subr.bf16.mxu0 0
    %2302 = vmatpush1.bf16.msra.mxu0 0
    %2303 = vmatprep.subr.bf16.mxu0 0
    %2304 = vmatpush1.bf16.msra.mxu0 0
    %2305 = vmatprep.subr.bf16.mxu0 0
    %2306 = vmatpush1.bf16.msra.mxu0 0
    %2307 = vmatprep.subr.bf16.mxu0 0
    %2308 = vmatpush1.bf16.msra.mxu0 0
    %2309 = vmatprep.subr.bf16.mxu0 0
    %2310 = vmatpush1.bf16.msra.mxu0 0
    %2311 = vmatprep.subr.bf16.mxu0 0
    %2312 = vmatpush1.bf16.msra.mxu0 0
    %2313 = vmatprep.subr.bf16.mxu0 0
    %2314 = vmatpush1.bf16.msra.mxu0 0
    %2315 = vmatprep.subr.bf16.mxu0 0
    %2316 = vmatpush1.bf16.msra.mxu0 0
    %2317 = vmatprep.subr.bf16.mxu0 0
    %2318 = vmatpush1.bf16.msra.mxu0 0
    %2319 = vmatprep.subr.bf16.mxu0 0
    %2320 = vmatpush1.bf16.msra.mxu0 0
    %2321 = vmatprep.subr.bf16.mxu0 0
    %2322 = vmatpush1.bf16.msra.mxu0 0
    %2323 = vmatprep.subr.bf16.mxu0 0
    %2324 = vmatpush1.bf16.msra.mxu0 0
    %2325 = vmatprep.subr.bf16.mxu0 0
    %2326 = vmatpush1.bf16.msra.mxu0 0
    %2327 = vmatprep.subr.bf16.mxu0 0
    %2328 = vmatpush1.bf16.msra.mxu0 0
    %2329 = vmatprep.subr.bf16.mxu0 0
    %2330 = vmatpush1.bf16.msra.mxu0 0
    %2331 = vmatprep.mubr.bf16.mxu0 0
    %2332 = vmatmul.mubr.bf16.gmra.mrb[0].mxu0 %v2294
    %v2333 = vpop.f32.mrb[0].mxu0
    %v2334 = vadd.f32 0.0, %v2333
    %v2335 = vpop.f32.mrb[0].mxu0
    %v2336 = vpop.f32.mrb[0].mxu0
    %v2337 = vpop.f32.mrb[0].mxu0
    %2338 = vdwg.mxu0
    %2339 = vrot.lane.b32.xlu0 %v1561, 64
    %v2340 = vpop.permute.xlu0 %2339
    %v2342 = vsel %vm246, %v2049, 0
    %v2345 = vsel %vm737, %v2340, 0
    %2347 = vmatprep.subr.bf16.mxu0 0
    %2348 = vmatpush1.bf16.msra.mxu0 %v2345
    %2349 = vmatprep.subr.bf16.mxu0 0
    %2350 = vmatpush1.bf16.msra.mxu0 0
    %2351 = vmatprep.subr.bf16.mxu0 0
    %2352 = vmatpush1.bf16.msra.mxu0 0
    %2353 = vmatprep.subr.bf16.mxu0 0
    %2354 = vmatpush1.bf16.msra.mxu0 0
    %2355 = vmatprep.subr.bf16.mxu0 0
    %2356 = vmatpush1.bf16.msra.mxu0 0
    %2357 = vmatprep.subr.bf16.mxu0 0
    %2358 = vmatpush1.bf16.msra.mxu0 0
    %2359 = vmatprep.subr.bf16.mxu0 0
    %2360 = vmatpush1.bf16.msra.mxu0 0
    %2361 = vmatprep.subr.bf16.mxu0 0
    %2362 = vmatpush1.bf16.msra.mxu0 0
    %2363 = vmatprep.subr.bf16.mxu0 0
    %2364 = vmatpush1.bf16.msra.mxu0 0
    %2365 = vmatprep.subr.bf16.mxu0 0
    %2366 = vmatpush1.bf16.msra.mxu0 0
    %2367 = vmatprep.subr.bf16.mxu0 0
    %2368 = vmatpush1.bf16.msra.mxu0 0
    %2369 = vmatprep.subr.bf16.mxu0 0
    %2370 = vmatpush1.bf16.msra.mxu0 0
    %2371 = vmatprep.subr.bf16.mxu0 0
    %2372 = vmatpush1.bf16.msra.mxu0 0
    %2373 = vmatprep.subr.bf16.mxu0 0
    %2374 = vmatpush1.bf16.msra.mxu0 0
    %2375 = vmatprep.subr.bf16.mxu0 0
    %2376 = vmatpush1.bf16.msra.mxu0 0
    %2377 = vmatprep.subr.bf16.mxu0 0
    %2378 = vmatpush1.bf16.msra.mxu0 0
    %2379 = vmatprep.mubr.bf16.mxu0 0
    %2380 = vmatmul.mubr.bf16.gmra.mrb[0].mxu0 %v2342
    %v2381 = vpop.f32.mrb[0].mxu0
    %v2382 = vadd.f32 0.0, %v2381
    %v2383 = vpop.f32.mrb[0].mxu0
    %v2384 = vpop.f32.mrb[0].mxu0
    %v2385 = vpop.f32.mrb[0].mxu0
    %2386 = vdwg.mxu0
    %2387 = vrot.lane.b32.xlu0 %v1562, 64
    %v2388 = vpop.permute.xlu0 %2387
    %v2390 = vsel %vm246, %v2050, 0
    %v2393 = vsel %vm737, %v2388, 0
    %2395 = vmatprep.subr.bf16.mxu0 0
    %2396 = vmatpush1.bf16.msra.mxu0 %v2393
    %2397 = vmatprep.subr.bf16.mxu0 0
    %2398 = vmatpush1.bf16.msra.mxu0 0
    %2399 = vmatprep.subr.bf16.mxu0 0
    %2400 = vmatpush1.bf16.msra.mxu0 0
    %2401 = vmatprep.subr.bf16.mxu0 0
    %2402 = vmatpush1.bf16.msra.mxu0 0
    %2403 = vmatprep.subr.bf16.mxu0 0
    %2404 = vmatpush1.bf16.msra.mxu0 0
    %2405 = vmatprep.subr.bf16.mxu0 0
    %2406 = vmatpush1.bf16.msra.mxu0 0
    %2407 = vmatprep.subr.bf16.mxu0 0
    %2408 = vmatpush1.bf16.msra.mxu0 0
    %2409 = vmatprep.subr.bf16.mxu0 0
    %2410 = vmatpush1.bf16.msra.mxu0 0
    %2411 = vmatprep.subr.bf16.mxu0 0
    %2412 = vmatpush1.bf16.msra.mxu0 0
    %2413 = vmatprep.subr.bf16.mxu0 0
    %2414 = vmatpush1.bf16.msra.mxu0 0
    %2415 = vmatprep.subr.bf16.mxu0 0
    %2416 = vmatpush1.bf16.msra.mxu0 0
    %2417 = vmatprep.subr.bf16.mxu0 0
    %2418 = vmatpush1.bf16.msra.mxu0 0
    %2419 = vmatprep.subr.bf16.mxu0 0
    %2420 = vmatpush1.bf16.msra.mxu0 0
    %2421 = vmatprep.subr.bf16.mxu0 0
    %2422 = vmatpush1.bf16.msra.mxu0 0
    %2423 = vmatprep.subr.bf16.mxu0 0
    %2424 = vmatpush1.bf16.msra.mxu0 0
    %2425 = vmatprep.subr.bf16.mxu0 0
    %2426 = vmatpush1.bf16.msra.mxu0 0
    %2427 = vmatprep.mubr.bf16.mxu0 0
    %2428 = vmatmul.mubr.bf16.gmra.mrb[0].mxu0 %v2390
    %v2429 = vpop.f32.mrb[0].mxu0
    %v2430 = vadd.f32 0.0, %v2429
    %v2431 = vpop.f32.mrb[0].mxu0
    %v2432 = vpop.f32.mrb[0].mxu0
    %v2433 = vpop.f32.mrb[0].mxu0
    %2434 = vdwg.mxu0
    %2437 = vrot.lane.b32.xlu0 %v2190, 8
    %v2438 = vpop.permute.xlu0 %2437
    %2439 = vrot.lane.b32.xlu0 %v2238, 8
    %v2440 = vpop.permute.xlu0 %2439
    %2445 = vrot.lane.b32.xlu0 %v2286, 16
    %v2446 = vpop.permute.xlu0 %2445
    %2447 = vrot.lane.b32.xlu0 %v2334, 16
    %v2448 = vpop.permute.xlu0 %2447
    %2453 = vrot.lane.b32.xlu0 %v2382, 24
    %v2454 = vpop.permute.xlu0 %2453
    %2455 = vrot.lane.b32.xlu0 %v2430, 24
    %v2456 = vpop.permute.xlu0 %2455
    %v2459 = vsel %vm246, %v2094, %v2438
    %v2460 = vsel %vm246, %v2142, %v2440
    %v2461 = vsel %vm1143, %v2459, %v2446
    %v2462 = vsel %vm1143, %v2460, %v2448
    %v2463 = vsel %vm1146, %v2461, %v2454
    %v2464 = vsel %vm1146, %v2462, %v2456
    %v2465 = vpack.c.bf16 %v2464, %v2463
    %s2466 = scalar_lea.vmem %s6, 16
    %v2467 = vld [vmem:[%s2466] sm:$0xf]
    %v2468 = vld [vmem:[%s2466 + $0x4] sm:$0xf]
    %v2469 = vld [vmem:[%s2466 + $0x8] sm:$0xf]
    %v2470 = vld [vmem:[%s2466 + $0xc] sm:$0xf]
    %s2471 = scalar_lea.vmem %s7, 1
    %v2472 = vld [vmem:[%s2471] sm:$0x1]
    %v2474 = vlaneseq
    %v2475 = vshrl.u32 %v2474, 7
    %v2476 = vsub.s32 0, %v2475
    %v2477 = vrot.slane %v2472, %v2476
    %v2483 = vunpack.c.l.b16 %v2467
    %v2484 = vunpack.c.l.b16 %v2468
    %v2485 = vunpack.c.l.b16 %v2469
    %v2486 = vunpack.c.l.b16 %v2470
    %v2487 = vpack.c.b16 %v2484, %v2483
    %v2488 = vpack.c.b16 %v2486, %v2485
    %v2492 = vsel %vm170, %v2465, 0
    %2494 = vmatprep.subr.bf16.mxu0 0
    %2495 = vmatpush1.bf16.msra.mxu0 %v2487
    %2496 = vmatprep.subr.bf16.mxu0 0
    %2497 = vmatpush1.bf16.msra.mxu0 %v2488
    %2498 = vmatprep.subr.bf16.mxu0 0
    %2499 = vmatpush1.bf16.msra.mxu0 0
    %2500 = vmatprep.subr.bf16.mxu0 0
    %2501 = vmatpush1.bf16.msra.mxu0 0
    %2502 = vmatprep.subr.bf16.mxu0 0
    %2503 = vmatpush1.bf16.msra.mxu0 0
    %2504 = vmatprep.subr.bf16.mxu0 0
    %2505 = vmatpush1.bf16.msra.mxu0 0
    %2506 = vmatprep.subr.bf16.mxu0 0
    %2507 = vmatpush1.bf16.msra.mxu0 0
    %2508 = vmatprep.subr.bf16.mxu0 0
    %2509 = vmatpush1.bf16.msra.mxu0 0
    %2510 = vmatprep.subr.bf16.mxu0 0
    %2511 = vmatpush1.bf16.msra.mxu0 0
    %2512 = vmatprep.subr.bf16.mxu0 0
    %2513 = vmatpush1.bf16.msra.mxu0 0
    %2514 = vmatprep.subr.bf16.mxu0 0
    %2515 = vmatpush1.bf16.msra.mxu0 0
    %2516 = vmatprep.subr.bf16.mxu0 0
    %2517 = vmatpush1.bf16.msra.mxu0 0
    %2518 = vmatprep.subr.bf16.mxu0 0
    %2519 = vmatpush1.bf16.msra.mxu0 0
    %2520 = vmatprep.subr.bf16.mxu0 0
    %2521 = vmatpush1.bf16.msra.mxu0 0
    %2522 = vmatprep.subr.bf16.mxu0 0
    %2523 = vmatpush1.bf16.msra.mxu0 0
    %2524 = vmatprep.subr.bf16.mxu0 0
    %2525 = vmatpush1.bf16.msra.mxu0 0
    %2526 = vmatprep.mubr.bf16.mxu0 0
    %2527 = vmatmul.mubr.bf16.gmra.mrb[0].mxu0 %v2492
    %v2528 = vpop.f32.mrb[0].mxu0
    %v2529 = vadd.f32 %v2477, %v2528
    %v2530 = vpop.f32.mrb[0].mxu0
    %v2531 = vpop.f32.mrb[0].mxu0
    %v2532 = vadd.f32 %v2477, %v2531
    %v2533 = vpop.f32.mrb[0].mxu0
    %2534 = vdwg.mxu0
    %v2535 = vadd.f32 %v1463, %v2529
    %v2536 = vadd.f32 %v1464, %v2532
    %s2537 = scalar_lea.vmem %s12, 1
    %v2538 = vld [vmem:[%s2537] sm:$0x1]
    %s2539 = scalar_lea.vmem %s13, 1
    %v2540 = vld [vmem:[%s2539] sm:$0x1]
    %v2541 = vsel %vm170, %v2535, 0.0
    %2542 = vadd.xlane.f32.xlu0 %v2541
    %v2543 = vpop.xlane.xlu0 %2542
    %v2544 = vsel %vm170, %v2536, 0.0
    %2545 = vadd.xlane.f32.xlu0 %v2544
    %v2546 = vpop.xlane.xlu0 %2545
    %v2547 = vmul.f32 %v2543, %v1227
    %v2548 = vmul.f32 %v2546, %v1227
    %v2549 = vsub.f32 %v2535, %v2547
    %v2550 = vsub.f32 %v2536, %v2548
    %v2551 = vmul.f32 %v2549, %v2549
    %v2552 = vmul.f32 %v2550, %v2550
    %v2553 = vsel %vm170, %v2551, 0.0
    %2554 = vadd.xlane.f32.xlu0 %v2553
    %v2555 = vpop.xlane.xlu0 %2554
    %v2556 = vsel %vm170, %v2552, 0.0
    %2557 = vadd.xlane.f32.xlu0 %v2556
    %v2558 = vpop.xlane.xlu0 %2557
    %v2559 = vmul.f32 %v2555, %v1227
    %v2560 = vmul.f32 %v2558, %v1227
    %v2561 = vadd.f32 %v2559, 1e-05
    %v2562 = vadd.f32 %v2560, 1e-05
    %v2563 = vrsqrt.pop %v2561
    %v2564 = vrsqrt.pop %v2562
    %v2565 = vmul.f32 %v2549, %v2563
    %v2566 = vmul.f32 %v2550, %v2564
    %v2568 = vlaneseq
    %v2569 = vshrl.u32 %v2568, 7
    %v2570 = vsub.s32 0, %v2569
    %v2571 = vrot.slane %v2538, %v2570
    %v2573 = vmul.f32 %v2565, %v2571
    %v2574 = vmul.f32 %v2566, %v2571
    %v2576 = vlaneseq
    %v2577 = vshrl.u32 %v2576, 7
    %v2578 = vsub.s32 0, %v2577
    %v2579 = vrot.slane %v2540, %v2578
    %v2581 = vadd.f32 %v2573, %v2579
    %v2582 = vadd.f32 %v2574, %v2579
    %v2583 = vpack.c.bf16 %v2582, %v2581
    %s2584 = scalar_lea.vmem %s8, 16
    %v2585 = vld [vmem:[%s2584] sm:$0xf]
    %v2586 = vld [vmem:[%s2584 + $0x4] sm:$0xf]
    %v2587 = vld [vmem:[%s2584 + $0x8] sm:$0xf]
    %v2588 = vld [vmem:[%s2584 + $0xc] sm:$0xf]
    %s2589 = scalar_lea.vmem %s9, 1
    %v2590 = vld [vmem:[%s2589] sm:$0x1]
    %v2592 = vlaneseq
    %v2593 = vshrl.u32 %v2592, 7
    %v2594 = vsub.s32 0, %v2593
    %v2595 = vrot.slane %v2590, %v2594
    %v2601 = vunpack.c.l.b16 %v2585
    %v2602 = vunpack.c.l.b16 %v2586
    %v2603 = vunpack.c.l.b16 %v2587
    %v2604 = vunpack.c.l.b16 %v2588
    %v2605 = vpack.c.b16 %v2602, %v2601
    %v2606 = vpack.c.b16 %v2604, %v2603
    %v2610 = vsel %vm170, %v2583, 0
    %2612 = vmatprep.subr.bf16.mxu0 0
    %2613 = vmatpush1.bf16.msra.mxu0 %v2605
    %2614 = vmatprep.subr.bf16.mxu0 0
    %2615 = vmatpush1.bf16.msra.mxu0 %v2606
    %2616 = vmatprep.subr.bf16.mxu0 0
    %2617 = vmatpush1.bf16.msra.mxu0 0
    %2618 = vmatprep.subr.bf16.mxu0 0
    %2619 = vmatpush1.bf16.msra.mxu0 0
    %2620 = vmatprep.subr.bf16.mxu0 0
    %2621 = vmatpush1.bf16.msra.mxu0 0
    %2622 = vmatprep.subr.bf16.mxu0 0
    %2623 = vmatpush1.bf16.msra.mxu0 0
    %2624 = vmatprep.subr.bf16.mxu0 0
    %2625 = vmatpush1.bf16.msra.mxu0 0
    %2626 = vmatprep.subr.bf16.mxu0 0
    %2627 = vmatpush1.bf16.msra.mxu0 0
    %2628 = vmatprep.subr.bf16.mxu0 0
    %2629 = vmatpush1.bf16.msra.mxu0 0
    %2630 = vmatprep.subr.bf16.mxu0 0
    %2631 = vmatpush1.bf16.msra.mxu0 0
    %2632 = vmatprep.subr.bf16.mxu0 0
    %2633 = vmatpush1.bf16.msra.mxu0 0
    %2634 = vmatprep.subr.bf16.mxu0 0
    %2635 = vmatpush1.bf16.msra.mxu0 0
    %2636 = vmatprep.subr.bf16.mxu0 0
    %2637 = vmatpush1.bf16.msra.mxu0 0
    %2638 = vmatprep.subr.bf16.mxu0 0
    %2639 = vmatpush1.bf16.msra.mxu0 0
    %2640 = vmatprep.subr.bf16.mxu0 0
    %2641 = vmatpush1.bf16.msra.mxu0 0
    %2642 = vmatprep.subr.bf16.mxu0 0
    %2643 = vmatpush1.bf16.msra.mxu0 0
    %2644 = vmatprep.mubr.bf16.mxu0 0
    %2645 = vmatmul.mubr.bf16.gmra.mrb[0].mxu0 %v2610
    %v2646 = vpop.f32.mrb[0].mxu0
    %v2647 = vadd.f32 %v2595, %v2646
    %v2648 = vpop.f32.mrb[0].mxu0
    %v2649 = vpop.f32.mrb[0].mxu0
    %v2650 = vadd.f32 %v2595, %v2649
    %v2651 = vpop.f32.mrb[0].mxu0
    %2652 = vdwg.mxu0
    %v2653 = vmax.f32 %v2647, 0.0
    %v2654 = vmax.f32 %v2650, 0.0
    %v2655 = vpack.c.bf16 %v2654, %v2653
    %s2656 = scalar_lea.vmem %s10, 32
    %v2657 = vld [vmem:[%s2656] sm:$0xf]
    %v2658 = vld [vmem:[%s2656 + $0x4] sm:$0xf]
    %v2659 = vld [vmem:[%s2656 + $0x8] sm:$0xf]
    %v2660 = vld [vmem:[%s2656 + $0xc] sm:$0xf]
    %v2661 = vld [vmem:[%s2656 + $0x10] sm:$0xf]
    %v2662 = vld [vmem:[%s2656 + $0x14] sm:$0xf]
    %v2663 = vld [vmem:[%s2656 + $0x18] sm:$0xf]
    %v2664 = vld [vmem:[%s2656 + $0x1c] sm:$0xf]
    %s2665 = scalar_lea.vmem %s11, 1
    %v2666 = vld [vmem:[%s2665] sm:$0x1]
    %v2668 = vlaneseq
    %v2669 = vshrl.u32 %v2668, 7
    %v2670 = vsub.s32 0, %v2669
    %v2671 = vrot.slane %v2666, %v2670
    %v2681 = vunpack.c.l.b16 %v2657
    %v2682 = vunpack.c.l.b16 %v2658
    %v2683 = vunpack.c.l.b16 %v2659
    %v2684 = vunpack.c.l.b16 %v2660
    %v2685 = vunpack.c.l.b16 %v2661
    %v2686 = vunpack.c.l.b16 %v2662
    %v2687 = vunpack.c.l.b16 %v2663
    %v2688 = vunpack.c.l.b16 %v2664
    %v2689 = vpack.c.b16 %v2682, %v2681
    %v2690 = vpack.c.b16 %v2684, %v2683
    %v2691 = vpack.c.b16 %v2686, %v2685
    %v2692 = vpack.c.b16 %v2688, %v2687
    %v2698 = vsel %vm1374, %v2655, 0
    %2700 = vmatprep.subr.bf16.mxu0 0
    %2701 = vmatpush1.bf16.msra.mxu0 %v2689
    %2702 = vmatprep.subr.bf16.mxu0 0
    %2703 = vmatpush1.bf16.msra.mxu0 %v2690
    %2704 = vmatprep.subr.bf16.mxu0 0
    %2705 = vmatpush1.bf16.msra.mxu0 %v2691
    %2706 = vmatprep.subr.bf16.mxu0 0
    %2707 = vmatpush1.bf16.msra.mxu0 %v2692
    %2708 = vmatprep.subr.bf16.mxu0 0
    %2709 = vmatpush1.bf16.msra.mxu0 0
    %2710 = vmatprep.subr.bf16.mxu0 0
    %2711 = vmatpush1.bf16.msra.mxu0 0
    %2712 = vmatprep.subr.bf16.mxu0 0
    %2713 = vmatpush1.bf16.msra.mxu0 0
    %2714 = vmatprep.subr.bf16.mxu0 0
    %2715 = vmatpush1.bf16.msra.mxu0 0
    %2716 = vmatprep.subr.bf16.mxu0 0
    %2717 = vmatpush1.bf16.msra.mxu0 0
    %2718 = vmatprep.subr.bf16.mxu0 0
    %2719 = vmatpush1.bf16.msra.mxu0 0
    %2720 = vmatprep.subr.bf16.mxu0 0
    %2721 = vmatpush1.bf16.msra.mxu0 0
    %2722 = vmatprep.subr.bf16.mxu0 0
    %2723 = vmatpush1.bf16.msra.mxu0 0
    %2724 = vmatprep.subr.bf16.mxu0 0
    %2725 = vmatpush1.bf16.msra.mxu0 0
    %2726 = vmatprep.subr.bf16.mxu0 0
    %2727 = vmatpush1.bf16.msra.mxu0 0
    %2728 = vmatprep.subr.bf16.mxu0 0
    %2729 = vmatpush1.bf16.msra.mxu0 0
    %2730 = vmatprep.subr.bf16.mxu0 0
    %2731 = vmatpush1.bf16.msra.mxu0 0
    %2732 = vmatprep.mubr.bf16.mxu0 0
    %2733 = vmatmul.mubr.bf16.gmra.mrb[0].mxu0 %v2698
    %v2734 = vpop.f32.mrb[0].mxu0
    %v2735 = vadd.f32 %v2671, %v2734
    %v2736 = vpop.f32.mrb[0].mxu0
    %v2737 = vpop.f32.mrb[0].mxu0
    %v2738 = vadd.f32 %v2671, %v2737
    %v2739 = vpop.f32.mrb[0].mxu0
    %2740 = vdwg.mxu0
    %v2741 = vadd.f32 %v2581, %v2735
    %v2742 = vadd.f32 %v2582, %v2738
    %s2743 = scalar_lea.vmem %s14, 1
    %v2744 = vld [vmem:[%s2743] sm:$0x1]
    %s2745 = scalar_lea.vmem %s15, 1
    %v2746 = vld [vmem:[%s2745] sm:$0x1]
    %v2747 = vsel %vm170, %v2741, 0.0
    %2748 = vadd.xlane.f32.xlu0 %v2747
    %v2749 = vpop.xlane.xlu0 %2748
    %v2750 = vsel %vm170, %v2742, 0.0
    %2751 = vadd.xlane.f32.xlu0 %v2750
    %v2752 = vpop.xlane.xlu0 %2751
    %v2753 = vmul.f32 %v2749, %v1227
    %v2754 = vmul.f32 %v2752, %v1227
    %v2755 = vsub.f32 %v2741, %v2753
    %v2756 = vsub.f32 %v2742, %v2754
    %v2757 = vmul.f32 %v2755, %v2755
    %v2758 = vmul.f32 %v2756, %v2756
    %v2759 = vsel %vm170, %v2757, 0.0
    %2760 = vadd.xlane.f32.xlu0 %v2759
    %v2761 = vpop.xlane.xlu0 %2760
    %v2762 = vsel %vm170, %v2758, 0.0
    %2763 = vadd.xlane.f32.xlu0 %v2762
    %v2764 = vpop.xlane.xlu0 %2763
    %v2765 = vmul.f32 %v2761, %v1227
    %v2766 = vmul.f32 %v2764, %v1227
    %v2767 = vadd.f32 %v2765, 1e-05
    %v2768 = vadd.f32 %v2766, 1e-05
    %v2769 = vrsqrt.pop %v2767
    %v2770 = vrsqrt.pop %v2768
    %v2771 = vmul.f32 %v2755, %v2769
    %v2772 = vmul.f32 %v2756, %v2770
    %v2774 = vlaneseq
    %v2775 = vshrl.u32 %v2774, 7
    %v2776 = vsub.s32 0, %v2775
    %v2777 = vrot.slane %v2744, %v2776
    %v2779 = vmul.f32 %v2771, %v2777
    %v2780 = vmul.f32 %v2772, %v2777
    %v2782 = vlaneseq
    %v2783 = vshrl.u32 %v2782, 7
    %v2784 = vsub.s32 0, %v2783
    %v2785 = vrot.slane %v2746, %v2784
    %v2787 = vadd.f32 %v2779, %v2785
    %v2788 = vadd.f32 %v2780, %v2785
    %v2789 = vld [vmem:[%s16] sm:$0x1]
    %v2790 = vld [vmem:[%s17] sm:$0x1]
    %v2793 = vrot.slane %v2788, 7
    %vm2796 = vcmask 261127
    %v2797 = vsel %vm2796, %v2787, 0.0
    %2798 = vadd.xlane.f32.xlu0 %v2797
    %v2799 = vpop.xlane.xlu0 %2798
    %vm2800 = vcmask 253952
    %v2801 = vsel %vm2800, %v2793, 0.0
    %2802 = vadd.xlane.f32.xlu0 %v2801
    %v2803 = vpop.xlane.xlu0 %2802
    %v2804 = vmul.f32 %v2799, %v1227
    %v2805 = vmul.f32 %v2803, %v1227
    %v2808 = vrot.slane %v2805, 1
    %v2811 = vsub.f32 %v2787, %v2804
    %v2812 = vsub.f32 %v2788, %v2808
    %v2813 = vmul.f32 %v2811, %v2811
    %v2814 = vmul.f32 %v2812, %v2812
    %v2817 = vrot.slane %v2814, 7
    %v2820 = vsel %vm2796, %v2813, 0.0
    %2821 = vadd.xlane.f32.xlu0 %v2820
    %v2822 = vpop.xlane.xlu0 %2821
    %v2823 = vsel %vm2800, %v2817, 0.0
    %2824 = vadd.xlane.f32.xlu0 %v2823
    %v2825 = vpop.xlane.xlu0 %2824
    %v2826 = vmul.f32 %v2822, %v1227
    %v2827 = vmul.f32 %v2825, %v1227
    %v2828 = vadd.f32 %v2826, 1e-05
    %v2829 = vadd.f32 %v2827, 1e-05
    %v2830 = vrsqrt.pop %v2828
    %v2831 = vrsqrt.pop %v2829
    %v2834 = vrot.slane %v2831, 1
    %v2837 = vmul.f32 %v2811, %v2830
    %v2838 = vmul.f32 %v2812, %v2834
    %v2840 = vlaneseq
    %v2841 = vshrl.u32 %v2840, 7
    %v2842 = vsub.s32 0, %v2841
    %v2843 = vrot.slane %v2789, %v2842
    %v2845 = vmul.f32 %v2837, %v2843
    %v2846 = vmul.f32 %v2838, %v2843
    %v2848 = vlaneseq
    %v2849 = vshrl.u32 %v2848, 7
    %v2850 = vsub.s32 0, %v2849
    %v2851 = vrot.slane %v2790, %v2850
    %v2853 = vadd.f32 %v2845, %v2851
    %v2854 = vadd.f32 %v2846, %v2851
    %v2855 = vpack.c.bf16 %v2853, %v2853
    %v2856 = vpack.c.bf16 %v2854, %v2854
    %v2857 = vld [vmem:[%s18] sm:$0xff]
    %v2858 = vld [vmem:[%s18 + $0x8] sm:$0xff]
    %v2859 = vld [vmem:[%s18 + $0x10] sm:$0xff]
    %v2860 = vld [vmem:[%s18 + $0x18] sm:$0xff]
    %v2861 = vld [vmem:[%s19] sm:$0x3]
    %v2863 = vlaneseq
    %v2864 = vshrl.u32 %v2863, 7
    %v2865 = vsub.s32 0, %v2864
    %v2866 = vrot.slane %v2861, %v2865
    %v2867 = vlaneseq
    %v2868 = vshrl.u32 %v2867, 7
    %v2869 = vsub.s32 1, %v2868
    %v2870 = vrot.slane %v2861, %v2869
    %v2875 = vunpack.c.l.b16 %v2855
    %v2876 = vunpack.c.l.b16 %v2856
    %v2877 = vrot.slane %v2875, 7
    %v2878 = vrot.slane %v2876, 6
    %vm2879 = vcmask 1041409
    %v2880 = vsel %vm2879, %v2878, %v2877
    %v2881 = vpack.c.b16 %v2880, %v2880
    %v2886 = vunpack.c.l.b16 %v2857
    %v2887 = vunpack.c.h.b16 %v2857
    %v2888 = vunpack.c.l.b16 %v2858
    %v2889 = vunpack.c.h.b16 %v2858
    %v2890 = vunpack.c.l.b16 %v2859
    %v2891 = vunpack.c.h.b16 %v2859
    %v2892 = vunpack.c.l.b16 %v2860
    %v2893 = vunpack.c.h.b16 %v2860
    %v2894 = vpack.c.b16 %v2888, %v2886
    %v2895 = vpack.c.b16 %v2889, %v2887
    %v2896 = vpack.c.b16 %v2892, %v2890
    %v2897 = vpack.c.b16 %v2893, %v2891
    %v2903 = vsel %vm170, %v2881, 0
    %2905 = vmatprep.subr.bf16.mxu0 %v2895
    %2906 = vmatpush1.bf16.msra.mxu0 %v2894
    %2907 = vmatprep.subr.bf16.mxu0 %v2897
    %2908 = vmatpush1.bf16.msra.mxu0 %v2896
    %2909 = vmatprep.subr.bf16.mxu0 0
    %2910 = vmatpush1.bf16.msra.mxu0 0
    %2911 = vmatprep.subr.bf16.mxu0 0
    %2912 = vmatpush1.bf16.msra.mxu0 0
    %2913 = vmatprep.subr.bf16.mxu0 0
    %2914 = vmatpush1.bf16.msra.mxu0 0
    %2915 = vmatprep.subr.bf16.mxu0 0
    %2916 = vmatpush1.bf16.msra.mxu0 0
    %2917 = vmatprep.subr.bf16.mxu0 0
    %2918 = vmatpush1.bf16.msra.mxu0 0
    %2919 = vmatprep.subr.bf16.mxu0 0
    %2920 = vmatpush1.bf16.msra.mxu0 0
    %2921 = vmatprep.subr.bf16.mxu0 0
    %2922 = vmatpush1.bf16.msra.mxu0 0
    %2923 = vmatprep.subr.bf16.mxu0 0
    %2924 = vmatpush1.bf16.msra.mxu0 0
    %2925 = vmatprep.subr.bf16.mxu0 0
    %2926 = vmatpush1.bf16.msra.mxu0 0
    %2927 = vmatprep.subr.bf16.mxu0 0
    %2928 = vmatpush1.bf16.msra.mxu0 0
    %2929 = vmatprep.subr.bf16.mxu0 0
    %2930 = vmatpush1.bf16.msra.mxu0 0
    %2931 = vmatprep.subr.bf16.mxu0 0
    %2932 = vmatpush1.bf16.msra.mxu0 0
    %2933 = vmatprep.subr.bf16.mxu0 0
    %2934 = vmatpush1.bf16.msra.mxu0 0
    %2935 = vmatprep.subr.bf16.mxu0 0
    %2936 = vmatpush1.bf16.msra.mxu0 0
    %2937 = vmatprep.mubr.bf16.mxu0 0
    %2938 = vmatmul.mubr.bf16.gmra.mrb[0].mxu0 %v2903
    %v2939 = vpop.f32.mrb[0].mxu0
    %v2940 = vadd.f32 %v2866, %v2939
    %v2941 = vpop.f32.mrb[0].mxu0
    %v2942 = vadd.f32 %v2870, %v2941
    %v2943 = vpop.f32.mrb[0].mxu0
    %v2944 = vpop.f32.mrb[0].mxu0
    %2945 = vdwg.mxu0
    %v2946 = vmax.f32 %v2940, 0.0
    %v2947 = vmax.f32 %v2942, 0.0
    %v2948 = vld [vmem:[%s20] sm:$0x3]
    %v2950 = vlaneseq
    %v2951 = vshrl.u32 %v2950, 7
    %v2952 = vsub.s32 0, %v2951
    %v2953 = vrot.slane %v2948, %v2952
    %v2954 = vlaneseq
    %v2955 = vshrl.u32 %v2954, 7
    %v2956 = vsub.s32 1, %v2955
    %v2957 = vrot.slane %v2948, %v2956
    %v2960 = vmul.f32 %v2946, %v2953
    %v2961 = vmul.f32 %v2947, %v2957
    %v2962 = vld [vmem:[%s21] sm:$0x3]
    %v2964 = vlaneseq
    %v2965 = vshrl.u32 %v2964, 7
    %v2966 = vsub.s32 0, %v2965
    %v2967 = vrot.slane %v2962, %v2966
    %v2968 = vlaneseq
    %v2969 = vshrl.u32 %v2968, 7
    %v2970 = vsub.s32 1, %v2969
    %v2971 = vrot.slane %v2962, %v2970
    %v2974 = vadd.f32 %v2960, %v2967
    %v2975 = vadd.f32 %v2961, %v2971
    %v2976 = vpack.c.bf16 %v2974, %v2974
    %v2977 = vpack.c.bf16 %v2975, %v2975
    %v2978 = vld [vmem:[%s22] sm:$0xf]
    %v2979 = vld [vmem:[%s22 + $0x4] sm:$0xf]
    %v2980 = vld [vmem:[%s22 + $0x8] sm:$0xf]
    %v2981 = vld [vmem:[%s22 + $0xc] sm:$0xf]
    %v2982 = vld [vmem:[%s22 + $0x10] sm:$0xf]
    %v2983 = vld [vmem:[%s22 + $0x14] sm:$0xf]
    %v2984 = vld [vmem:[%s22 + $0x18] sm:$0xf]
    %v2985 = vld [vmem:[%s22 + $0x1c] sm:$0xf]
    %v2986 = vld [vmem:[%s22 + $0x20] sm:$0xf]
    %v2987 = vld [vmem:[%s22 + $0x24] sm:$0xf]
    %v2988 = vld [vmem:[%s22 + $0x28] sm:$0xf]
    %v2989 = vld [vmem:[%s22 + $0x2c] sm:$0xf]
    %v2990 = vld [vmem:[%s22 + $0x30] sm:$0xf]
    %v2991 = vld [vmem:[%s22 + $0x34] sm:$0xf]
    %v2992 = vld [vmem:[%s22 + $0x38] sm:$0xf]
    %v2993 = vld [vmem:[%s22 + $0x3c] sm:$0xf]
    %v2994 = vld [vmem:[%s22 + $0x40] sm:$0xf]
    %v2995 = vld [vmem:[%s22 + $0x44] sm:$0xf]
    %v2996 = vld [vmem:[%s22 + $0x48] sm:$0xf]
    %v2997 = vld [vmem:[%s22 + $0x4c] sm:$0xf]
    %v2998 = vld [vmem:[%s22 + $0x50] sm:$0xf]
    %v2999 = vld [vmem:[%s22 + $0x54] sm:$0xf]
    %v3000 = vld [vmem:[%s22 + $0x58] sm:$0xf]
    %v3001 = vld [vmem:[%s22 + $0x5c] sm:$0xf]
    %v3002 = vld [vmem:[%s22 + $0x60] sm:$0xf]
    %v3003 = vld [vmem:[%s22 + $0x64] sm:$0xf]
    %v3004 = vld [vmem:[%s22 + $0x68] sm:$0xf]
    %v3005 = vld [vmem:[%s22 + $0x6c] sm:$0xf]
    %v3006 = vld [vmem:[%s22 + $0x70] sm:$0xf]
    %v3007 = vld [vmem:[%s22 + $0x74] sm:$0xf]
    %v3008 = vld [vmem:[%s22 + $0x78] sm:$0xf]
    %v3009 = vld [vmem:[%s22 + $0x7c] sm:$0xf]
    %v3010 = vld [vmem:[%s23] sm:$0x1]
    %v3012 = vlaneseq
    %v3013 = vshrl.u32 %v3012, 7
    %v3014 = vsub.s32 0, %v3013
    %v3015 = vrot.slane %v3010, %v3014
    %v3049 = vunpack.c.l.b16 %v2978
    %v3050 = vunpack.c.l.b16 %v2979
    %v3051 = vunpack.c.l.b16 %v2980
    %v3052 = vunpack.c.l.b16 %v2981
    %v3053 = vunpack.c.l.b16 %v2982
    %v3054 = vunpack.c.l.b16 %v2983
    %v3055 = vunpack.c.l.b16 %v2984
    %v3056 = vunpack.c.l.b16 %v2985
    %v3057 = vunpack.c.l.b16 %v2986
    %v3058 = vunpack.c.l.b16 %v2987
    %v3059 = vunpack.c.l.b16 %v2988
    %v3060 = vunpack.c.l.b16 %v2989
    %v3061 = vunpack.c.l.b16 %v2990
    %v3062 = vunpack.c.l.b16 %v2991
    %v3063 = vunpack.c.l.b16 %v2992
    %v3064 = vunpack.c.l.b16 %v2993
    %v3065 = vunpack.c.l.b16 %v2994
    %v3066 = vunpack.c.l.b16 %v2995
    %v3067 = vunpack.c.l.b16 %v2996
    %v3068 = vunpack.c.l.b16 %v2997
    %v3069 = vunpack.c.l.b16 %v2998
    %v3070 = vunpack.c.l.b16 %v2999
    %v3071 = vunpack.c.l.b16 %v3000
    %v3072 = vunpack.c.l.b16 %v3001
    %v3073 = vunpack.c.l.b16 %v3002
    %v3074 = vunpack.c.l.b16 %v3003
    %v3075 = vunpack.c.l.b16 %v3004
    %v3076 = vunpack.c.l.b16 %v3005
    %v3077 = vunpack.c.l.b16 %v3006
    %v3078 = vunpack.c.l.b16 %v3007
    %v3079 = vunpack.c.l.b16 %v3008
    %v3080 = vunpack.c.l.b16 %v3009
    %v3081 = vpack.c.b16 %v3050, %v3049
    %v3082 = vpack.c.b16 %v3052, %v3051
    %v3083 = vpack.c.b16 %v3054, %v3053
    %v3084 = vpack.c.b16 %v3056, %v3055
    %v3085 = vpack.c.b16 %v3058, %v3057
    %v3086 = vpack.c.b16 %v3060, %v3059
    %v3087 = vpack.c.b16 %v3062, %v3061
    %v3088 = vpack.c.b16 %v3064, %v3063
    %v3089 = vpack.c.b16 %v3066, %v3065
    %v3090 = vpack.c.b16 %v3068, %v3067
    %v3091 = vpack.c.b16 %v3070, %v3069
    %v3092 = vpack.c.b16 %v3072, %v3071
    %v3093 = vpack.c.b16 %v3074, %v3073
    %v3094 = vpack.c.b16 %v3076, %v3075
    %v3095 = vpack.c.b16 %v3078, %v3077
    %v3096 = vpack.c.b16 %v3080, %v3079
    %3113 = vmatprep.subr.bf16.mxu0 0
    %3114 = vmatpush1.bf16.msra.mxu0 %v3081
    %3115 = vmatprep.subr.bf16.mxu0 0
    %3116 = vmatpush1.bf16.msra.mxu0 %v3082
    %3117 = vmatprep.subr.bf16.mxu0 0
    %3118 = vmatpush1.bf16.msra.mxu0 %v3083
    %3119 = vmatprep.subr.bf16.mxu0 0
    %3120 = vmatpush1.bf16.msra.mxu0 %v3084
    %3121 = vmatprep.subr.bf16.mxu0 0
    %3122 = vmatpush1.bf16.msra.mxu0 %v3085
    %3123 = vmatprep.subr.bf16.mxu0 0
    %3124 = vmatpush1.bf16.msra.mxu0 %v3086
    %3125 = vmatprep.subr.bf16.mxu0 0
    %3126 = vmatpush1.bf16.msra.mxu0 %v3087
    %3127 = vmatprep.subr.bf16.mxu0 0
    %3128 = vmatpush1.bf16.msra.mxu0 %v3088
    %3129 = vmatprep.subr.bf16.mxu0 0
    %3130 = vmatpush1.bf16.msra.mxu0 %v3089
    %3131 = vmatprep.subr.bf16.mxu0 0
    %3132 = vmatpush1.bf16.msra.mxu0 %v3090
    %3133 = vmatprep.subr.bf16.mxu0 0
    %3134 = vmatpush1.bf16.msra.mxu0 %v3091
    %3135 = vmatprep.subr.bf16.mxu0 0
    %3136 = vmatpush1.bf16.msra.mxu0 %v3092
    %3137 = vmatprep.subr.bf16.mxu0 0
    %3138 = vmatpush1.bf16.msra.mxu0 %v3093
    %3139 = vmatprep.subr.bf16.mxu0 0
    %3140 = vmatpush1.bf16.msra.mxu0 %v3094
    %3141 = vmatprep.subr.bf16.mxu0 0
    %3142 = vmatpush1.bf16.msra.mxu0 %v3095
    %3143 = vmatprep.subr.bf16.mxu0 0
    %3144 = vmatpush1.bf16.msra.mxu0 %v3096
    %3145 = vmatprep.mubr.bf16.mxu0 %v2977
    %3146 = vmatmul.mubr.bf16.gmra.mrb[0].mxu0 %v2976
    %v3147 = vpop.f32.mrb[0].mxu0
    %v3148 = vadd.f32 %v3015, %v3147
    %v3149 = vpop.f32.mrb[0].mxu0
    %v3150 = vpop.f32.mrb[0].mxu0
    %v3151 = vpop.f32.mrb[0].mxu0
    %3152 = vdwg.mxu0
    %vm3153 = vcmask 58368
    %v3154 = vsel %vm3153, %v3148, -inf
    %3155 = vmax.xlane.f32.xlu0 %v3154
    %v3156 = vpop.xlane.xlu0 %3155
    %v3157 = vsub.f32 %v3148, %v3156
    %v3158 = vmul.f32 %v3157, 1.442695
    %v3159 = vpow.pop %v3158
    %v3160 = vsel %vm3153, %v3159, 0.0
    %3161 = vadd.xlane.f32.xlu0 %v3160
    %v3162 = vpop.xlane.xlu0 %3161
    %v3163 = vrcp.pop %v3162
    %v3164 = vmul.f32 %v3159, %v3163
    %3165 = vst.msk [vmem:[#allocation2] sm:$0x3] %vm3153, %v3164
    // Predicated region
    $region98: #{transformer_regression_forward.1} parent=1 // pred_check
      _
    $region99: #{transformer_regression_forward.1} parent=1 // pred_check_branch
      %3167 = sbr.rel (0) target = $region101
    $region100: #{transformer_regression_forward.1} parent=1 // pred_region
      %s3169 = ssub.s32 32, 32
      %3170 = vsyncadd [#allocation3], %s3169
      %s3172 = sshll.u32 [#allocation2], 4
      %s3173 = int_to_ptr.vmem [resolvable:$true] %s3172
      %3175 = dma.vmem_to_hbm [thread:$0]  %s3173, 32, %s24, [#allocation3]
    $region101: #{transformer_regression_forward.1} parent=1 // pred_fallthru
      _
    // Predicated region
    $region102: #{transformer_regression_forward.1} parent=1 // pred_check
      _
    $region103: #{transformer_regression_forward.1} parent=1 // pred_check_branch
      %3177 = sbr.rel (0) target = $region105
    $region104: #{transformer_regression_forward.1} parent=1 // pred_region
      %3178 = dma.done [#allocation3], 32
    $region105: #{transformer_regression_forward.1} parent=1 // pred_fallthru
      _
    %3179 = vsyncpa [#allocation3], 1

</llo_original>
